<compile_context>
chip_gen: v7x
topology: tpu7x:2x2x1
jax: 0.10.0
libtpu: 0.0.40
codegen_flags: <defaults>
</compile_context>

<pallas_src>
import jax
import jax.numpy as jnp
from jax.experimental import pallas as pl
from jax.experimental.pallas import tpu as pltpu


# ----------------------------------------------------------------------------
# Fused kernel
# ----------------------------------------------------------------------------
def _convd3qn4_kernel(x_ref, g1_ref, b1_ref, g2_ref, b2_ref, g3_ref, b3_ref,
                      wh1_ref, bh1_ref, wh2_ref, bh2_ref, o_ref,
                      a1_ref, a2_ref, a3_ref):
    f32 = jnp.float32
    B = o_ref.shape[0]
    H0 = x_ref.shape[0] // B          # per-batch row stride (7)
    R1 = a1_ref.shape[0]              # B*H0 - 1
    R2 = a2_ref.shape[0]              # B*H0 - 2
    R3 = a3_ref.shape[0]              # B*H0 - 3
    RH = (B - 1) * H0 + 1             # head slab rows; valid rows are b*H0
    H3 = wh1_ref.shape[0]             # 4 conv3 output rows per image

    # conv1 (1 -> 64): two accumulated MXU dots over kh-shifted row slabs.
    acc = jnp.dot(x_ref[0:R1, :], g1_ref[0], preferred_element_type=f32)
    acc = acc + jnp.dot(x_ref[1:R1 + 1, :], g1_ref[1], preferred_element_type=f32)
    a1_ref[...] = jnp.maximum(acc + b1_ref[...], 0.0).astype(a1_ref.dtype)

    # conv2 (64 -> 32): bf16 activations x bf16 banded weight, f32 accumulate.
    acc = jnp.dot(a1_ref[0:R2, :], g2_ref[0], preferred_element_type=f32)
    acc = acc + jnp.dot(a1_ref[1:R2 + 1, :], g2_ref[1], preferred_element_type=f32)
    a2_ref[...] = jnp.maximum(acc + b2_ref[...], 0.0).astype(a2_ref.dtype)

    # conv3 (32 -> 16): output lanes are already the (j*16 + c) feature order.
    acc = jnp.dot(a2_ref[0:R3, :], g3_ref[0], preferred_element_type=f32)
    acc = acc + jnp.dot(a2_ref[1:R3 + 1, :], g3_ref[1], preferred_element_type=f32)
    a3_ref[...] = jnp.maximum(acc + b3_ref[...], 0.0).astype(a3_ref.dtype)

    # Merged dueling head.  Flatten is folded into wh1 (4 x 128 x 256): the
    # i-th conv3 output row contributes through wh1[i]; only rows b*H0 of the
    # accumulated result are real samples, the rest are never read.
    hid = jnp.dot(a3_ref[0:RH, :], wh1_ref[0], preferred_element_type=f32)
    for i in range(1, H3):
        hid = hid + jnp.dot(a3_ref[i:i + RH, :], wh1_ref[i],
                            preferred_element_type=f32)
    hid = jnp.maximum(hid + bh1_ref[...], 0.0)
    out = jnp.dot(hid, wh2_ref[...], preferred_element_type=f32) + bh2_ref[...]

    for b in range(B):                                # B tiny (A=4) row stores
        o_ref[b, :] = out[b * H0, :].astype(o_ref.dtype)


def forward(x, kp):
    """x: (B, 1, 7, 11) or (B, 7, 11); kp: prepared params (prepare_params)."""
    if x.ndim == 3:                                   # mirrors torch .view
        x = x[:, None, :, :]
    B, _, H0, W0 = x.shape
    x_m = x.reshape(B * H0, W0).astype(jnp.float32)   # flat rows, free on host

    A = kp["wh2"].shape[1]
    L1 = kp["g1"].shape[2]        # 640
    L2 = kp["g2"].shape[2]        # 288
    L3 = kp["g3"].shape[2]        # 128
    NH = kp["wh1"].shape[2]       # 256
    R1, R2, R3 = B * H0 - 1, B * H0 - 2, B * H0 - 3
    RH = (B - 1) * H0 + 1

    operands = (x_m, kp["g1"], kp["b1"], kp["g2"], kp["b2"], kp["g3"], kp["b3"],
                kp["wh1"], kp["bh1"], kp["wh2"], kp["bh2"])
    flops = 2 * (2 * R1 * W0 * L1 + 2 * R2 * L1 * L2 + 2 * R3 * L2 * L3
                 + 4 * RH * L3 * NH + RH * NH * A)
    bytes_accessed = sum(int(a.size) * a.dtype.itemsize for a in operands) \
        + B * A * 4

    vmem = pl.BlockSpec(memory_space=pltpu.MemorySpace.VMEM)
    return pl.pallas_call(
        _convd3qn4_kernel,
        out_shape=jax.ShapeDtypeStruct((B, A), jnp.float32),
        in_specs=[vmem] * len(operands),
        out_specs=vmem,
        scratch_shapes=[
            pltpu.VMEM((R1, L1), jnp.bfloat16),   # conv1 out (13, 640)
            pltpu.VMEM((R2, L2), jnp.bfloat16),   # conv2 out (12, 288)
            pltpu.VMEM((R3, L3), jnp.bfloat16),   # conv3 out (11, 128)
        ],
        cost_estimate=pl.CostEstimate(flops=flops, transcendentals=0,
                                      bytes_accessed=bytes_accessed),
    )(*operands)


# ----------------------------------------------------------------------------
# Parameters: PyTorch-layout init + one-time kernel-layout preparation
# ----------------------------------------------------------------------------
def init_params(key, num_actions=4):
    ks = jax.random.split(key, 14)

    def uni(k, shape, fan_in):
        bound = 1.0 / jnp.sqrt(jnp.float32(fan_in))
        return jax.random.uniform(k, shape, jnp.float32, -bound, bound)

    return {
        "w1": uni(ks[0], (64, 1, 2, 2), 1 * 4),   "b1": uni(ks[1], (64,), 1 * 4),
        "w2": uni(ks[2], (32, 64, 2, 2), 64 * 4), "b2": uni(ks[3], (32,), 64 * 4),
        "w3": uni(ks[4], (16, 32, 2, 2), 32 * 4), "b3": uni(ks[5], (16,), 32 * 4),
        "wa1": uni(ks[6], (128, 512), 512), "ba1": uni(ks[7], (128,), 512),
        "wa2": uni(ks[8], (num_actions, 128), 128),
        "ba2": uni(ks[9], (num_actions,), 128),
        "ws1": uni(ks[10], (128, 512), 512), "bs1": uni(ks[11], (128,), 512),
        "ws2": uni(ks[12], (1, 128), 128),   "bs2": uni(ks[13], (1,), 128),
    }


def prepare_params(p, num_actions=4):
    """One-time host-side repack of PyTorch-layout params into kernel layout."""
    H0, W0 = 7, 11
    W1, W2, W3 = W0 - 1, W0 - 2, W0 - 3          # 10, 9, 8
    H3, C3 = H0 - 3, 16                          # 4, 16

    def band(w, w_in, w_out, dtype):
        # w: (Cout, Cin, 2, 2) torch conv weight.  Returns the block-banded
        # matrix g: (2, w_in*Cin, w_out*Cout) with
        #   g[kh, j_in*Cin + ci, j_out*Cout + co] = w[co, ci, kh, j_in - j_out]
        # for j_in - j_out in {0, 1}, else 0.
        cout, cin = w.shape[0], w.shape[1]
        g = jnp.zeros((2, w_in * cin, w_out * cout), jnp.float32)
        for kh in range(2):
            for kw in range(2):
                blk = jnp.transpose(w[:, :, kh, kw])           # (Cin, Cout)
                for j in range(w_out):
                    g = g.at[kh,
                             (j + kw) * cin:(j + kw + 1) * cin,
                             j * cout:(j + 1) * cout].set(blk)
        return g.astype(dtype)

    g1 = band(p["w1"], W0, W1, jnp.float32)      # (2,  11, 640)
    g2 = band(p["w2"], W1, W2, jnp.bfloat16)     # (2, 640, 288) bf16
    g3 = band(p["w3"], W2, W3, jnp.bfloat16)     # (2, 288, 128) bf16

    b1m = jnp.tile(p["b1"], W1)[None, :]         # (1, 640), lane = j*64 + c
    b2m = jnp.tile(p["b2"], W2)[None, :]         # (1, 288)
    b3m = jnp.tile(p["b3"], W3)[None, :]         # (1, 128)

    # Merged dueling head, layer 1: torch NCHW-flatten weight -> per-conv3-row
    # (4, 128, 256) blocks matching the kernel's (j*16 + c) lane order.
    wcat = jnp.concatenate([p["wa1"].T, p["ws1"].T], axis=1)    # (512, 256)
    nh = wcat.shape[1]
    wh1 = (wcat.reshape(C3, H3, W3, nh)                         # [c, i, j, n]
               .transpose(1, 2, 0, 3)                           # [i, j, c, n]
               .reshape(H3, W3 * C3, nh)).astype(jnp.bfloat16)  # (4, 128, 256)
    bh1 = jnp.concatenate([p["ba1"], p["bs1"]])[None, :]        # (1, 256)

    # Layer 2: adv + val.repeat(num_actions) folded into one GEMM.
    wh2 = jnp.concatenate(
        [p["wa2"].T, jnp.tile(p["ws2"].T, (1, num_actions))], axis=0)  # (256, A)
    bh2 = (p["ba2"] + p["bs2"])[None, :]                        # (1, A)

    return {"g1": g1, "b1": b1m, "g2": g2, "b2": b2m, "g3": g3, "b3": b3m,
            "wh1": wh1, "bh1": bh1, "wh2": wh2, "bh2": bh2}


# ----------------------------------------------------------------------------
# Pure-JAX reference (torch semantics) for correctness checking
# ----------------------------------------------------------------------------
def forward_ref(x, p):
    if x.ndim == 3:
        x = x[:, None, :, :]
    dn = ("NCHW", "OIHW", "NCHW")
    h = jax.lax.conv_general_dilated(x, p["w1"], (1, 1), "VALID", dimension_numbers=dn)
    h = jax.nn.relu(h + p["b1"][None, :, None, None])
    h = jax.lax.conv_general_dilated(h, p["w2"], (1, 1), "VALID", dimension_numbers=dn)
    h = jax.nn.relu(h + p["b2"][None, :, None, None])
    h = jax.lax.conv_general_dilated(h, p["w3"], (1, 1), "VALID", dimension_numbers=dn)
    h = jax.nn.relu(h + p["b3"][None, :, None, None])
    f = h.reshape(h.shape[0], -1)                      # NCHW flatten (torch .view)
    adv = jax.nn.relu(f @ p["wa1"].T + p["ba1"]) @ p["wa2"].T + p["ba2"]
    val = jax.nn.relu(f @ p["ws1"].T + p["bs1"]) @ p["ws2"].T + p["bs2"]
    return adv + val                                   # == adv + val.repeat(1, A)


if __name__ == "__main__":
    key = jax.random.PRNGKey(0)
    kx, kp = jax.random.split(key)

    num_actions = 4
    params = init_params(kp, num_actions=num_actions)
    kparams = prepare_params(params, num_actions=num_actions)

    # Input spatial 7 x 11 -> three 2x2 VALID convs -> 16 x 4 x 8 = 512 features.
    x = jax.random.normal(kx, (2, 1, 7, 11), jnp.float32)

    out = jax.block_until_ready(forward(x, kparams))
    ref = jax.block_until_ready(forward_ref(x, params))

    assert out.shape == (2, num_actions), out.shape
    # bf16 weights/activations on the MXU path -> relaxed tolerance (per review).
    err = float(jnp.max(jnp.abs(out - ref)))
    assert jnp.allclose(out, ref, atol=2e-2, rtol=2e-2), (
        f"mismatch vs JAX reference (max abs err {err})")

    print("KERNEL_OK")
</pallas_src>

<mosaic_0001>
module attributes {stable_mosaic.version = 11 : i64} {
  func.func @_convd3qn4_kernel(%arg0: memref<14x11xf32, #tpu.memory_space<vmem>>, %arg1: memref<2x11x640xf32, #tpu.memory_space<vmem>>, %arg2: memref<1x640xf32, #tpu.memory_space<vmem>>, %arg3: memref<2x640x288xbf16, #tpu.memory_space<vmem>>, %arg4: memref<1x288xf32, #tpu.memory_space<vmem>>, %arg5: memref<2x288x128xbf16, #tpu.memory_space<vmem>>, %arg6: memref<1x128xf32, #tpu.memory_space<vmem>>, %arg7: memref<4x128x256xbf16, #tpu.memory_space<vmem>>, %arg8: memref<1x256xf32, #tpu.memory_space<vmem>>, %arg9: memref<256x4xf32, #tpu.memory_space<vmem>>, %arg10: memref<1x4xf32, #tpu.memory_space<vmem>>, %arg11: memref<2x4xf32, #tpu.memory_space<vmem>>, %arg12: memref<13x640xbf16, #tpu.memory_space<vmem>>, %arg13: memref<12x288xbf16, #tpu.memory_space<vmem>>, %arg14: memref<11x128xbf16, #tpu.memory_space<vmem>>) attributes {dimension_semantics = [], scalar_prefetch = 0 : i64, scratch_operands = 3 : i64, tpu.core_type = #tpu.core_type<tc>} {
    %c0 = arith.constant 0 : index
    %c0_0 = arith.constant 0 : index
    %0 = vector.load %arg0[%c0, %c0_0] : memref<14x11xf32, #tpu.memory_space<vmem>>, vector<13x11xf32>
    %c0_1 = arith.constant 0 : index
    %c0_2 = arith.constant 0 : index
    %c0_3 = arith.constant 0 : index
    %1 = vector.load %arg1[%c0_1, %c0_2, %c0_3] : memref<2x11x640xf32, #tpu.memory_space<vmem>>, vector<1x11x640xf32>
    %2 = vector.shape_cast %1 : vector<1x11x640xf32> to vector<11x640xf32>
    %cst = arith.constant dense<0.000000e+00> : vector<13x640xf32>
    %3 = tpu.matmul %0, %2, %cst {dimension_numbers = #tpu.dot_dimension_numbers<[1], [0], [0], [1], [0, 0, 1, 1], [], []>} : vector<13x11xf32>, vector<11x640xf32>, vector<13x640xf32> -> vector<13x640xf32>
    %c1 = arith.constant 1 : index
    %c0_4 = arith.constant 0 : index
    %4 = vector.load %arg0[%c1, %c0_4] : memref<14x11xf32, #tpu.memory_space<vmem>>, vector<13x11xf32>
    %c1_5 = arith.constant 1 : index
    %c0_6 = arith.constant 0 : index
    %c0_7 = arith.constant 0 : index
    %5 = vector.load %arg1[%c1_5, %c0_6, %c0_7] : memref<2x11x640xf32, #tpu.memory_space<vmem>>, vector<1x11x640xf32>
    %6 = vector.shape_cast %5 : vector<1x11x640xf32> to vector<11x640xf32>
    %cst_8 = arith.constant dense<0.000000e+00> : vector<13x640xf32>
    %7 = tpu.matmul %4, %6, %cst_8 {dimension_numbers = #tpu.dot_dimension_numbers<[1], [0], [0], [1], [0, 0, 1, 1], [], []>} : vector<13x11xf32>, vector<11x640xf32>, vector<13x640xf32> -> vector<13x640xf32>
    %8 = arith.addf %3, %7 : vector<13x640xf32>
    %c0_9 = arith.constant 0 : index
    %c0_10 = arith.constant 0 : index
    %9 = vector.load %arg2[%c0_9, %c0_10] : memref<1x640xf32, #tpu.memory_space<vmem>>, vector<1x640xf32>
    %10 = vector.broadcast %9 : vector<1x640xf32> to vector<13x640xf32>
    %11 = arith.addf %8, %10 : vector<13x640xf32>
    %cst_11 = arith.constant 0.000000e+00 : f32
    %12 = vector.broadcast %cst_11 : f32 to vector<13x640xf32>
    %13 = arith.maximumf %11, %12 : vector<13x640xf32>
    %14 = arith.truncf %13 : vector<13x640xf32> to vector<13x640xbf16>
    %c0_12 = arith.constant 0 : index
    %c0_13 = arith.constant 0 : index
    %15 = vector.load %arg12[%c0_12, %c0_13] : memref<13x640xbf16, #tpu.memory_space<vmem>>, vector<13x640xbf16>
    tpu.vector_store %arg12[%c0_12, %c0_13], %14 {strides = array<i32>} : memref<13x640xbf16, #tpu.memory_space<vmem>>, vector<13x640xbf16>,
    %c0_14 = arith.constant 0 : index
    %c0_15 = arith.constant 0 : index
    %16 = vector.load %arg12[%c0_14, %c0_15] : memref<13x640xbf16, #tpu.memory_space<vmem>>, vector<12x640xbf16>
    %c0_16 = arith.constant 0 : index
    %c0_17 = arith.constant 0 : index
    %c0_18 = arith.constant 0 : index
    %17 = vector.load %arg3[%c0_16, %c0_17, %c0_18] : memref<2x640x288xbf16, #tpu.memory_space<vmem>>, vector<1x640x288xbf16>
    %18 = vector.shape_cast %17 : vector<1x640x288xbf16> to vector<640x288xbf16>
    %cst_19 = arith.constant dense<0.000000e+00> : vector<12x288xf32>
    %19 = tpu.matmul %16, %18, %cst_19 {dimension_numbers = #tpu.dot_dimension_numbers<[1], [0], [0], [1], [0, 0, 1, 1], [], []>} : vector<12x640xbf16>, vector<640x288xbf16>, vector<12x288xf32> -> vector<12x288xf32>
    %c1_20 = arith.constant 1 : index
    %c0_21 = arith.constant 0 : index
    %20 = vector.load %arg12[%c1_20, %c0_21] : memref<13x640xbf16, #tpu.memory_space<vmem>>, vector<12x640xbf16>
    %c1_22 = arith.constant 1 : index
    %c0_23 = arith.constant 0 : index
    %c0_24 = arith.constant 0 : index
    %21 = vector.load %arg3[%c1_22, %c0_23, %c0_24] : memref<2x640x288xbf16, #tpu.memory_space<vmem>>, vector<1x640x288xbf16>
    %22 = vector.shape_cast %21 : vector<1x640x288xbf16> to vector<640x288xbf16>
    %cst_25 = arith.constant dense<0.000000e+00> : vector<12x288xf32>
    %23 = tpu.matmul %20, %22, %cst_25 {dimension_numbers = #tpu.dot_dimension_numbers<[1], [0], [0], [1], [0, 0, 1, 1], [], []>} : vector<12x640xbf16>, vector<640x288xbf16>, vector<12x288xf32> -> vector<12x288xf32>
    %24 = arith.addf %19, %23 : vector<12x288xf32>
    %c0_26 = arith.constant 0 : index
    %c0_27 = arith.constant 0 : index
    %25 = vector.load %arg4[%c0_26, %c0_27] : memref<1x288xf32, #tpu.memory_space<vmem>>, vector<1x288xf32>
    %26 = vector.broadcast %25 : vector<1x288xf32> to vector<12x288xf32>
    %27 = arith.addf %24, %26 : vector<12x288xf32>
    %cst_28 = arith.constant 0.000000e+00 : f32
    %28 = vector.broadcast %cst_28 : f32 to vector<12x288xf32>
    %29 = arith.maximumf %27, %28 : vector<12x288xf32>
    %30 = arith.truncf %29 : vector<12x288xf32> to vector<12x288xbf16>
    %c0_29 = arith.constant 0 : index
    %c0_30 = arith.constant 0 : index
    %31 = vector.load %arg13[%c0_29, %c0_30] : memref<12x288xbf16, #tpu.memory_space<vmem>>, vector<12x288xbf16>
    tpu.vector_store %arg13[%c0_29, %c0_30], %30 {strides = array<i32>} : memref<12x288xbf16, #tpu.memory_space<vmem>>, vector<12x288xbf16>,
    %c0_31 = arith.constant 0 : index
    %c0_32 = arith.constant 0 : index
    %32 = vector.load %arg13[%c0_31, %c0_32] : memref<12x288xbf16, #tpu.memory_space<vmem>>, vector<11x288xbf16>
    %c0_33 = arith.constant 0 : index
    %c0_34 = arith.constant 0 : index
    %c0_35 = arith.constant 0 : index
    %33 = vector.load %arg5[%c0_33, %c0_34, %c0_35] : memref<2x288x128xbf16, #tpu.memory_space<vmem>>, vector<1x288x128xbf16>
    %34 = vector.shape_cast %33 : vector<1x288x128xbf16> to vector<288x128xbf16>
    %cst_36 = arith.constant dense<0.000000e+00> : vector<11x128xf32>
    %35 = tpu.matmul %32, %34, %cst_36 {dimension_numbers = #tpu.dot_dimension_numbers<[1], [0], [0], [1], [0, 0, 1, 1], [], []>} : vector<11x288xbf16>, vector<288x128xbf16>, vector<11x128xf32> -> vector<11x128xf32>
    %c1_37 = arith.constant 1 : index
    %c0_38 = arith.constant 0 : index
    %36 = vector.load %arg13[%c1_37, %c0_38] : memref<12x288xbf16, #tpu.memory_space<vmem>>, vector<11x288xbf16>
    %c1_39 = arith.constant 1 : index
    %c0_40 = arith.constant 0 : index
    %c0_41 = arith.constant 0 : index
    %37 = vector.load %arg5[%c1_39, %c0_40, %c0_41] : memref<2x288x128xbf16, #tpu.memory_space<vmem>>, vector<1x288x128xbf16>
    %38 = vector.shape_cast %37 : vector<1x288x128xbf16> to vector<288x128xbf16>
    %cst_42 = arith.constant dense<0.000000e+00> : vector<11x128xf32>
    %39 = tpu.matmul %36, %38, %cst_42 {dimension_numbers = #tpu.dot_dimension_numbers<[1], [0], [0], [1], [0, 0, 1, 1], [], []>} : vector<11x288xbf16>, vector<288x128xbf16>, vector<11x128xf32> -> vector<11x128xf32>
    %40 = arith.addf %35, %39 : vector<11x128xf32>
    %c0_43 = arith.constant 0 : index
    %c0_44 = arith.constant 0 : index
    %41 = vector.load %arg6[%c0_43, %c0_44] : memref<1x128xf32, #tpu.memory_space<vmem>>, vector<1x128xf32>
    %42 = vector.broadcast %41 : vector<1x128xf32> to vector<11x128xf32>
    %43 = arith.addf %40, %42 : vector<11x128xf32>
    %cst_45 = arith.constant 0.000000e+00 : f32
    %44 = vector.broadcast %cst_45 : f32 to vector<11x128xf32>
    %45 = arith.maximumf %43, %44 : vector<11x128xf32>
    %46 = arith.truncf %45 : vector<11x128xf32> to vector<11x128xbf16>
    %c0_46 = arith.constant 0 : index
    %c0_47 = arith.constant 0 : index
    %47 = vector.load %arg14[%c0_46, %c0_47] : memref<11x128xbf16, #tpu.memory_space<vmem>>, vector<11x128xbf16>
    tpu.vector_store %arg14[%c0_46, %c0_47], %46 {strides = array<i32>} : memref<11x128xbf16, #tpu.memory_space<vmem>>, vector<11x128xbf16>,
    %c0_48 = arith.constant 0 : index
    %c0_49 = arith.constant 0 : index
    %48 = vector.load %arg14[%c0_48, %c0_49] : memref<11x128xbf16, #tpu.memory_space<vmem>>, vector<8x128xbf16>
    %c0_50 = arith.constant 0 : index
    %c0_51 = arith.constant 0 : index
    %c0_52 = arith.constant 0 : index
    %49 = vector.load %arg7[%c0_50, %c0_51, %c0_52] : memref<4x128x256xbf16, #tpu.memory_space<vmem>>, vector<1x128x256xbf16>
    %50 = vector.shape_cast %49 : vector<1x128x256xbf16> to vector<128x256xbf16>
    %cst_53 = arith.constant dense<0.000000e+00> : vector<8x256xf32>
    %51 = tpu.matmul %48, %50, %cst_53 {dimension_numbers = #tpu.dot_dimension_numbers<[1], [0], [0], [1], [0, 0, 1, 1], [], []>} : vector<8x128xbf16>, vector<128x256xbf16>, vector<8x256xf32> -> vector<8x256xf32>
    %c1_54 = arith.constant 1 : index
    %c0_55 = arith.constant 0 : index
    %52 = vector.load %arg14[%c1_54, %c0_55] : memref<11x128xbf16, #tpu.memory_space<vmem>>, vector<8x128xbf16>
    %c1_56 = arith.constant 1 : index
    %c0_57 = arith.constant 0 : index
    %c0_58 = arith.constant 0 : index
    %53 = vector.load %arg7[%c1_56, %c0_57, %c0_58] : memref<4x128x256xbf16, #tpu.memory_space<vmem>>, vector<1x128x256xbf16>
    %54 = vector.shape_cast %53 : vector<1x128x256xbf16> to vector<128x256xbf16>
    %cst_59 = arith.constant dense<0.000000e+00> : vector<8x256xf32>
    %55 = tpu.matmul %52, %54, %cst_59 {dimension_numbers = #tpu.dot_dimension_numbers<[1], [0], [0], [1], [0, 0, 1, 1], [], []>} : vector<8x128xbf16>, vector<128x256xbf16>, vector<8x256xf32> -> vector<8x256xf32>
    %56 = arith.addf %51, %55 : vector<8x256xf32>
    %c2 = arith.constant 2 : index
    %c0_60 = arith.constant 0 : index
    %57 = vector.load %arg14[%c2, %c0_60] : memref<11x128xbf16, #tpu.memory_space<vmem>>, vector<8x128xbf16>
    %c2_61 = arith.constant 2 : index
    %c0_62 = arith.constant 0 : index
    %c0_63 = arith.constant 0 : index
    %58 = vector.load %arg7[%c2_61, %c0_62, %c0_63] : memref<4x128x256xbf16, #tpu.memory_space<vmem>>, vector<1x128x256xbf16>
    %59 = vector.shape_cast %58 : vector<1x128x256xbf16> to vector<128x256xbf16>
    %cst_64 = arith.constant dense<0.000000e+00> : vector<8x256xf32>
    %60 = tpu.matmul %57, %59, %cst_64 {dimension_numbers = #tpu.dot_dimension_numbers<[1], [0], [0], [1], [0, 0, 1, 1], [], []>} : vector<8x128xbf16>, vector<128x256xbf16>, vector<8x256xf32> -> vector<8x256xf32>
    %61 = arith.addf %56, %60 : vector<8x256xf32>
    %c3 = arith.constant 3 : index
    %c0_65 = arith.constant 0 : index
    %62 = vector.load %arg14[%c3, %c0_65] : memref<11x128xbf16, #tpu.memory_space<vmem>>, vector<8x128xbf16>
    %c3_66 = arith.constant 3 : index
    %c0_67 = arith.constant 0 : index
    %c0_68 = arith.constant 0 : index
    %63 = vector.load %arg7[%c3_66, %c0_67, %c0_68] : memref<4x128x256xbf16, #tpu.memory_space<vmem>>, vector<1x128x256xbf16>
    %64 = vector.shape_cast %63 : vector<1x128x256xbf16> to vector<128x256xbf16>
    %cst_69 = arith.constant dense<0.000000e+00> : vector<8x256xf32>
    %65 = tpu.matmul %62, %64, %cst_69 {dimension_numbers = #tpu.dot_dimension_numbers<[1], [0], [0], [1], [0, 0, 1, 1], [], []>} : vector<8x128xbf16>, vector<128x256xbf16>, vector<8x256xf32> -> vector<8x256xf32>
    %66 = arith.addf %61, %65 : vector<8x256xf32>
    %c0_70 = arith.constant 0 : index
    %c0_71 = arith.constant 0 : index
    %67 = vector.load %arg8[%c0_70, %c0_71] : memref<1x256xf32, #tpu.memory_space<vmem>>, vector<1x256xf32>
    %68 = vector.broadcast %67 : vector<1x256xf32> to vector<8x256xf32>
    %69 = arith.addf %66, %68 : vector<8x256xf32>
    %cst_72 = arith.constant 0.000000e+00 : f32
    %70 = vector.broadcast %cst_72 : f32 to vector<8x256xf32>
    %71 = arith.maximumf %69, %70 : vector<8x256xf32>
    %c0_73 = arith.constant 0 : index
    %c0_74 = arith.constant 0 : index
    %72 = vector.load %arg9[%c0_73, %c0_74] : memref<256x4xf32, #tpu.memory_space<vmem>>, vector<256x4xf32>
    %cst_75 = arith.constant dense<0.000000e+00> : vector<8x4xf32>
    %73 = tpu.matmul %71, %72, %cst_75 {dimension_numbers = #tpu.dot_dimension_numbers<[1], [0], [0], [1], [0, 0, 1, 1], [], []>} : vector<8x256xf32>, vector<256x4xf32>, vector<8x4xf32> -> vector<8x4xf32>
    %c0_76 = arith.constant 0 : index
    %c0_77 = arith.constant 0 : index
    %74 = vector.load %arg10[%c0_76, %c0_77] : memref<1x4xf32, #tpu.memory_space<vmem>>, vector<1x4xf32>
    %75 = vector.broadcast %74 : vector<1x4xf32> to vector<8x4xf32>
    %76 = arith.addf %73, %75 : vector<8x4xf32>
    %77 = vector.extract_strided_slice %76 {offsets = [0, 0], sizes = [1, 4], strides = [1, 1]} : vector<8x4xf32> to vector<1x4xf32>
    %78 = vector.shape_cast %77 : vector<1x4xf32> to vector<4xf32>
    %c0_78 = arith.constant 0 : index
    %c0_79 = arith.constant 0 : index
    %79 = vector.load %arg11[%c0_78, %c0_79] : memref<2x4xf32, #tpu.memory_space<vmem>>, vector<1x4xf32>
    %80 = vector.shape_cast %79 : vector<1x4xf32> to vector<4xf32>
    %81 = vector.shape_cast %78 : vector<4xf32> to vector<1x4xf32>
    tpu.vector_store %arg11[%c0_78, %c0_79], %81 {strides = array<i32>} : memref<2x4xf32, #tpu.memory_space<vmem>>, vector<1x4xf32>,
    %82 = vector.extract_strided_slice %76 {offsets = [7, 0], sizes = [1, 4], strides = [1, 1]} : vector<8x4xf32> to vector<1x4xf32>
    %83 = vector.shape_cast %82 : vector<1x4xf32> to vector<4xf32>
    %c1_80 = arith.constant 1 : index
    %c0_81 = arith.constant 0 : index
    %84 = vector.load %arg11[%c1_80, %c0_81] : memref<2x4xf32, #tpu.memory_space<vmem>>, vector<1x4xf32>
    %85 = vector.shape_cast %84 : vector<1x4xf32> to vector<4xf32>
    %86 = vector.shape_cast %83 : vector<4xf32> to vector<1x4xf32>
    tpu.vector_store %arg11[%c1_80, %c0_81], %86 {strides = array<i32>} : memref<2x4xf32, #tpu.memory_space<vmem>>, vector<1x4xf32>,
    return
  }
}

</mosaic_0001>

<llo_original>
// kernel: tpu_custom_call.1
$region0: #{tpu_custom_call.1}
  #allocation0 [shape = 'u32[]', space=smem, size = 0x4, offset = 0x4, fixed_abs, tag = 'smem constant byte address 0x4 - core index']
  #allocation1 [shape = 'u32[144,128]{1,0:T(1,128)}', space=vmem, size = 0x12000, scoped, tag = 'internal scratch']
  #allocation2 [shape = 'bf16[13,640]{1,0:T(8,128)(2,1)}', space=vmem, size = 0x5000, scoped, tag = 'scratch operand']
  #allocation3 [shape = 'bf16[12,288]{1,0:T(8,128)(2,1)}', space=vmem, size = 0x3000, scoped, tag = 'scratch operand']
  #allocation4 [shape = 'bf16[11,128]{1,0:T(8,128)(2,1)}', space=vmem, size = 0x1000, scoped, tag = 'scratch operand']
  %s0 = inlined_call_operand.vmem [shape: f32[14,11], index: 0, kind: input, shape index: {}]
  %s1 = inlined_call_operand.vmem [shape: f32[2,11,640], index: 1, kind: input, shape index: {}]
  %s2 = inlined_call_operand.vmem [shape: f32[1,640], index: 2, kind: input, shape index: {}]
  %s3 = inlined_call_operand.vmem [shape: bf16[2,640,288], index: 3, kind: input, shape index: {}]
  %s4 = inlined_call_operand.vmem [shape: f32[1,288], index: 4, kind: input, shape index: {}]
  %s5 = inlined_call_operand.vmem [shape: bf16[2,288,128], index: 5, kind: input, shape index: {}]
  %s6 = inlined_call_operand.vmem [shape: f32[1,128], index: 6, kind: input, shape index: {}]
  %s7 = inlined_call_operand.vmem [shape: bf16[4,128,256], index: 7, kind: input, shape index: {}]
  %s8 = inlined_call_operand.vmem [shape: f32[1,256], index: 8, kind: input, shape index: {}]
  %s9 = inlined_call_operand.vmem [shape: f32[256,4], index: 9, kind: input, shape index: {}]
  %s10 = inlined_call_operand.vmem [shape: f32[1,4], index: 10, kind: input, shape index: {}]
  %s11 = inlined_call_operand.hbm [shape: f32[2,4], index: 11, kind: output, shape index: {}]
  %s12 = sld [smem:[#allocation0]]
  $region54: #{tpu_custom_call.1} parent=0
    _
  %s14 = ssub.s32 1, %s12
  %s15 = scalar_select 0, %s14, %s12
  $region1: #{tpu_custom_call.1} parent=0
    #allocation5 [shape = 'u8[1024]{0}', space=vmem, size = 0x400, scoped, tag = 'output window, operand 0, single buffered']
    #allocation6 [shape = 's32[1]{0}', space=sflag, size = 0x4, scoped, tag = 'scoped memory for tpu_custom_call.1']
    %16 = vsyncpa [#allocation6], 0
    // Predicated region
    $region2: #{tpu_custom_call.1} parent=1 // pred_check
      _
    $region3: #{tpu_custom_call.1} parent=1 // pred_check_branch
      %18 = sbr.rel (0) target = $region5
    $region4: #{tpu_custom_call.1} parent=1 // pred_region
      _
    $region5: #{tpu_custom_call.1} parent=1 // pred_fallthru
      _
    // Predicated region
    $region6: #{tpu_custom_call.1} parent=1 // pred_check
      _
    $region7: #{tpu_custom_call.1} parent=1 // pred_check_branch
      %20 = sbr.rel (0) target = $region9
    $region8: #{tpu_custom_call.1} parent=1 // pred_region
      _
    $region9: #{tpu_custom_call.1} parent=1 // pred_fallthru
      _
    // Predicated region
    $region10: #{tpu_custom_call.1} parent=1 // pred_check
      _
    $region11: #{tpu_custom_call.1} parent=1 // pred_check_branch
      %22 = sbr.rel (0) target = $region13
    $region12: #{tpu_custom_call.1} parent=1 // pred_region
      _
    $region13: #{tpu_custom_call.1} parent=1 // pred_fallthru
      _
    // Predicated region
    $region14: #{tpu_custom_call.1} parent=1 // pred_check
      _
    $region15: #{tpu_custom_call.1} parent=1 // pred_check_branch
      %24 = sbr.rel (0) target = $region17
    $region16: #{tpu_custom_call.1} parent=1 // pred_region
      _
    $region17: #{tpu_custom_call.1} parent=1 // pred_fallthru
      _
    // Predicated region
    $region18: #{tpu_custom_call.1} parent=1 // pred_check
      _
    $region19: #{tpu_custom_call.1} parent=1 // pred_check_branch
      %26 = sbr.rel (0) target = $region21
    $region20: #{tpu_custom_call.1} parent=1 // pred_region
      _
    $region21: #{tpu_custom_call.1} parent=1 // pred_fallthru
      _
    // Predicated region
    $region22: #{tpu_custom_call.1} parent=1 // pred_check
      _
    $region23: #{tpu_custom_call.1} parent=1 // pred_check_branch
      %28 = sbr.rel (0) target = $region25
    $region24: #{tpu_custom_call.1} parent=1 // pred_region
      _
    $region25: #{tpu_custom_call.1} parent=1 // pred_fallthru
      _
    // Predicated region
    $region26: #{tpu_custom_call.1} parent=1 // pred_check
      _
    $region27: #{tpu_custom_call.1} parent=1 // pred_check_branch
      %30 = sbr.rel (0) target = $region29
    $region28: #{tpu_custom_call.1} parent=1 // pred_region
      _
    $region29: #{tpu_custom_call.1} parent=1 // pred_fallthru
      _
    // Predicated region
    $region30: #{tpu_custom_call.1} parent=1 // pred_check
      _
    $region31: #{tpu_custom_call.1} parent=1 // pred_check_branch
      %32 = sbr.rel (0) target = $region33
    $region32: #{tpu_custom_call.1} parent=1 // pred_region
      _
    $region33: #{tpu_custom_call.1} parent=1 // pred_fallthru
      _
    // Predicated region
    $region34: #{tpu_custom_call.1} parent=1 // pred_check
      _
    $region35: #{tpu_custom_call.1} parent=1 // pred_check_branch
      %34 = sbr.rel (0) target = $region37
    $region36: #{tpu_custom_call.1} parent=1 // pred_region
      _
    $region37: #{tpu_custom_call.1} parent=1 // pred_fallthru
      _
    // Predicated region
    $region38: #{tpu_custom_call.1} parent=1 // pred_check
      _
    $region39: #{tpu_custom_call.1} parent=1 // pred_check_branch
      %36 = sbr.rel (0) target = $region41
    $region40: #{tpu_custom_call.1} parent=1 // pred_region
      _
    $region41: #{tpu_custom_call.1} parent=1 // pred_fallthru
      _
    // Predicated region
    $region42: #{tpu_custom_call.1} parent=1 // pred_check
      _
    $region43: #{tpu_custom_call.1} parent=1 // pred_check_branch
      %38 = sbr.rel (0) target = $region45
    $region44: #{tpu_custom_call.1} parent=1 // pred_region
      _
    $region45: #{tpu_custom_call.1} parent=1 // pred_fallthru
      _
    %v40 = vld [vmem:[%s0] sm:$0xff]
    %v41 = vld [vmem:[%s0 + $0x8] sm:$0x1f]
    %v42 = vld [vmem:[%s1] sm:$0xff]
    %v43 = vld [vmem:[%s1 + $0x8] sm:$0xff]
    %v44 = vld [vmem:[%s1 + $0x10] sm:$0xff]
    %v45 = vld [vmem:[%s1 + $0x18] sm:$0xff]
    %v46 = vld [vmem:[%s1 + $0x20] sm:$0xff]
    %v47 = vld [vmem:[%s1 + $0x28] sm:$0x7]
    %v48 = vld [vmem:[%s1 + $0x30] sm:$0x7]
    %v49 = vld [vmem:[%s1 + $0x38] sm:$0x7]
    %v50 = vld [vmem:[%s1 + $0x40] sm:$0x7]
    %v51 = vld [vmem:[%s1 + $0x48] sm:$0x7]
    %v52 = vld [vmem:[%s0 + $0x1] sm:$0xff]
    %v53 = vld [vmem:[%s0 + $0x9] sm:$0x1f]
    %s54 = scalar_lea.vmem %s1, 80
    %v55 = vld [vmem:[%s54] sm:$0xff]
    %v56 = vld [vmem:[%s54 + $0x8] sm:$0xff]
    %v57 = vld [vmem:[%s54 + $0x10] sm:$0xff]
    %v58 = vld [vmem:[%s54 + $0x18] sm:$0xff]
    %v59 = vld [vmem:[%s54 + $0x20] sm:$0xff]
    %v60 = vld [vmem:[%s54 + $0x28] sm:$0x7]
    %v61 = vld [vmem:[%s54 + $0x30] sm:$0x7]
    %v62 = vld [vmem:[%s54 + $0x38] sm:$0x7]
    %v63 = vld [vmem:[%s54 + $0x40] sm:$0x7]
    %v64 = vld [vmem:[%s54 + $0x48] sm:$0x7]
    %vm65 = vcmask 89088
    %v67 = vsel %vm65, %v52, 0
    %v70 = vsel %vm65, %v53, 0
    %vm72 = vcmask 1042432
    %v74 = vsel %vm72, %v60, 0
    %v77 = vsel %vm72, %v61, 0
    %v80 = vsel %vm72, %v62, 0
    %v83 = vsel %vm72, %v63, 0
    %v86 = vsel %vm72, %v64, 0
    %88 = vmatprep.subr.mxu0 %v56
    %89 = vmatpush1.msra.mxu0 %v55
    %90 = vmatprep.subr.mxu0 %v77
    %91 = vmatpush1.msra.mxu0 %v74
    %92 = vmatprep.subr.mxu0 0.0
    %93 = vmatpush1.msra.mxu0 0.0
    %94 = vmatprep.subr.mxu0 0.0
    %95 = vmatpush1.msra.mxu0 0.0
    %96 = vmatprep.subr.mxu0 0.0
    %97 = vmatpush1.msra.mxu0 0.0
    %98 = vmatprep.subr.mxu0 0.0
    %99 = vmatpush1.msra.mxu0 0.0
    %100 = vmatprep.subr.mxu0 0.0
    %101 = vmatpush1.msra.mxu0 0.0
    %102 = vmatprep.subr.mxu0 0.0
    %103 = vmatpush1.msra.mxu0 0.0
    %104 = vmatprep.subr.mxu0 0.0
    %105 = vmatpush1.msra.mxu0 0.0
    %106 = vmatprep.subr.mxu0 0.0
    %107 = vmatpush1.msra.mxu0 0.0
    %108 = vmatprep.subr.mxu0 0.0
    %109 = vmatpush1.msra.mxu0 0.0
    %110 = vmatprep.subr.mxu0 0.0
    %111 = vmatpush1.msra.mxu0 0.0
    %112 = vmatprep.subr.mxu0 0.0
    %113 = vmatpush1.msra.mxu0 0.0
    %114 = vmatprep.subr.mxu0 0.0
    %115 = vmatpush1.msra.mxu0 0.0
    %116 = vmatprep.subr.mxu0 0.0
    %117 = vmatpush1.msra.mxu0 0.0
    %118 = vmatprep.subr.mxu0 0.0
    %119 = vmatpush1.msra.mxu0 0.0
    %120 = vmatprep.subr.mxu0 0.0
    %121 = vmatpush1.msra.mxu0 0.0
    %122 = vmatprep.subr.mxu0 0.0
    %123 = vmatpush1.msra.mxu0 0.0
    %124 = vmatprep.subr.mxu0 0.0
    %125 = vmatpush1.msra.mxu0 0.0
    %126 = vmatprep.subr.mxu0 0.0
    %127 = vmatpush1.msra.mxu0 0.0
    %128 = vmatprep.subr.mxu0 0.0
    %129 = vmatpush1.msra.mxu0 0.0
    %130 = vmatprep.subr.mxu0 0.0
    %131 = vmatpush1.msra.mxu0 0.0
    %132 = vmatprep.subr.mxu0 0.0
    %133 = vmatpush1.msra.mxu0 0.0
    %134 = vmatprep.subr.mxu0 0.0
    %135 = vmatpush1.msra.mxu0 0.0
    %136 = vmatprep.subr.mxu0 0.0
    %137 = vmatpush1.msra.mxu0 0.0
    %138 = vmatprep.subr.mxu0 0.0
    %139 = vmatpush1.msra.mxu0 0.0
    %140 = vmatprep.subr.mxu0 0.0
    %141 = vmatpush1.msra.mxu0 0.0
    %142 = vmatprep.subr.mxu0 0.0
    %143 = vmatpush1.msra.mxu0 0.0
    %144 = vmatprep.subr.mxu0 0.0
    %145 = vmatpush1.msra.mxu0 0.0
    %146 = vmatprep.subr.mxu0 0.0
    %147 = vmatpush1.msra.mxu0 0.0
    %148 = vmatprep.subr.mxu0 0.0
    %149 = vmatpush1.msra.mxu0 0.0
    %150 = vmatprep.subr.mxu0 0.0
    %151 = vmatpush1.msra.mxu0 0.0
    %152 = vmatprep.mubr.f32.mxu0 0.0
    %153 = vmatmul.mubr.f32.gmra.mrb[0].mxu0 %v67
    %v154 = vpop.f32.mrb[0].mxu0
    %v155 = vadd.f32 0.0, %v154
    %v156 = vpop.f32.mrb[0].mxu0
    %v157 = vadd.f32 0.0, %v156
    %158 = vmatprep.mubr.f32.mxu0 0.0
    %159 = vmatmul.mubr.f32.gmra.mrb[0].mxu0 %v70
    %v160 = vpop.f32.mrb[0].mxu0
    %v161 = vadd.f32 0.0, %v160
    %v162 = vpop.f32.mrb[0].mxu0
    %v163 = vadd.f32 0.0, %v162
    %164 = vdwg.mxu0
    %165 = vmatprep.subr.mxu0 %v58
    %166 = vmatpush1.msra.mxu0 %v57
    %167 = vmatprep.subr.mxu0 %v83
    %168 = vmatpush1.msra.mxu0 %v80
    %169 = vmatprep.subr.mxu0 0.0
    %170 = vmatpush1.msra.mxu0 0.0
    %171 = vmatprep.subr.mxu0 0.0
    %172 = vmatpush1.msra.mxu0 0.0
    %173 = vmatprep.subr.mxu0 0.0
    %174 = vmatpush1.msra.mxu0 0.0
    %175 = vmatprep.subr.mxu0 0.0
    %176 = vmatpush1.msra.mxu0 0.0
    %177 = vmatprep.subr.mxu0 0.0
    %178 = vmatpush1.msra.mxu0 0.0
    %179 = vmatprep.subr.mxu0 0.0
    %180 = vmatpush1.msra.mxu0 0.0
    %181 = vmatprep.subr.mxu0 0.0
    %182 = vmatpush1.msra.mxu0 0.0
    %183 = vmatprep.subr.mxu0 0.0
    %184 = vmatpush1.msra.mxu0 0.0
    %185 = vmatprep.subr.mxu0 0.0
    %186 = vmatpush1.msra.mxu0 0.0
    %187 = vmatprep.subr.mxu0 0.0
    %188 = vmatpush1.msra.mxu0 0.0
    %189 = vmatprep.subr.mxu0 0.0
    %190 = vmatpush1.msra.mxu0 0.0
    %191 = vmatprep.subr.mxu0 0.0
    %192 = vmatpush1.msra.mxu0 0.0
    %193 = vmatprep.subr.mxu0 0.0
    %194 = vmatpush1.msra.mxu0 0.0
    %195 = vmatprep.subr.mxu0 0.0
    %196 = vmatpush1.msra.mxu0 0.0
    %197 = vmatprep.subr.mxu0 0.0
    %198 = vmatpush1.msra.mxu0 0.0
    %199 = vmatprep.subr.mxu0 0.0
    %200 = vmatpush1.msra.mxu0 0.0
    %201 = vmatprep.subr.mxu0 0.0
    %202 = vmatpush1.msra.mxu0 0.0
    %203 = vmatprep.subr.mxu0 0.0
    %204 = vmatpush1.msra.mxu0 0.0
    %205 = vmatprep.subr.mxu0 0.0
    %206 = vmatpush1.msra.mxu0 0.0
    %207 = vmatprep.subr.mxu0 0.0
    %208 = vmatpush1.msra.mxu0 0.0
    %209 = vmatprep.subr.mxu0 0.0
    %210 = vmatpush1.msra.mxu0 0.0
    %211 = vmatprep.subr.mxu0 0.0
    %212 = vmatpush1.msra.mxu0 0.0
    %213 = vmatprep.subr.mxu0 0.0
    %214 = vmatpush1.msra.mxu0 0.0
    %215 = vmatprep.subr.mxu0 0.0
    %216 = vmatpush1.msra.mxu0 0.0
    %217 = vmatprep.subr.mxu0 0.0
    %218 = vmatpush1.msra.mxu0 0.0
    %219 = vmatprep.subr.mxu0 0.0
    %220 = vmatpush1.msra.mxu0 0.0
    %221 = vmatprep.subr.mxu0 0.0
    %222 = vmatpush1.msra.mxu0 0.0
    %223 = vmatprep.subr.mxu0 0.0
    %224 = vmatpush1.msra.mxu0 0.0
    %225 = vmatprep.subr.mxu0 0.0
    %226 = vmatpush1.msra.mxu0 0.0
    %227 = vmatprep.subr.mxu0 0.0
    %228 = vmatpush1.msra.mxu0 0.0
    %229 = vmatprep.mubr.f32.mxu0 0.0
    %230 = vmatmul.mubr.f32.gmra.mrb[0].mxu0 %v67
    %v231 = vpop.f32.mrb[0].mxu0
    %v232 = vadd.f32 0.0, %v231
    %v233 = vpop.f32.mrb[0].mxu0
    %v234 = vadd.f32 0.0, %v233
    %235 = vmatprep.mubr.f32.mxu0 0.0
    %236 = vmatmul.mubr.f32.gmra.mrb[0].mxu0 %v70
    %v237 = vpop.f32.mrb[0].mxu0
    %v238 = vadd.f32 0.0, %v237
    %v239 = vpop.f32.mrb[0].mxu0
    %v240 = vadd.f32 0.0, %v239
    %241 = vdwg.mxu0
    %242 = vmatprep.subr.mxu0 0.0
    %243 = vmatpush1.msra.mxu0 %v59
    %244 = vmatprep.subr.mxu0 0.0
    %245 = vmatpush1.msra.mxu0 %v86
    %246 = vmatprep.subr.mxu0 0.0
    %247 = vmatpush1.msra.mxu0 0.0
    %248 = vmatprep.subr.mxu0 0.0
    %249 = vmatpush1.msra.mxu0 0.0
    %250 = vmatprep.subr.mxu0 0.0
    %251 = vmatpush1.msra.mxu0 0.0
    %252 = vmatprep.subr.mxu0 0.0
    %253 = vmatpush1.msra.mxu0 0.0
    %254 = vmatprep.subr.mxu0 0.0
    %255 = vmatpush1.msra.mxu0 0.0
    %256 = vmatprep.subr.mxu0 0.0
    %257 = vmatpush1.msra.mxu0 0.0
    %258 = vmatprep.subr.mxu0 0.0
    %259 = vmatpush1.msra.mxu0 0.0
    %260 = vmatprep.subr.mxu0 0.0
    %261 = vmatpush1.msra.mxu0 0.0
    %262 = vmatprep.subr.mxu0 0.0
    %263 = vmatpush1.msra.mxu0 0.0
    %264 = vmatprep.subr.mxu0 0.0
    %265 = vmatpush1.msra.mxu0 0.0
    %266 = vmatprep.subr.mxu0 0.0
    %267 = vmatpush1.msra.mxu0 0.0
    %268 = vmatprep.subr.mxu0 0.0
    %269 = vmatpush1.msra.mxu0 0.0
    %270 = vmatprep.subr.mxu0 0.0
    %271 = vmatpush1.msra.mxu0 0.0
    %272 = vmatprep.subr.mxu0 0.0
    %273 = vmatpush1.msra.mxu0 0.0
    %274 = vmatprep.subr.mxu0 0.0
    %275 = vmatpush1.msra.mxu0 0.0
    %276 = vmatprep.subr.mxu0 0.0
    %277 = vmatpush1.msra.mxu0 0.0
    %278 = vmatprep.subr.mxu0 0.0
    %279 = vmatpush1.msra.mxu0 0.0
    %280 = vmatprep.subr.mxu0 0.0
    %281 = vmatpush1.msra.mxu0 0.0
    %282 = vmatprep.subr.mxu0 0.0
    %283 = vmatpush1.msra.mxu0 0.0
    %284 = vmatprep.subr.mxu0 0.0
    %285 = vmatpush1.msra.mxu0 0.0
    %286 = vmatprep.subr.mxu0 0.0
    %287 = vmatpush1.msra.mxu0 0.0
    %288 = vmatprep.subr.mxu0 0.0
    %289 = vmatpush1.msra.mxu0 0.0
    %290 = vmatprep.subr.mxu0 0.0
    %291 = vmatpush1.msra.mxu0 0.0
    %292 = vmatprep.subr.mxu0 0.0
    %293 = vmatpush1.msra.mxu0 0.0
    %294 = vmatprep.subr.mxu0 0.0
    %295 = vmatpush1.msra.mxu0 0.0
    %296 = vmatprep.subr.mxu0 0.0
    %297 = vmatpush1.msra.mxu0 0.0
    %298 = vmatprep.subr.mxu0 0.0
    %299 = vmatpush1.msra.mxu0 0.0
    %300 = vmatprep.subr.mxu0 0.0
    %301 = vmatpush1.msra.mxu0 0.0
    %302 = vmatprep.subr.mxu0 0.0
    %303 = vmatpush1.msra.mxu0 0.0
    %304 = vmatprep.subr.mxu0 0.0
    %305 = vmatpush1.msra.mxu0 0.0
    %306 = vmatprep.mubr.f32.mxu0 0.0
    %307 = vmatmul.mubr.f32.gmra.mrb[0].mxu0 %v67
    %v308 = vpop.f32.mrb[0].mxu0
    %v309 = vadd.f32 0.0, %v308
    %v310 = vpop.f32.mrb[0].mxu0
    %311 = vmatprep.mubr.f32.mxu0 0.0
    %312 = vmatmul.mubr.f32.gmra.mrb[0].mxu0 %v70
    %v313 = vpop.f32.mrb[0].mxu0
    %v314 = vadd.f32 0.0, %v313
    %v315 = vpop.f32.mrb[0].mxu0
    %316 = vdwg.mxu0
    %v318 = vsel %vm65, %v40, 0
    %v321 = vsel %vm65, %v41, 0
    %v324 = vsel %vm72, %v47, 0
    %v327 = vsel %vm72, %v48, 0
    %v330 = vsel %vm72, %v49, 0
    %v333 = vsel %vm72, %v50, 0
    %v336 = vsel %vm72, %v51, 0
    %338 = vmatprep.subr.mxu0 %v43
    %339 = vmatpush1.msra.mxu0 %v42
    %340 = vmatprep.subr.mxu0 %v327
    %341 = vmatpush1.msra.mxu0 %v324
    %342 = vmatprep.subr.mxu0 0.0
    %343 = vmatpush1.msra.mxu0 0.0
    %344 = vmatprep.subr.mxu0 0.0
    %345 = vmatpush1.msra.mxu0 0.0
    %346 = vmatprep.subr.mxu0 0.0
    %347 = vmatpush1.msra.mxu0 0.0
    %348 = vmatprep.subr.mxu0 0.0
    %349 = vmatpush1.msra.mxu0 0.0
    %350 = vmatprep.subr.mxu0 0.0
    %351 = vmatpush1.msra.mxu0 0.0
    %352 = vmatprep.subr.mxu0 0.0
    %353 = vmatpush1.msra.mxu0 0.0
    %354 = vmatprep.subr.mxu0 0.0
    %355 = vmatpush1.msra.mxu0 0.0
    %356 = vmatprep.subr.mxu0 0.0
    %357 = vmatpush1.msra.mxu0 0.0
    %358 = vmatprep.subr.mxu0 0.0
    %359 = vmatpush1.msra.mxu0 0.0
    %360 = vmatprep.subr.mxu0 0.0
    %361 = vmatpush1.msra.mxu0 0.0
    %362 = vmatprep.subr.mxu0 0.0
    %363 = vmatpush1.msra.mxu0 0.0
    %364 = vmatprep.subr.mxu0 0.0
    %365 = vmatpush1.msra.mxu0 0.0
    %366 = vmatprep.subr.mxu0 0.0
    %367 = vmatpush1.msra.mxu0 0.0
    %368 = vmatprep.subr.mxu0 0.0
    %369 = vmatpush1.msra.mxu0 0.0
    %370 = vmatprep.subr.mxu0 0.0
    %371 = vmatpush1.msra.mxu0 0.0
    %372 = vmatprep.subr.mxu0 0.0
    %373 = vmatpush1.msra.mxu0 0.0
    %374 = vmatprep.subr.mxu0 0.0
    %375 = vmatpush1.msra.mxu0 0.0
    %376 = vmatprep.subr.mxu0 0.0
    %377 = vmatpush1.msra.mxu0 0.0
    %378 = vmatprep.subr.mxu0 0.0
    %379 = vmatpush1.msra.mxu0 0.0
    %380 = vmatprep.subr.mxu0 0.0
    %381 = vmatpush1.msra.mxu0 0.0
    %382 = vmatprep.subr.mxu0 0.0
    %383 = vmatpush1.msra.mxu0 0.0
    %384 = vmatprep.subr.mxu0 0.0
    %385 = vmatpush1.msra.mxu0 0.0
    %386 = vmatprep.subr.mxu0 0.0
    %387 = vmatpush1.msra.mxu0 0.0
    %388 = vmatprep.subr.mxu0 0.0
    %389 = vmatpush1.msra.mxu0 0.0
    %390 = vmatprep.subr.mxu0 0.0
    %391 = vmatpush1.msra.mxu0 0.0
    %392 = vmatprep.subr.mxu0 0.0
    %393 = vmatpush1.msra.mxu0 0.0
    %394 = vmatprep.subr.mxu0 0.0
    %395 = vmatpush1.msra.mxu0 0.0
    %396 = vmatprep.subr.mxu0 0.0
    %397 = vmatpush1.msra.mxu0 0.0
    %398 = vmatprep.subr.mxu0 0.0
    %399 = vmatpush1.msra.mxu0 0.0
    %400 = vmatprep.subr.mxu0 0.0
    %401 = vmatpush1.msra.mxu0 0.0
    %402 = vmatprep.mubr.f32.mxu0 0.0
    %403 = vmatmul.mubr.f32.gmra.mrb[0].mxu0 %v318
    %v404 = vpop.f32.mrb[0].mxu0
    %v405 = vadd.f32 %v155, %v404
    %v406 = vpop.f32.mrb[0].mxu0
    %v407 = vadd.f32 %v157, %v406
    %408 = vmatprep.mubr.f32.mxu0 0.0
    %409 = vmatmul.mubr.f32.gmra.mrb[0].mxu0 %v321
    %v410 = vpop.f32.mrb[0].mxu0
    %v411 = vadd.f32 %v161, %v410
    %v412 = vpop.f32.mrb[0].mxu0
    %v413 = vadd.f32 %v163, %v412
    %414 = vdwg.mxu0
    %415 = vmatprep.subr.mxu0 %v45
    %416 = vmatpush1.msra.mxu0 %v44
    %417 = vmatprep.subr.mxu0 %v333
    %418 = vmatpush1.msra.mxu0 %v330
    %419 = vmatprep.subr.mxu0 0.0
    %420 = vmatpush1.msra.mxu0 0.0
    %421 = vmatprep.subr.mxu0 0.0
    %422 = vmatpush1.msra.mxu0 0.0
    %423 = vmatprep.subr.mxu0 0.0
    %424 = vmatpush1.msra.mxu0 0.0
    %425 = vmatprep.subr.mxu0 0.0
    %426 = vmatpush1.msra.mxu0 0.0
    %427 = vmatprep.subr.mxu0 0.0
    %428 = vmatpush1.msra.mxu0 0.0
    %429 = vmatprep.subr.mxu0 0.0
    %430 = vmatpush1.msra.mxu0 0.0
    %431 = vmatprep.subr.mxu0 0.0
    %432 = vmatpush1.msra.mxu0 0.0
    %433 = vmatprep.subr.mxu0 0.0
    %434 = vmatpush1.msra.mxu0 0.0
    %435 = vmatprep.subr.mxu0 0.0
    %436 = vmatpush1.msra.mxu0 0.0
    %437 = vmatprep.subr.mxu0 0.0
    %438 = vmatpush1.msra.mxu0 0.0
    %439 = vmatprep.subr.mxu0 0.0
    %440 = vmatpush1.msra.mxu0 0.0
    %441 = vmatprep.subr.mxu0 0.0
    %442 = vmatpush1.msra.mxu0 0.0
    %443 = vmatprep.subr.mxu0 0.0
    %444 = vmatpush1.msra.mxu0 0.0
    %445 = vmatprep.subr.mxu0 0.0
    %446 = vmatpush1.msra.mxu0 0.0
    %447 = vmatprep.subr.mxu0 0.0
    %448 = vmatpush1.msra.mxu0 0.0
    %449 = vmatprep.subr.mxu0 0.0
    %450 = vmatpush1.msra.mxu0 0.0
    %451 = vmatprep.subr.mxu0 0.0
    %452 = vmatpush1.msra.mxu0 0.0
    %453 = vmatprep.subr.mxu0 0.0
    %454 = vmatpush1.msra.mxu0 0.0
    %455 = vmatprep.subr.mxu0 0.0
    %456 = vmatpush1.msra.mxu0 0.0
    %457 = vmatprep.subr.mxu0 0.0
    %458 = vmatpush1.msra.mxu0 0.0
    %459 = vmatprep.subr.mxu0 0.0
    %460 = vmatpush1.msra.mxu0 0.0
    %461 = vmatprep.subr.mxu0 0.0
    %462 = vmatpush1.msra.mxu0 0.0
    %463 = vmatprep.subr.mxu0 0.0
    %464 = vmatpush1.msra.mxu0 0.0
    %465 = vmatprep.subr.mxu0 0.0
    %466 = vmatpush1.msra.mxu0 0.0
    %467 = vmatprep.subr.mxu0 0.0
    %468 = vmatpush1.msra.mxu0 0.0
    %469 = vmatprep.subr.mxu0 0.0
    %470 = vmatpush1.msra.mxu0 0.0
    %471 = vmatprep.subr.mxu0 0.0
    %472 = vmatpush1.msra.mxu0 0.0
    %473 = vmatprep.subr.mxu0 0.0
    %474 = vmatpush1.msra.mxu0 0.0
    %475 = vmatprep.subr.mxu0 0.0
    %476 = vmatpush1.msra.mxu0 0.0
    %477 = vmatprep.subr.mxu0 0.0
    %478 = vmatpush1.msra.mxu0 0.0
    %479 = vmatprep.mubr.f32.mxu0 0.0
    %480 = vmatmul.mubr.f32.gmra.mrb[0].mxu0 %v318
    %v481 = vpop.f32.mrb[0].mxu0
    %v482 = vadd.f32 %v232, %v481
    %v483 = vpop.f32.mrb[0].mxu0
    %v484 = vadd.f32 %v234, %v483
    %485 = vmatprep.mubr.f32.mxu0 0.0
    %486 = vmatmul.mubr.f32.gmra.mrb[0].mxu0 %v321
    %v487 = vpop.f32.mrb[0].mxu0
    %v488 = vadd.f32 %v238, %v487
    %v489 = vpop.f32.mrb[0].mxu0
    %v490 = vadd.f32 %v240, %v489
    %491 = vdwg.mxu0
    %492 = vmatprep.subr.mxu0 0.0
    %493 = vmatpush1.msra.mxu0 %v46
    %494 = vmatprep.subr.mxu0 0.0
    %495 = vmatpush1.msra.mxu0 %v336
    %496 = vmatprep.subr.mxu0 0.0
    %497 = vmatpush1.msra.mxu0 0.0
    %498 = vmatprep.subr.mxu0 0.0
    %499 = vmatpush1.msra.mxu0 0.0
    %500 = vmatprep.subr.mxu0 0.0
    %501 = vmatpush1.msra.mxu0 0.0
    %502 = vmatprep.subr.mxu0 0.0
    %503 = vmatpush1.msra.mxu0 0.0
    %504 = vmatprep.subr.mxu0 0.0
    %505 = vmatpush1.msra.mxu0 0.0
    %506 = vmatprep.subr.mxu0 0.0
    %507 = vmatpush1.msra.mxu0 0.0
    %508 = vmatprep.subr.mxu0 0.0
    %509 = vmatpush1.msra.mxu0 0.0
    %510 = vmatprep.subr.mxu0 0.0
    %511 = vmatpush1.msra.mxu0 0.0
    %512 = vmatprep.subr.mxu0 0.0
    %513 = vmatpush1.msra.mxu0 0.0
    %514 = vmatprep.subr.mxu0 0.0
    %515 = vmatpush1.msra.mxu0 0.0
    %516 = vmatprep.subr.mxu0 0.0
    %517 = vmatpush1.msra.mxu0 0.0
    %518 = vmatprep.subr.mxu0 0.0
    %519 = vmatpush1.msra.mxu0 0.0
    %520 = vmatprep.subr.mxu0 0.0
    %521 = vmatpush1.msra.mxu0 0.0
    %522 = vmatprep.subr.mxu0 0.0
    %523 = vmatpush1.msra.mxu0 0.0
    %524 = vmatprep.subr.mxu0 0.0
    %525 = vmatpush1.msra.mxu0 0.0
    %526 = vmatprep.subr.mxu0 0.0
    %527 = vmatpush1.msra.mxu0 0.0
    %528 = vmatprep.subr.mxu0 0.0
    %529 = vmatpush1.msra.mxu0 0.0
    %530 = vmatprep.subr.mxu0 0.0
    %531 = vmatpush1.msra.mxu0 0.0
    %532 = vmatprep.subr.mxu0 0.0
    %533 = vmatpush1.msra.mxu0 0.0
    %534 = vmatprep.subr.mxu0 0.0
    %535 = vmatpush1.msra.mxu0 0.0
    %536 = vmatprep.subr.mxu0 0.0
    %537 = vmatpush1.msra.mxu0 0.0
    %538 = vmatprep.subr.mxu0 0.0
    %539 = vmatpush1.msra.mxu0 0.0
    %540 = vmatprep.subr.mxu0 0.0
    %541 = vmatpush1.msra.mxu0 0.0
    %542 = vmatprep.subr.mxu0 0.0
    %543 = vmatpush1.msra.mxu0 0.0
    %544 = vmatprep.subr.mxu0 0.0
    %545 = vmatpush1.msra.mxu0 0.0
    %546 = vmatprep.subr.mxu0 0.0
    %547 = vmatpush1.msra.mxu0 0.0
    %548 = vmatprep.subr.mxu0 0.0
    %549 = vmatpush1.msra.mxu0 0.0
    %550 = vmatprep.subr.mxu0 0.0
    %551 = vmatpush1.msra.mxu0 0.0
    %552 = vmatprep.subr.mxu0 0.0
    %553 = vmatpush1.msra.mxu0 0.0
    %554 = vmatprep.subr.mxu0 0.0
    %555 = vmatpush1.msra.mxu0 0.0
    %556 = vmatprep.mubr.f32.mxu0 0.0
    %557 = vmatmul.mubr.f32.gmra.mrb[0].mxu0 %v318
    %v558 = vpop.f32.mrb[0].mxu0
    %v559 = vadd.f32 %v309, %v558
    %v560 = vpop.f32.mrb[0].mxu0
    %561 = vmatprep.mubr.f32.mxu0 0.0
    %562 = vmatmul.mubr.f32.gmra.mrb[0].mxu0 %v321
    %v563 = vpop.f32.mrb[0].mxu0
    %v564 = vadd.f32 %v314, %v563
    %v565 = vpop.f32.mrb[0].mxu0
    %566 = vdwg.mxu0
    %v567 = vld [vmem:[%s2] sm:$0x1f]
    %v569 = vlaneseq
    %v570 = vshrl.u32 %v569, 7
    %v571 = vsub.s32 0, %v570
    %v572 = vrot.slane %v567, %v571
    %v573 = vlaneseq
    %v574 = vshrl.u32 %v573, 7
    %v575 = vsub.s32 1, %v574
    %v576 = vrot.slane %v567, %v575
    %v577 = vlaneseq
    %v578 = vshrl.u32 %v577, 7
    %v579 = vsub.s32 2, %v578
    %v580 = vrot.slane %v567, %v579
    %v581 = vlaneseq
    %v582 = vshrl.u32 %v581, 7
    %v583 = vsub.s32 3, %v582
    %v584 = vrot.slane %v567, %v583
    %v585 = vlaneseq
    %v586 = vshrl.u32 %v585, 7
    %v587 = vsub.s32 4, %v586
    %v588 = vrot.slane %v567, %v587
    %v594 = vadd.f32 %v405, %v572
    %v595 = vadd.f32 %v407, %v576
    %v596 = vadd.f32 %v482, %v580
    %v597 = vadd.f32 %v484, %v584
    %v598 = vadd.f32 %v559, %v588
    %v599 = vadd.f32 %v411, %v572
    %v600 = vadd.f32 %v413, %v576
    %v601 = vadd.f32 %v488, %v580
    %v602 = vadd.f32 %v490, %v584
    %v603 = vadd.f32 %v564, %v588
    %v604 = vmax.f32 %v594, 0.0
    %v605 = vmax.f32 %v595, 0.0
    %v606 = vmax.f32 %v596, 0.0
    %v607 = vmax.f32 %v597, 0.0
    %v608 = vmax.f32 %v598, 0.0
    %v609 = vmax.f32 %v599, 0.0
    %v610 = vmax.f32 %v600, 0.0
    %v611 = vmax.f32 %v601, 0.0
    %v612 = vmax.f32 %v602, 0.0
    %v613 = vmax.f32 %v603, 0.0
    %v614 = vpack.c.bf16 %v609, %v604
    %v615 = vpack.c.bf16 %v610, %v605
    %v616 = vpack.c.bf16 %v611, %v606
    %v617 = vpack.c.bf16 %v612, %v607
    %v618 = vpack.c.bf16 %v613, %v608
    %v624 = vunpack.c.l.b16 %v614
    %v625 = vunpack.c.l.b16 %v615
    %v626 = vunpack.c.l.b16 %v616
    %v627 = vunpack.c.l.b16 %v617
    %v628 = vunpack.c.l.b16 %v618
    %v629 = vunpack.c.h.b16 %v614
    %v630 = vunpack.c.h.b16 %v615
    %v631 = vunpack.c.h.b16 %v616
    %v632 = vunpack.c.h.b16 %v617
    %v633 = vunpack.c.h.b16 %v618
    %v634 = vpack.c.b16 %v625, %v624
    %v635 = vpack.c.b16 %v627, %v626
    %v636 = vpack.c.b16 %v628, %v628
    %v637 = vpack.c.b16 %v630, %v629
    %v638 = vpack.c.b16 %v632, %v631
    %v639 = vpack.c.b16 %v633, %v633
    %646 = vst [vmem:[#allocation2] sm:$0xff] %v634
    %647 = vst [vmem:[#allocation2 + $0x8] sm:$0xff] %v635
    %648 = vst [vmem:[#allocation2 + $0x10] sm:$0xf] %v636
    %vm649 = vcmask 1042432
    %vm650 = vsmask.f32 2304
    %vm651 = vmand %vm649, %vm650
    %vm652 = vcmask 1046532
    %vm653 = vsmask.f32 6400
    %vm654 = vmand %vm652, %vm653
    %vm655 = vmor %vm654, %vm651
    %v656 = vld [vmem:[#allocation2 + $0x14] sm:$0x77]
    %v657 = vsel %vm655, %v637, %v656
    %658 = vst [vmem:[#allocation2 + $0x14] sm:$0x77] %v657
    %v659 = vld [vmem:[#allocation2 + $0x1c] sm:$0x77]
    %v660 = vsel %vm655, %v638, %v659
    %661 = vst [vmem:[#allocation2 + $0x1c] sm:$0x77] %v660
    %v662 = vld [vmem:[#allocation2 + $0x24] sm:$0x7]
    %v663 = vsel %vm651, %v639, %v662
    %664 = vst [vmem:[#allocation2 + $0x24] sm:$0x7] %v663
    %v665 = vld [vmem:[#allocation2] sm:$0xff]
    %v666 = vld [vmem:[#allocation2 + $0x8] sm:$0xff]
    %v667 = vld [vmem:[#allocation2 + $0x10] sm:$0xf]
    %v668 = vld [vmem:[#allocation2 + $0x14] sm:$0x33]
    %v669 = vld [vmem:[#allocation2 + $0x1c] sm:$0x33]
    %v670 = vld [vmem:[#allocation2 + $0x24] sm:$0x3]
    %v671 = vld [vmem:[%s3] sm:$0xff]
    %v672 = vld [vmem:[%s3 + $0x8] sm:$0xf]
    %v673 = vld [vmem:[%s3 + $0xc] sm:$0xff]
    %v674 = vld [vmem:[%s3 + $0x14] sm:$0xf]
    %v675 = vld [vmem:[%s3 + $0x18] sm:$0xff]
    %v676 = vld [vmem:[%s3 + $0x20] sm:$0xf]
    %v677 = vld [vmem:[%s3 + $0x24] sm:$0xff]
    %v678 = vld [vmem:[%s3 + $0x2c] sm:$0xf]
    %v679 = vld [vmem:[%s3 + $0x30] sm:$0xff]
    %v680 = vld [vmem:[%s3 + $0x38] sm:$0xf]
    %v681 = vld [vmem:[%s3 + $0x3c] sm:$0xff]
    %v682 = vld [vmem:[%s3 + $0x44] sm:$0xf]
    %v683 = vld [vmem:[%s3 + $0x48] sm:$0xff]
    %v684 = vld [vmem:[%s3 + $0x50] sm:$0xf]
    %v685 = vld [vmem:[%s3 + $0x54] sm:$0xff]
    %v686 = vld [vmem:[%s3 + $0x5c] sm:$0xf]
    %v687 = vld [vmem:[%s3 + $0x60] sm:$0xff]
    %v688 = vld [vmem:[%s3 + $0x68] sm:$0xf]
    %v689 = vld [vmem:[%s3 + $0x6c] sm:$0xff]
    %v690 = vld [vmem:[%s3 + $0x74] sm:$0xf]
    %v691 = vld [vmem:[%s3 + $0x78] sm:$0xff]
    %v692 = vld [vmem:[%s3 + $0x80] sm:$0xf]
    %v693 = vld [vmem:[%s3 + $0x84] sm:$0xff]
    %v694 = vld [vmem:[%s3 + $0x8c] sm:$0xf]
    %v695 = vld [vmem:[%s3 + $0x90] sm:$0xff]
    %v696 = vld [vmem:[%s3 + $0x98] sm:$0xf]
    %v697 = vld [vmem:[%s3 + $0x9c] sm:$0xff]
    %v698 = vld [vmem:[%s3 + $0xa4] sm:$0xf]
    %v699 = vld [vmem:[%s3 + $0xa8] sm:$0xff]
    %v700 = vld [vmem:[%s3 + $0xb0] sm:$0xf]
    %v701 = vld [vmem:[%s3 + $0xb4] sm:$0xff]
    %v702 = vld [vmem:[%s3 + $0xbc] sm:$0xf]
    %v703 = vld [vmem:[%s3 + $0xc0] sm:$0xff]
    %v704 = vld [vmem:[%s3 + $0xc8] sm:$0xf]
    %v705 = vld [vmem:[%s3 + $0xcc] sm:$0xff]
    %v706 = vld [vmem:[%s3 + $0xd4] sm:$0xf]
    %v707 = vld [vmem:[%s3 + $0xd8] sm:$0xff]
    %v708 = vld [vmem:[%s3 + $0xe0] sm:$0xf]
    %v709 = vld [vmem:[%s3 + $0xe4] sm:$0xff]
    %v710 = vld [vmem:[%s3 + $0xec] sm:$0xf]
    %v711 = vld [vmem:[%s3 + $0xf0] sm:$0xff]
    %v712 = vld [vmem:[%s3 + $0xf8] sm:$0xf]
    %v713 = vld [vmem:[%s3 + $0xfc] sm:$0xff]
    %v714 = vld [vmem:[%s3 + $0x104] sm:$0xf]
    %v715 = vld [vmem:[%s3 + $0x108] sm:$0xff]
    %v716 = vld [vmem:[%s3 + $0x110] sm:$0xf]
    %v717 = vld [vmem:[%s3 + $0x114] sm:$0xff]
    %v718 = vld [vmem:[%s3 + $0x11c] sm:$0xf]
    %v719 = vld [vmem:[%s3 + $0x120] sm:$0xff]
    %v720 = vld [vmem:[%s3 + $0x128] sm:$0xf]
    %v721 = vld [vmem:[%s3 + $0x12c] sm:$0xff]
    %v722 = vld [vmem:[%s3 + $0x134] sm:$0xf]
    %v723 = vld [vmem:[%s3 + $0x138] sm:$0xff]
    %v724 = vld [vmem:[%s3 + $0x140] sm:$0xf]
    %v725 = vld [vmem:[%s3 + $0x144] sm:$0xff]
    %v726 = vld [vmem:[%s3 + $0x14c] sm:$0xf]
    %v727 = vld [vmem:[%s3 + $0x150] sm:$0xff]
    %v728 = vld [vmem:[%s3 + $0x158] sm:$0xf]
    %v729 = vld [vmem:[%s3 + $0x15c] sm:$0xff]
    %v730 = vld [vmem:[%s3 + $0x164] sm:$0xf]
    %v731 = vld [vmem:[%s3 + $0x168] sm:$0xff]
    %v732 = vld [vmem:[%s3 + $0x170] sm:$0xf]
    %v733 = vld [vmem:[%s3 + $0x174] sm:$0xff]
    %v734 = vld [vmem:[%s3 + $0x17c] sm:$0xf]
    %v735 = vld [vmem:[%s3 + $0x180] sm:$0xff]
    %v736 = vld [vmem:[%s3 + $0x188] sm:$0xf]
    %v737 = vld [vmem:[%s3 + $0x18c] sm:$0xff]
    %v738 = vld [vmem:[%s3 + $0x194] sm:$0xf]
    %v739 = vld [vmem:[%s3 + $0x198] sm:$0xff]
    %v740 = vld [vmem:[%s3 + $0x1a0] sm:$0xf]
    %v741 = vld [vmem:[%s3 + $0x1a4] sm:$0xff]
    %v742 = vld [vmem:[%s3 + $0x1ac] sm:$0xf]
    %v743 = vld [vmem:[%s3 + $0x1b0] sm:$0xff]
    %v744 = vld [vmem:[%s3 + $0x1b8] sm:$0xf]
    %v745 = vld [vmem:[%s3 + $0x1bc] sm:$0xff]
    %v746 = vld [vmem:[%s3 + $0x1c4] sm:$0xf]
    %v747 = vld [vmem:[%s3 + $0x1c8] sm:$0xff]
    %v748 = vld [vmem:[%s3 + $0x1d0] sm:$0xf]
    %v749 = vld [vmem:[%s3 + $0x1d4] sm:$0xff]
    %v750 = vld [vmem:[%s3 + $0x1dc] sm:$0xf]
    %v751 = vld [vmem:[%s3 + $0x1e0] sm:$0xff]
    %v752 = vld [vmem:[%s3 + $0x1e8] sm:$0xf]
    %v753 = vld [vmem:[%s3 + $0x1ec] sm:$0xff]
    %v754 = vld [vmem:[%s3 + $0x1f4] sm:$0xf]
    %v755 = vld [vmem:[%s3 + $0x1f8] sm:$0xff]
    %v756 = vld [vmem:[%s3 + $0x200] sm:$0xf]
    %v757 = vld [vmem:[%s3 + $0x204] sm:$0xff]
    %v758 = vld [vmem:[%s3 + $0x20c] sm:$0xf]
    %v759 = vld [vmem:[%s3 + $0x210] sm:$0xff]
    %v760 = vld [vmem:[%s3 + $0x218] sm:$0xf]
    %v761 = vld [vmem:[%s3 + $0x21c] sm:$0xff]
    %v762 = vld [vmem:[%s3 + $0x224] sm:$0xf]
    %v763 = vld [vmem:[%s3 + $0x228] sm:$0xff]
    %v764 = vld [vmem:[%s3 + $0x230] sm:$0xf]
    %v765 = vld [vmem:[%s3 + $0x234] sm:$0xff]
    %v766 = vld [vmem:[%s3 + $0x23c] sm:$0xf]
    %v767 = vld [vmem:[%s3 + $0x240] sm:$0xff]
    %v768 = vld [vmem:[%s3 + $0x248] sm:$0xf]
    %v769 = vld [vmem:[%s3 + $0x24c] sm:$0xff]
    %v770 = vld [vmem:[%s3 + $0x254] sm:$0xf]
    %v771 = vld [vmem:[%s3 + $0x258] sm:$0xff]
    %v772 = vld [vmem:[%s3 + $0x260] sm:$0xf]
    %v773 = vld [vmem:[%s3 + $0x264] sm:$0xff]
    %v774 = vld [vmem:[%s3 + $0x26c] sm:$0xf]
    %v775 = vld [vmem:[%s3 + $0x270] sm:$0xff]
    %v776 = vld [vmem:[%s3 + $0x278] sm:$0xf]
    %v777 = vld [vmem:[%s3 + $0x27c] sm:$0xff]
    %v778 = vld [vmem:[%s3 + $0x284] sm:$0xf]
    %v779 = vld [vmem:[%s3 + $0x288] sm:$0xff]
    %v780 = vld [vmem:[%s3 + $0x290] sm:$0xf]
    %v781 = vld [vmem:[%s3 + $0x294] sm:$0xff]
    %v782 = vld [vmem:[%s3 + $0x29c] sm:$0xf]
    %v783 = vld [vmem:[%s3 + $0x2a0] sm:$0xff]
    %v784 = vld [vmem:[%s3 + $0x2a8] sm:$0xf]
    %v785 = vld [vmem:[%s3 + $0x2ac] sm:$0xff]
    %v786 = vld [vmem:[%s3 + $0x2b4] sm:$0xf]
    %v787 = vld [vmem:[%s3 + $0x2b8] sm:$0xff]
    %v788 = vld [vmem:[%s3 + $0x2c0] sm:$0xf]
    %v789 = vld [vmem:[%s3 + $0x2c4] sm:$0xff]
    %v790 = vld [vmem:[%s3 + $0x2cc] sm:$0xf]
    %v791 = vld [vmem:[%s3 + $0x2d0] sm:$0xff]
    %v792 = vld [vmem:[%s3 + $0x2d8] sm:$0xf]
    %v793 = vld [vmem:[%s3 + $0x2dc] sm:$0xff]
    %v794 = vld [vmem:[%s3 + $0x2e4] sm:$0xf]
    %v795 = vld [vmem:[%s3 + $0x2e8] sm:$0xff]
    %v796 = vld [vmem:[%s3 + $0x2f0] sm:$0xf]
    %v797 = vld [vmem:[%s3 + $0x2f4] sm:$0xff]
    %v798 = vld [vmem:[%s3 + $0x2fc] sm:$0xf]
    %v799 = vld [vmem:[%s3 + $0x300] sm:$0xff]
    %v800 = vld [vmem:[%s3 + $0x308] sm:$0xf]
    %v801 = vld [vmem:[%s3 + $0x30c] sm:$0xff]
    %v802 = vld [vmem:[%s3 + $0x314] sm:$0xf]
    %v803 = vld [vmem:[%s3 + $0x318] sm:$0xff]
    %v804 = vld [vmem:[%s3 + $0x320] sm:$0xf]
    %v805 = vld [vmem:[%s3 + $0x324] sm:$0xff]
    %v806 = vld [vmem:[%s3 + $0x32c] sm:$0xf]
    %v807 = vld [vmem:[%s3 + $0x330] sm:$0xff]
    %v808 = vld [vmem:[%s3 + $0x338] sm:$0xf]
    %v809 = vld [vmem:[%s3 + $0x33c] sm:$0xff]
    %v810 = vld [vmem:[%s3 + $0x344] sm:$0xf]
    %v811 = vld [vmem:[%s3 + $0x348] sm:$0xff]
    %v812 = vld [vmem:[%s3 + $0x350] sm:$0xf]
    %v813 = vld [vmem:[%s3 + $0x354] sm:$0xff]
    %v814 = vld [vmem:[%s3 + $0x35c] sm:$0xf]
    %v815 = vld [vmem:[%s3 + $0x360] sm:$0xff]
    %v816 = vld [vmem:[%s3 + $0x368] sm:$0xf]
    %v817 = vld [vmem:[%s3 + $0x36c] sm:$0xff]
    %v818 = vld [vmem:[%s3 + $0x374] sm:$0xf]
    %v819 = vld [vmem:[%s3 + $0x378] sm:$0xff]
    %v820 = vld [vmem:[%s3 + $0x380] sm:$0xf]
    %v821 = vld [vmem:[%s3 + $0x384] sm:$0xff]
    %v822 = vld [vmem:[%s3 + $0x38c] sm:$0xf]
    %v823 = vld [vmem:[%s3 + $0x390] sm:$0xff]
    %v824 = vld [vmem:[%s3 + $0x398] sm:$0xf]
    %v825 = vld [vmem:[%s3 + $0x39c] sm:$0xff]
    %v826 = vld [vmem:[%s3 + $0x3a4] sm:$0xf]
    %v827 = vld [vmem:[%s3 + $0x3a8] sm:$0xff]
    %v828 = vld [vmem:[%s3 + $0x3b0] sm:$0xf]
    %v829 = vld [vmem:[%s3 + $0x3b4] sm:$0xff]
    %v830 = vld [vmem:[%s3 + $0x3bc] sm:$0xf]
    %v831 = vld [vmem:[#allocation2 + $0x14] sm:$0x77]
    %v832 = vld [vmem:[#allocation2 + $0x1c] sm:$0x77]
    %v833 = vld [vmem:[#allocation2 + $0x24] sm:$0x7]
    %s834 = scalar_lea.vmem %s3, 960
    %v835 = vld [vmem:[%s834] sm:$0xff]
    %v836 = vld [vmem:[%s834 + $0x8] sm:$0xf]
    %v837 = vld [vmem:[%s834 + $0xc] sm:$0xff]
    %v838 = vld [vmem:[%s834 + $0x14] sm:$0xf]
    %v839 = vld [vmem:[%s834 + $0x18] sm:$0xff]
    %v840 = vld [vmem:[%s834 + $0x20] sm:$0xf]
    %v841 = vld [vmem:[%s834 + $0x24] sm:$0xff]
    %v842 = vld [vmem:[%s834 + $0x2c] sm:$0xf]
    %v843 = vld [vmem:[%s834 + $0x30] sm:$0xff]
    %v844 = vld [vmem:[%s834 + $0x38] sm:$0xf]
    %v845 = vld [vmem:[%s834 + $0x3c] sm:$0xff]
    %v846 = vld [vmem:[%s834 + $0x44] sm:$0xf]
    %v847 = vld [vmem:[%s834 + $0x48] sm:$0xff]
    %v848 = vld [vmem:[%s834 + $0x50] sm:$0xf]
    %v849 = vld [vmem:[%s834 + $0x54] sm:$0xff]
    %v850 = vld [vmem:[%s834 + $0x5c] sm:$0xf]
    %v851 = vld [vmem:[%s834 + $0x60] sm:$0xff]
    %v852 = vld [vmem:[%s834 + $0x68] sm:$0xf]
    %v853 = vld [vmem:[%s834 + $0x6c] sm:$0xff]
    %v854 = vld [vmem:[%s834 + $0x74] sm:$0xf]
    %v855 = vld [vmem:[%s834 + $0x78] sm:$0xff]
    %v856 = vld [vmem:[%s834 + $0x80] sm:$0xf]
    %v857 = vld [vmem:[%s834 + $0x84] sm:$0xff]
    %v858 = vld [vmem:[%s834 + $0x8c] sm:$0xf]
    %v859 = vld [vmem:[%s834 + $0x90] sm:$0xff]
    %v860 = vld [vmem:[%s834 + $0x98] sm:$0xf]
    %v861 = vld [vmem:[%s834 + $0x9c] sm:$0xff]
    %v862 = vld [vmem:[%s834 + $0xa4] sm:$0xf]
    %v863 = vld [vmem:[%s834 + $0xa8] sm:$0xff]
    %v864 = vld [vmem:[%s834 + $0xb0] sm:$0xf]
    %v865 = vld [vmem:[%s834 + $0xb4] sm:$0xff]
    %v866 = vld [vmem:[%s834 + $0xbc] sm:$0xf]
    %v867 = vld [vmem:[%s834 + $0xc0] sm:$0xff]
    %v868 = vld [vmem:[%s834 + $0xc8] sm:$0xf]
    %v869 = vld [vmem:[%s834 + $0xcc] sm:$0xff]
    %v870 = vld [vmem:[%s834 + $0xd4] sm:$0xf]
    %v871 = vld [vmem:[%s834 + $0xd8] sm:$0xff]
    %v872 = vld [vmem:[%s834 + $0xe0] sm:$0xf]
    %v873 = vld [vmem:[%s834 + $0xe4] sm:$0xff]
    %v874 = vld [vmem:[%s834 + $0xec] sm:$0xf]
    %v875 = vld [vmem:[%s834 + $0xf0] sm:$0xff]
    %v876 = vld [vmem:[%s834 + $0xf8] sm:$0xf]
    %v877 = vld [vmem:[%s834 + $0xfc] sm:$0xff]
    %v878 = vld [vmem:[%s834 + $0x104] sm:$0xf]
    %v879 = vld [vmem:[%s834 + $0x108] sm:$0xff]
    %v880 = vld [vmem:[%s834 + $0x110] sm:$0xf]
    %v881 = vld [vmem:[%s834 + $0x114] sm:$0xff]
    %v882 = vld [vmem:[%s834 + $0x11c] sm:$0xf]
    %v883 = vld [vmem:[%s834 + $0x120] sm:$0xff]
    %v884 = vld [vmem:[%s834 + $0x128] sm:$0xf]
    %v885 = vld [vmem:[%s834 + $0x12c] sm:$0xff]
    %v886 = vld [vmem:[%s834 + $0x134] sm:$0xf]
    %v887 = vld [vmem:[%s834 + $0x138] sm:$0xff]
    %v888 = vld [vmem:[%s834 + $0x140] sm:$0xf]
    %v889 = vld [vmem:[%s834 + $0x144] sm:$0xff]
    %v890 = vld [vmem:[%s834 + $0x14c] sm:$0xf]
    %v891 = vld [vmem:[%s834 + $0x150] sm:$0xff]
    %v892 = vld [vmem:[%s834 + $0x158] sm:$0xf]
    %v893 = vld [vmem:[%s834 + $0x15c] sm:$0xff]
    %v894 = vld [vmem:[%s834 + $0x164] sm:$0xf]
    %v895 = vld [vmem:[%s834 + $0x168] sm:$0xff]
    %v896 = vld [vmem:[%s834 + $0x170] sm:$0xf]
    %v897 = vld [vmem:[%s834 + $0x174] sm:$0xff]
    %v898 = vld [vmem:[%s834 + $0x17c] sm:$0xf]
    %v899 = vld [vmem:[%s834 + $0x180] sm:$0xff]
    %v900 = vld [vmem:[%s834 + $0x188] sm:$0xf]
    %v901 = vld [vmem:[%s834 + $0x18c] sm:$0xff]
    %v902 = vld [vmem:[%s834 + $0x194] sm:$0xf]
    %v903 = vld [vmem:[%s834 + $0x198] sm:$0xff]
    %v904 = vld [vmem:[%s834 + $0x1a0] sm:$0xf]
    %v905 = vld [vmem:[%s834 + $0x1a4] sm:$0xff]
    %v906 = vld [vmem:[%s834 + $0x1ac] sm:$0xf]
    %v907 = vld [vmem:[%s834 + $0x1b0] sm:$0xff]
    %v908 = vld [vmem:[%s834 + $0x1b8] sm:$0xf]
    %v909 = vld [vmem:[%s834 + $0x1bc] sm:$0xff]
    %v910 = vld [vmem:[%s834 + $0x1c4] sm:$0xf]
    %v911 = vld [vmem:[%s834 + $0x1c8] sm:$0xff]
    %v912 = vld [vmem:[%s834 + $0x1d0] sm:$0xf]
    %v913 = vld [vmem:[%s834 + $0x1d4] sm:$0xff]
    %v914 = vld [vmem:[%s834 + $0x1dc] sm:$0xf]
    %v915 = vld [vmem:[%s834 + $0x1e0] sm:$0xff]
    %v916 = vld [vmem:[%s834 + $0x1e8] sm:$0xf]
    %v917 = vld [vmem:[%s834 + $0x1ec] sm:$0xff]
    %v918 = vld [vmem:[%s834 + $0x1f4] sm:$0xf]
    %v919 = vld [vmem:[%s834 + $0x1f8] sm:$0xff]
    %v920 = vld [vmem:[%s834 + $0x200] sm:$0xf]
    %v921 = vld [vmem:[%s834 + $0x204] sm:$0xff]
    %v922 = vld [vmem:[%s834 + $0x20c] sm:$0xf]
    %v923 = vld [vmem:[%s834 + $0x210] sm:$0xff]
    %v924 = vld [vmem:[%s834 + $0x218] sm:$0xf]
    %v925 = vld [vmem:[%s834 + $0x21c] sm:$0xff]
    %v926 = vld [vmem:[%s834 + $0x224] sm:$0xf]
    %v927 = vld [vmem:[%s834 + $0x228] sm:$0xff]
    %v928 = vld [vmem:[%s834 + $0x230] sm:$0xf]
    %v929 = vld [vmem:[%s834 + $0x234] sm:$0xff]
    %v930 = vld [vmem:[%s834 + $0x23c] sm:$0xf]
    %v931 = vld [vmem:[%s834 + $0x240] sm:$0xff]
    %v932 = vld [vmem:[%s834 + $0x248] sm:$0xf]
    %v933 = vld [vmem:[%s834 + $0x24c] sm:$0xff]
    %v934 = vld [vmem:[%s834 + $0x254] sm:$0xf]
    %v935 = vld [vmem:[%s834 + $0x258] sm:$0xff]
    %v936 = vld [vmem:[%s834 + $0x260] sm:$0xf]
    %v937 = vld [vmem:[%s834 + $0x264] sm:$0xff]
    %v938 = vld [vmem:[%s834 + $0x26c] sm:$0xf]
    %v939 = vld [vmem:[%s834 + $0x270] sm:$0xff]
    %v940 = vld [vmem:[%s834 + $0x278] sm:$0xf]
    %v941 = vld [vmem:[%s834 + $0x27c] sm:$0xff]
    %v942 = vld [vmem:[%s834 + $0x284] sm:$0xf]
    %v943 = vld [vmem:[%s834 + $0x288] sm:$0xff]
    %v944 = vld [vmem:[%s834 + $0x290] sm:$0xf]
    %v945 = vld [vmem:[%s834 + $0x294] sm:$0xff]
    %v946 = vld [vmem:[%s834 + $0x29c] sm:$0xf]
    %v947 = vld [vmem:[%s834 + $0x2a0] sm:$0xff]
    %v948 = vld [vmem:[%s834 + $0x2a8] sm:$0xf]
    %v949 = vld [vmem:[%s834 + $0x2ac] sm:$0xff]
    %v950 = vld [vmem:[%s834 + $0x2b4] sm:$0xf]
    %v951 = vld [vmem:[%s834 + $0x2b8] sm:$0xff]
    %v952 = vld [vmem:[%s834 + $0x2c0] sm:$0xf]
    %v953 = vld [vmem:[%s834 + $0x2c4] sm:$0xff]
    %v954 = vld [vmem:[%s834 + $0x2cc] sm:$0xf]
    %v955 = vld [vmem:[%s834 + $0x2d0] sm:$0xff]
    %v956 = vld [vmem:[%s834 + $0x2d8] sm:$0xf]
    %v957 = vld [vmem:[%s834 + $0x2dc] sm:$0xff]
    %v958 = vld [vmem:[%s834 + $0x2e4] sm:$0xf]
    %v959 = vld [vmem:[%s834 + $0x2e8] sm:$0xff]
    %v960 = vld [vmem:[%s834 + $0x2f0] sm:$0xf]
    %v961 = vld [vmem:[%s834 + $0x2f4] sm:$0xff]
    %v962 = vld [vmem:[%s834 + $0x2fc] sm:$0xf]
    %v963 = vld [vmem:[%s834 + $0x300] sm:$0xff]
    %v964 = vld [vmem:[%s834 + $0x308] sm:$0xf]
    %v965 = vld [vmem:[%s834 + $0x30c] sm:$0xff]
    %v966 = vld [vmem:[%s834 + $0x314] sm:$0xf]
    %v967 = vld [vmem:[%s834 + $0x318] sm:$0xff]
    %v968 = vld [vmem:[%s834 + $0x320] sm:$0xf]
    %v969 = vld [vmem:[%s834 + $0x324] sm:$0xff]
    %v970 = vld [vmem:[%s834 + $0x32c] sm:$0xf]
    %v971 = vld [vmem:[%s834 + $0x330] sm:$0xff]
    %v972 = vld [vmem:[%s834 + $0x338] sm:$0xf]
    %v973 = vld [vmem:[%s834 + $0x33c] sm:$0xff]
    %v974 = vld [vmem:[%s834 + $0x344] sm:$0xf]
    %v975 = vld [vmem:[%s834 + $0x348] sm:$0xff]
    %v976 = vld [vmem:[%s834 + $0x350] sm:$0xf]
    %v977 = vld [vmem:[%s834 + $0x354] sm:$0xff]
    %v978 = vld [vmem:[%s834 + $0x35c] sm:$0xf]
    %v979 = vld [vmem:[%s834 + $0x360] sm:$0xff]
    %v980 = vld [vmem:[%s834 + $0x368] sm:$0xf]
    %v981 = vld [vmem:[%s834 + $0x36c] sm:$0xff]
    %v982 = vld [vmem:[%s834 + $0x374] sm:$0xf]
    %v983 = vld [vmem:[%s834 + $0x378] sm:$0xff]
    %v984 = vld [vmem:[%s834 + $0x380] sm:$0xf]
    %v985 = vld [vmem:[%s834 + $0x384] sm:$0xff]
    %v986 = vld [vmem:[%s834 + $0x38c] sm:$0xf]
    %v987 = vld [vmem:[%s834 + $0x390] sm:$0xff]
    %v988 = vld [vmem:[%s834 + $0x398] sm:$0xf]
    %v989 = vld [vmem:[%s834 + $0x39c] sm:$0xff]
    %v990 = vld [vmem:[%s834 + $0x3a4] sm:$0xf]
    %v991 = vld [vmem:[%s834 + $0x3a8] sm:$0xff]
    %v992 = vld [vmem:[%s834 + $0x3b0] sm:$0xf]
    %v993 = vld [vmem:[%s834 + $0x3b4] sm:$0xff]
    %v994 = vld [vmem:[%s834 + $0x3bc] sm:$0xf]
    %v1001 = vunpack.c.l.b16 %v665
    %v1002 = vunpack.c.h.b16 %v665
    %v1003 = vunpack.c.l.b16 %v666
    %v1004 = vunpack.c.h.b16 %v666
    %v1005 = vunpack.c.l.b16 %v667
    %v1006 = vunpack.c.l.b16 %v831
    %v1007 = vunpack.c.h.b16 %v831
    %v1008 = vunpack.c.l.b16 %v832
    %v1009 = vunpack.c.h.b16 %v832
    %v1010 = vunpack.c.l.b16 %v833
    %v1011 = vpack.c.b16 %v1006, %v1001
    %v1012 = vpack.c.b16 %v1007, %v1002
    %v1013 = vpack.c.b16 %v1008, %v1003
    %v1014 = vpack.c.b16 %v1009, %v1004
    %v1015 = vpack.c.b16 %v1010, %v1005
    %v1017 = vshrl.u32 %v1011, 16
    %v1019 = vshll.u32 %v1011, 16
    %v1021 = vrot.slane %v1019, 1
    %v1022 = vor.u32 %v1017, %v1021
    %v1024 = vshrl.u32 %v1012, 16
    %v1026 = vshll.u32 %v1012, 16
    %v1028 = vrot.slane %v1026, 1
    %v1029 = vor.u32 %v1024, %v1028
    %v1031 = vshrl.u32 %v1013, 16
    %v1033 = vshll.u32 %v1013, 16
    %v1035 = vrot.slane %v1033, 1
    %v1036 = vor.u32 %v1031, %v1035
    %v1038 = vshrl.u32 %v1014, 16
    %v1040 = vshll.u32 %v1014, 16
    %v1042 = vrot.slane %v1040, 1
    %v1043 = vor.u32 %v1038, %v1042
    %v1045 = vshrl.u32 %v1015, 16
    %v1047 = vshll.u32 %v1015, 16
    %v1049 = vrot.slane %v1047, 1
    %v1050 = vor.u32 %v1045, %v1049
    %v1216 = vunpack.c.l.b16 %v835
    %v1217 = vunpack.c.h.b16 %v835
    %v1218 = vunpack.c.l.b16 %v836
    %v1219 = vunpack.c.l.b16 %v837
    %v1220 = vunpack.c.h.b16 %v837
    %v1221 = vunpack.c.l.b16 %v838
    %v1222 = vunpack.c.l.b16 %v839
    %v1223 = vunpack.c.h.b16 %v839
    %v1224 = vunpack.c.l.b16 %v840
    %v1225 = vunpack.c.l.b16 %v841
    %v1226 = vunpack.c.h.b16 %v841
    %v1227 = vunpack.c.l.b16 %v842
    %v1228 = vunpack.c.l.b16 %v843
    %v1229 = vunpack.c.h.b16 %v843
    %v1230 = vunpack.c.l.b16 %v844
    %v1231 = vunpack.c.l.b16 %v845
    %v1232 = vunpack.c.h.b16 %v845
    %v1233 = vunpack.c.l.b16 %v846
    %v1234 = vunpack.c.l.b16 %v847
    %v1235 = vunpack.c.h.b16 %v847
    %v1236 = vunpack.c.l.b16 %v848
    %v1237 = vunpack.c.l.b16 %v849
    %v1238 = vunpack.c.h.b16 %v849
    %v1239 = vunpack.c.l.b16 %v850
    %v1240 = vunpack.c.l.b16 %v851
    %v1241 = vunpack.c.h.b16 %v851
    %v1242 = vunpack.c.l.b16 %v852
    %v1243 = vunpack.c.l.b16 %v853
    %v1244 = vunpack.c.h.b16 %v853
    %v1245 = vunpack.c.l.b16 %v854
    %v1246 = vunpack.c.l.b16 %v855
    %v1247 = vunpack.c.h.b16 %v855
    %v1248 = vunpack.c.l.b16 %v856
    %v1249 = vunpack.c.l.b16 %v857
    %v1250 = vunpack.c.h.b16 %v857
    %v1251 = vunpack.c.l.b16 %v858
    %v1252 = vunpack.c.l.b16 %v859
    %v1253 = vunpack.c.h.b16 %v859
    %v1254 = vunpack.c.l.b16 %v860
    %v1255 = vunpack.c.l.b16 %v861
    %v1256 = vunpack.c.h.b16 %v861
    %v1257 = vunpack.c.l.b16 %v862
    %v1258 = vunpack.c.l.b16 %v863
    %v1259 = vunpack.c.h.b16 %v863
    %v1260 = vunpack.c.l.b16 %v864
    %v1261 = vunpack.c.l.b16 %v865
    %v1262 = vunpack.c.h.b16 %v865
    %v1263 = vunpack.c.l.b16 %v866
    %v1264 = vunpack.c.l.b16 %v867
    %v1265 = vunpack.c.h.b16 %v867
    %v1266 = vunpack.c.l.b16 %v868
    %v1267 = vunpack.c.l.b16 %v869
    %v1268 = vunpack.c.h.b16 %v869
    %v1269 = vunpack.c.l.b16 %v870
    %v1270 = vunpack.c.l.b16 %v871
    %v1271 = vunpack.c.h.b16 %v871
    %v1272 = vunpack.c.l.b16 %v872
    %v1273 = vunpack.c.l.b16 %v873
    %v1274 = vunpack.c.h.b16 %v873
    %v1275 = vunpack.c.l.b16 %v874
    %v1276 = vunpack.c.l.b16 %v875
    %v1277 = vunpack.c.h.b16 %v875
    %v1278 = vunpack.c.l.b16 %v876
    %v1279 = vunpack.c.l.b16 %v877
    %v1280 = vunpack.c.h.b16 %v877
    %v1281 = vunpack.c.l.b16 %v878
    %v1282 = vunpack.c.l.b16 %v879
    %v1283 = vunpack.c.h.b16 %v879
    %v1284 = vunpack.c.l.b16 %v880
    %v1285 = vunpack.c.l.b16 %v881
    %v1286 = vunpack.c.h.b16 %v881
    %v1287 = vunpack.c.l.b16 %v882
    %v1288 = vunpack.c.l.b16 %v883
    %v1289 = vunpack.c.h.b16 %v883
    %v1290 = vunpack.c.l.b16 %v884
    %v1291 = vunpack.c.l.b16 %v885
    %v1292 = vunpack.c.h.b16 %v885
    %v1293 = vunpack.c.l.b16 %v886
    %v1294 = vunpack.c.l.b16 %v887
    %v1295 = vunpack.c.h.b16 %v887
    %v1296 = vunpack.c.l.b16 %v888
    %v1297 = vunpack.c.l.b16 %v889
    %v1298 = vunpack.c.h.b16 %v889
    %v1299 = vunpack.c.l.b16 %v890
    %v1300 = vunpack.c.l.b16 %v891
    %v1301 = vunpack.c.h.b16 %v891
    %v1302 = vunpack.c.l.b16 %v892
    %v1303 = vunpack.c.l.b16 %v893
    %v1304 = vunpack.c.h.b16 %v893
    %v1305 = vunpack.c.l.b16 %v894
    %v1306 = vunpack.c.l.b16 %v895
    %v1307 = vunpack.c.h.b16 %v895
    %v1308 = vunpack.c.l.b16 %v896
    %v1309 = vunpack.c.l.b16 %v897
    %v1310 = vunpack.c.h.b16 %v897
    %v1311 = vunpack.c.l.b16 %v898
    %v1312 = vunpack.c.l.b16 %v899
    %v1313 = vunpack.c.h.b16 %v899
    %v1314 = vunpack.c.l.b16 %v900
    %v1315 = vunpack.c.l.b16 %v901
    %v1316 = vunpack.c.h.b16 %v901
    %v1317 = vunpack.c.l.b16 %v902
    %v1318 = vunpack.c.l.b16 %v903
    %v1319 = vunpack.c.h.b16 %v903
    %v1320 = vunpack.c.l.b16 %v904
    %v1321 = vunpack.c.l.b16 %v905
    %v1322 = vunpack.c.h.b16 %v905
    %v1323 = vunpack.c.l.b16 %v906
    %v1324 = vunpack.c.l.b16 %v907
    %v1325 = vunpack.c.h.b16 %v907
    %v1326 = vunpack.c.l.b16 %v908
    %v1327 = vunpack.c.l.b16 %v909
    %v1328 = vunpack.c.h.b16 %v909
    %v1329 = vunpack.c.l.b16 %v910
    %v1330 = vunpack.c.l.b16 %v911
    %v1331 = vunpack.c.h.b16 %v911
    %v1332 = vunpack.c.l.b16 %v912
    %v1333 = vunpack.c.l.b16 %v913
    %v1334 = vunpack.c.h.b16 %v913
    %v1335 = vunpack.c.l.b16 %v914
    %v1336 = vunpack.c.l.b16 %v915
    %v1337 = vunpack.c.h.b16 %v915
    %v1338 = vunpack.c.l.b16 %v916
    %v1339 = vunpack.c.l.b16 %v917
    %v1340 = vunpack.c.h.b16 %v917
    %v1341 = vunpack.c.l.b16 %v918
    %v1342 = vunpack.c.l.b16 %v919
    %v1343 = vunpack.c.h.b16 %v919
    %v1344 = vunpack.c.l.b16 %v920
    %v1345 = vunpack.c.l.b16 %v921
    %v1346 = vunpack.c.h.b16 %v921
    %v1347 = vunpack.c.l.b16 %v922
    %v1348 = vunpack.c.l.b16 %v923
    %v1349 = vunpack.c.h.b16 %v923
    %v1350 = vunpack.c.l.b16 %v924
    %v1351 = vunpack.c.l.b16 %v925
    %v1352 = vunpack.c.h.b16 %v925
    %v1353 = vunpack.c.l.b16 %v926
    %v1354 = vunpack.c.l.b16 %v927
    %v1355 = vunpack.c.h.b16 %v927
    %v1356 = vunpack.c.l.b16 %v928
    %v1357 = vunpack.c.l.b16 %v929
    %v1358 = vunpack.c.h.b16 %v929
    %v1359 = vunpack.c.l.b16 %v930
    %v1360 = vunpack.c.l.b16 %v931
    %v1361 = vunpack.c.h.b16 %v931
    %v1362 = vunpack.c.l.b16 %v932
    %v1363 = vunpack.c.l.b16 %v933
    %v1364 = vunpack.c.h.b16 %v933
    %v1365 = vunpack.c.l.b16 %v934
    %v1366 = vunpack.c.l.b16 %v935
    %v1367 = vunpack.c.h.b16 %v935
    %v1368 = vunpack.c.l.b16 %v936
    %v1369 = vunpack.c.l.b16 %v937
    %v1370 = vunpack.c.h.b16 %v937
    %v1371 = vunpack.c.l.b16 %v938
    %v1372 = vunpack.c.l.b16 %v939
    %v1373 = vunpack.c.h.b16 %v939
    %v1374 = vunpack.c.l.b16 %v940
    %v1375 = vunpack.c.l.b16 %v941
    %v1376 = vunpack.c.h.b16 %v941
    %v1377 = vunpack.c.l.b16 %v942
    %v1378 = vunpack.c.l.b16 %v943
    %v1379 = vunpack.c.h.b16 %v943
    %v1380 = vunpack.c.l.b16 %v944
    %v1381 = vunpack.c.l.b16 %v945
    %v1382 = vunpack.c.h.b16 %v945
    %v1383 = vunpack.c.l.b16 %v946
    %v1384 = vunpack.c.l.b16 %v947
    %v1385 = vunpack.c.h.b16 %v947
    %v1386 = vunpack.c.l.b16 %v948
    %v1387 = vunpack.c.l.b16 %v949
    %v1388 = vunpack.c.h.b16 %v949
    %v1389 = vunpack.c.l.b16 %v950
    %v1390 = vunpack.c.l.b16 %v951
    %v1391 = vunpack.c.h.b16 %v951
    %v1392 = vunpack.c.l.b16 %v952
    %v1393 = vunpack.c.l.b16 %v953
    %v1394 = vunpack.c.h.b16 %v953
    %v1395 = vunpack.c.l.b16 %v954
    %v1396 = vunpack.c.l.b16 %v955
    %v1397 = vunpack.c.h.b16 %v955
    %v1398 = vunpack.c.l.b16 %v956
    %v1399 = vunpack.c.l.b16 %v957
    %v1400 = vunpack.c.h.b16 %v957
    %v1401 = vunpack.c.l.b16 %v958
    %v1402 = vunpack.c.l.b16 %v959
    %v1403 = vunpack.c.h.b16 %v959
    %v1404 = vunpack.c.l.b16 %v960
    %v1405 = vunpack.c.l.b16 %v961
    %v1406 = vunpack.c.h.b16 %v961
    %v1407 = vunpack.c.l.b16 %v962
    %v1408 = vunpack.c.l.b16 %v963
    %v1409 = vunpack.c.h.b16 %v963
    %v1410 = vunpack.c.l.b16 %v964
    %v1411 = vunpack.c.l.b16 %v965
    %v1412 = vunpack.c.h.b16 %v965
    %v1413 = vunpack.c.l.b16 %v966
    %v1414 = vunpack.c.l.b16 %v967
    %v1415 = vunpack.c.h.b16 %v967
    %v1416 = vunpack.c.l.b16 %v968
    %v1417 = vunpack.c.l.b16 %v969
    %v1418 = vunpack.c.h.b16 %v969
    %v1419 = vunpack.c.l.b16 %v970
    %v1420 = vunpack.c.l.b16 %v971
    %v1421 = vunpack.c.h.b16 %v971
    %v1422 = vunpack.c.l.b16 %v972
    %v1423 = vunpack.c.l.b16 %v973
    %v1424 = vunpack.c.h.b16 %v973
    %v1425 = vunpack.c.l.b16 %v974
    %v1426 = vunpack.c.l.b16 %v975
    %v1427 = vunpack.c.h.b16 %v975
    %v1428 = vunpack.c.l.b16 %v976
    %v1429 = vunpack.c.l.b16 %v977
    %v1430 = vunpack.c.h.b16 %v977
    %v1431 = vunpack.c.l.b16 %v978
    %v1432 = vunpack.c.l.b16 %v979
    %v1433 = vunpack.c.h.b16 %v979
    %v1434 = vunpack.c.l.b16 %v980
    %v1435 = vunpack.c.l.b16 %v981
    %v1436 = vunpack.c.h.b16 %v981
    %v1437 = vunpack.c.l.b16 %v982
    %v1438 = vunpack.c.l.b16 %v983
    %v1439 = vunpack.c.h.b16 %v983
    %v1440 = vunpack.c.l.b16 %v984
    %v1441 = vunpack.c.l.b16 %v985
    %v1442 = vunpack.c.h.b16 %v985
    %v1443 = vunpack.c.l.b16 %v986
    %v1444 = vunpack.c.l.b16 %v987
    %v1445 = vunpack.c.h.b16 %v987
    %v1446 = vunpack.c.l.b16 %v988
    %v1447 = vunpack.c.l.b16 %v989
    %v1448 = vunpack.c.h.b16 %v989
    %v1449 = vunpack.c.l.b16 %v990
    %v1450 = vunpack.c.l.b16 %v991
    %v1451 = vunpack.c.h.b16 %v991
    %v1452 = vunpack.c.l.b16 %v992
    %v1453 = vunpack.c.l.b16 %v993
    %v1454 = vunpack.c.h.b16 %v993
    %v1455 = vunpack.c.l.b16 %v994
    %v1456 = vpack.c.b16 %v1219, %v1216
    %v1457 = vpack.c.b16 %v1220, %v1217
    %v1458 = vpack.c.b16 %v1221, %v1218
    %v1459 = vpack.c.b16 %v1225, %v1222
    %v1460 = vpack.c.b16 %v1226, %v1223
    %v1461 = vpack.c.b16 %v1227, %v1224
    %v1462 = vpack.c.b16 %v1231, %v1228
    %v1463 = vpack.c.b16 %v1232, %v1229
    %v1464 = vpack.c.b16 %v1233, %v1230
    %v1465 = vpack.c.b16 %v1237, %v1234
    %v1466 = vpack.c.b16 %v1238, %v1235
    %v1467 = vpack.c.b16 %v1239, %v1236
    %v1468 = vpack.c.b16 %v1243, %v1240
    %v1469 = vpack.c.b16 %v1244, %v1241
    %v1470 = vpack.c.b16 %v1245, %v1242
    %v1471 = vpack.c.b16 %v1249, %v1246
    %v1472 = vpack.c.b16 %v1250, %v1247
    %v1473 = vpack.c.b16 %v1251, %v1248
    %v1474 = vpack.c.b16 %v1255, %v1252
    %v1475 = vpack.c.b16 %v1256, %v1253
    %v1476 = vpack.c.b16 %v1257, %v1254
    %v1477 = vpack.c.b16 %v1261, %v1258
    %v1478 = vpack.c.b16 %v1262, %v1259
    %v1479 = vpack.c.b16 %v1263, %v1260
    %v1480 = vpack.c.b16 %v1267, %v1264
    %v1481 = vpack.c.b16 %v1268, %v1265
    %v1482 = vpack.c.b16 %v1269, %v1266
    %v1483 = vpack.c.b16 %v1273, %v1270
    %v1484 = vpack.c.b16 %v1274, %v1271
    %v1485 = vpack.c.b16 %v1275, %v1272
    %v1486 = vpack.c.b16 %v1279, %v1276
    %v1487 = vpack.c.b16 %v1280, %v1277
    %v1488 = vpack.c.b16 %v1281, %v1278
    %v1489 = vpack.c.b16 %v1285, %v1282
    %v1490 = vpack.c.b16 %v1286, %v1283
    %v1491 = vpack.c.b16 %v1287, %v1284
    %v1492 = vpack.c.b16 %v1291, %v1288
    %v1493 = vpack.c.b16 %v1292, %v1289
    %v1494 = vpack.c.b16 %v1293, %v1290
    %v1495 = vpack.c.b16 %v1297, %v1294
    %v1496 = vpack.c.b16 %v1298, %v1295
    %v1497 = vpack.c.b16 %v1299, %v1296
    %v1498 = vpack.c.b16 %v1303, %v1300
    %v1499 = vpack.c.b16 %v1304, %v1301
    %v1500 = vpack.c.b16 %v1305, %v1302
    %v1501 = vpack.c.b16 %v1309, %v1306
    %v1502 = vpack.c.b16 %v1310, %v1307
    %v1503 = vpack.c.b16 %v1311, %v1308
    %v1504 = vpack.c.b16 %v1315, %v1312
    %v1505 = vpack.c.b16 %v1316, %v1313
    %v1506 = vpack.c.b16 %v1317, %v1314
    %v1507 = vpack.c.b16 %v1321, %v1318
    %v1508 = vpack.c.b16 %v1322, %v1319
    %v1509 = vpack.c.b16 %v1323, %v1320
    %v1510 = vpack.c.b16 %v1327, %v1324
    %v1511 = vpack.c.b16 %v1328, %v1325
    %v1512 = vpack.c.b16 %v1329, %v1326
    %v1513 = vpack.c.b16 %v1333, %v1330
    %v1514 = vpack.c.b16 %v1334, %v1331
    %v1515 = vpack.c.b16 %v1335, %v1332
    %v1516 = vpack.c.b16 %v1339, %v1336
    %v1517 = vpack.c.b16 %v1340, %v1337
    %v1518 = vpack.c.b16 %v1341, %v1338
    %v1519 = vpack.c.b16 %v1345, %v1342
    %v1520 = vpack.c.b16 %v1346, %v1343
    %v1521 = vpack.c.b16 %v1347, %v1344
    %v1522 = vpack.c.b16 %v1351, %v1348
    %v1523 = vpack.c.b16 %v1352, %v1349
    %v1524 = vpack.c.b16 %v1353, %v1350
    %v1525 = vpack.c.b16 %v1357, %v1354
    %v1526 = vpack.c.b16 %v1358, %v1355
    %v1527 = vpack.c.b16 %v1359, %v1356
    %v1528 = vpack.c.b16 %v1363, %v1360
    %v1529 = vpack.c.b16 %v1364, %v1361
    %v1530 = vpack.c.b16 %v1365, %v1362
    %v1531 = vpack.c.b16 %v1369, %v1366
    %v1532 = vpack.c.b16 %v1370, %v1367
    %v1533 = vpack.c.b16 %v1371, %v1368
    %v1534 = vpack.c.b16 %v1375, %v1372
    %v1535 = vpack.c.b16 %v1376, %v1373
    %v1536 = vpack.c.b16 %v1377, %v1374
    %v1537 = vpack.c.b16 %v1381, %v1378
    %v1538 = vpack.c.b16 %v1382, %v1379
    %v1539 = vpack.c.b16 %v1383, %v1380
    %v1540 = vpack.c.b16 %v1387, %v1384
    %v1541 = vpack.c.b16 %v1388, %v1385
    %v1542 = vpack.c.b16 %v1389, %v1386
    %v1543 = vpack.c.b16 %v1393, %v1390
    %v1544 = vpack.c.b16 %v1394, %v1391
    %v1545 = vpack.c.b16 %v1395, %v1392
    %v1546 = vpack.c.b16 %v1399, %v1396
    %v1547 = vpack.c.b16 %v1400, %v1397
    %v1548 = vpack.c.b16 %v1401, %v1398
    %v1549 = vpack.c.b16 %v1405, %v1402
    %v1550 = vpack.c.b16 %v1406, %v1403
    %v1551 = vpack.c.b16 %v1407, %v1404
    %v1552 = vpack.c.b16 %v1411, %v1408
    %v1553 = vpack.c.b16 %v1412, %v1409
    %v1554 = vpack.c.b16 %v1413, %v1410
    %v1555 = vpack.c.b16 %v1417, %v1414
    %v1556 = vpack.c.b16 %v1418, %v1415
    %v1557 = vpack.c.b16 %v1419, %v1416
    %v1558 = vpack.c.b16 %v1423, %v1420
    %v1559 = vpack.c.b16 %v1424, %v1421
    %v1560 = vpack.c.b16 %v1425, %v1422
    %v1561 = vpack.c.b16 %v1429, %v1426
    %v1562 = vpack.c.b16 %v1430, %v1427
    %v1563 = vpack.c.b16 %v1431, %v1428
    %v1564 = vpack.c.b16 %v1435, %v1432
    %v1565 = vpack.c.b16 %v1436, %v1433
    %v1566 = vpack.c.b16 %v1437, %v1434
    %v1567 = vpack.c.b16 %v1441, %v1438
    %v1568 = vpack.c.b16 %v1442, %v1439
    %v1569 = vpack.c.b16 %v1443, %v1440
    %v1570 = vpack.c.b16 %v1447, %v1444
    %v1571 = vpack.c.b16 %v1448, %v1445
    %v1572 = vpack.c.b16 %v1449, %v1446
    %v1573 = vpack.c.b16 %v1453, %v1450
    %v1574 = vpack.c.b16 %v1454, %v1451
    %v1575 = vpack.c.b16 %v1455, %v1452
    %1696 = vmatprep.subr.bf16.mxu0 %v1457
    %1697 = vmatpush1.bf16.msra.mxu0 %v1456
    %1698 = vmatprep.subr.bf16.mxu0 %v1460
    %1699 = vmatpush1.bf16.msra.mxu0 %v1459
    %1700 = vmatprep.subr.bf16.mxu0 %v1463
    %1701 = vmatpush1.bf16.msra.mxu0 %v1462
    %1702 = vmatprep.subr.bf16.mxu0 %v1466
    %1703 = vmatpush1.bf16.msra.mxu0 %v1465
    %1704 = vmatprep.subr.bf16.mxu0 %v1469
    %1705 = vmatpush1.bf16.msra.mxu0 %v1468
    %1706 = vmatprep.subr.bf16.mxu0 %v1472
    %1707 = vmatpush1.bf16.msra.mxu0 %v1471
    %1708 = vmatprep.subr.bf16.mxu0 %v1475
    %1709 = vmatpush1.bf16.msra.mxu0 %v1474
    %1710 = vmatprep.subr.bf16.mxu0 %v1478
    %1711 = vmatpush1.bf16.msra.mxu0 %v1477
    %1712 = vmatprep.subr.bf16.mxu0 %v1481
    %1713 = vmatpush1.bf16.msra.mxu0 %v1480
    %1714 = vmatprep.subr.bf16.mxu0 %v1484
    %1715 = vmatpush1.bf16.msra.mxu0 %v1483
    %1716 = vmatprep.subr.bf16.mxu0 %v1487
    %1717 = vmatpush1.bf16.msra.mxu0 %v1486
    %1718 = vmatprep.subr.bf16.mxu0 %v1490
    %1719 = vmatpush1.bf16.msra.mxu0 %v1489
    %1720 = vmatprep.subr.bf16.mxu0 %v1493
    %1721 = vmatpush1.bf16.msra.mxu0 %v1492
    %1722 = vmatprep.subr.bf16.mxu0 %v1496
    %1723 = vmatpush1.bf16.msra.mxu0 %v1495
    %1724 = vmatprep.subr.bf16.mxu0 %v1499
    %1725 = vmatpush1.bf16.msra.mxu0 %v1498
    %1726 = vmatprep.subr.bf16.mxu0 %v1502
    %1727 = vmatpush1.bf16.msra.mxu0 %v1501
    %1728 = vmatprep.mubr.bf16.mxu0 %v1029
    %1729 = vmatmul.mubr.bf16.gmra.mrb[0].mxu0 %v1022
    %v1730 = vpop.f32.mrb[0].mxu0
    %v1731 = vadd.f32 0.0, %v1730
    %v1732 = vpop.f32.mrb[0].mxu0
    %v1733 = vadd.f32 0.0, %v1732
    %v1734 = vpop.f32.mrb[0].mxu0
    %v1735 = vadd.f32 0.0, %v1734
    %v1736 = vpop.f32.mrb[0].mxu0
    %v1737 = vadd.f32 0.0, %v1736
    %1738 = vdwg.mxu0
    %1739 = vmatprep.subr.bf16.mxu0 %v1505
    %1740 = vmatpush1.bf16.msra.mxu0 %v1504
    %1741 = vmatprep.subr.bf16.mxu0 %v1508
    %1742 = vmatpush1.bf16.msra.mxu0 %v1507
    %1743 = vmatprep.subr.bf16.mxu0 %v1511
    %1744 = vmatpush1.bf16.msra.mxu0 %v1510
    %1745 = vmatprep.subr.bf16.mxu0 %v1514
    %1746 = vmatpush1.bf16.msra.mxu0 %v1513
    %1747 = vmatprep.subr.bf16.mxu0 %v1517
    %1748 = vmatpush1.bf16.msra.mxu0 %v1516
    %1749 = vmatprep.subr.bf16.mxu0 %v1520
    %1750 = vmatpush1.bf16.msra.mxu0 %v1519
    %1751 = vmatprep.subr.bf16.mxu0 %v1523
    %1752 = vmatpush1.bf16.msra.mxu0 %v1522
    %1753 = vmatprep.subr.bf16.mxu0 %v1526
    %1754 = vmatpush1.bf16.msra.mxu0 %v1525
    %1755 = vmatprep.subr.bf16.mxu0 %v1529
    %1756 = vmatpush1.bf16.msra.mxu0 %v1528
    %1757 = vmatprep.subr.bf16.mxu0 %v1532
    %1758 = vmatpush1.bf16.msra.mxu0 %v1531
    %1759 = vmatprep.subr.bf16.mxu0 %v1535
    %1760 = vmatpush1.bf16.msra.mxu0 %v1534
    %1761 = vmatprep.subr.bf16.mxu0 %v1538
    %1762 = vmatpush1.bf16.msra.mxu0 %v1537
    %1763 = vmatprep.subr.bf16.mxu0 %v1541
    %1764 = vmatpush1.bf16.msra.mxu0 %v1540
    %1765 = vmatprep.subr.bf16.mxu0 %v1544
    %1766 = vmatpush1.bf16.msra.mxu0 %v1543
    %1767 = vmatprep.subr.bf16.mxu0 %v1547
    %1768 = vmatpush1.bf16.msra.mxu0 %v1546
    %1769 = vmatprep.subr.bf16.mxu0 %v1550
    %1770 = vmatpush1.bf16.msra.mxu0 %v1549
    %1771 = vmatprep.mubr.bf16.mxu0 %v1043
    %1772 = vmatmul.mubr.bf16.gmra.mrb[0].mxu0 %v1036
    %v1773 = vpop.f32.mrb[0].mxu0
    %v1774 = vadd.f32 %v1731, %v1773
    %v1775 = vpop.f32.mrb[0].mxu0
    %v1776 = vadd.f32 %v1733, %v1775
    %v1777 = vpop.f32.mrb[0].mxu0
    %v1778 = vadd.f32 %v1735, %v1777
    %v1779 = vpop.f32.mrb[0].mxu0
    %v1780 = vadd.f32 %v1737, %v1779
    %1781 = vdwg.mxu0
    %1782 = vmatprep.subr.bf16.mxu0 %v1553
    %1783 = vmatpush1.bf16.msra.mxu0 %v1552
    %1784 = vmatprep.subr.bf16.mxu0 %v1556
    %1785 = vmatpush1.bf16.msra.mxu0 %v1555
    %1786 = vmatprep.subr.bf16.mxu0 %v1559
    %1787 = vmatpush1.bf16.msra.mxu0 %v1558
    %1788 = vmatprep.subr.bf16.mxu0 %v1562
    %1789 = vmatpush1.bf16.msra.mxu0 %v1561
    %1790 = vmatprep.subr.bf16.mxu0 %v1565
    %1791 = vmatpush1.bf16.msra.mxu0 %v1564
    %1792 = vmatprep.subr.bf16.mxu0 %v1568
    %1793 = vmatpush1.bf16.msra.mxu0 %v1567
    %1794 = vmatprep.subr.bf16.mxu0 %v1571
    %1795 = vmatpush1.bf16.msra.mxu0 %v1570
    %1796 = vmatprep.subr.bf16.mxu0 %v1574
    %1797 = vmatpush1.bf16.msra.mxu0 %v1573
    %1798 = vmatprep.subr.bf16.mxu0 0
    %1799 = vmatpush1.bf16.msra.mxu0 0
    %1800 = vmatprep.subr.bf16.mxu0 0
    %1801 = vmatpush1.bf16.msra.mxu0 0
    %1802 = vmatprep.subr.bf16.mxu0 0
    %1803 = vmatpush1.bf16.msra.mxu0 0
    %1804 = vmatprep.subr.bf16.mxu0 0
    %1805 = vmatpush1.bf16.msra.mxu0 0
    %1806 = vmatprep.subr.bf16.mxu0 0
    %1807 = vmatpush1.bf16.msra.mxu0 0
    %1808 = vmatprep.subr.bf16.mxu0 0
    %1809 = vmatpush1.bf16.msra.mxu0 0
    %1810 = vmatprep.subr.bf16.mxu0 0
    %1811 = vmatpush1.bf16.msra.mxu0 0
    %1812 = vmatprep.subr.bf16.mxu0 0
    %1813 = vmatpush1.bf16.msra.mxu0 0
    %1814 = vmatprep.mubr.bf16.mxu0 0
    %1815 = vmatmul.mubr.bf16.gmra.mrb[0].mxu0 %v1050
    %v1816 = vpop.f32.mrb[0].mxu0
    %v1817 = vadd.f32 %v1774, %v1816
    %v1818 = vpop.f32.mrb[0].mxu0
    %v1819 = vadd.f32 %v1776, %v1818
    %v1820 = vpop.f32.mrb[0].mxu0
    %v1821 = vadd.f32 %v1778, %v1820
    %v1822 = vpop.f32.mrb[0].mxu0
    %v1823 = vadd.f32 %v1780, %v1822
    %1824 = vdwg.mxu0
    %1825 = vmatprep.subr.bf16.mxu0 0
    %1826 = vmatpush1.bf16.msra.mxu0 %v1458
    %1827 = vmatprep.subr.bf16.mxu0 0
    %1828 = vmatpush1.bf16.msra.mxu0 %v1461
    %1829 = vmatprep.subr.bf16.mxu0 0
    %1830 = vmatpush1.bf16.msra.mxu0 %v1464
    %1831 = vmatprep.subr.bf16.mxu0 0
    %1832 = vmatpush1.bf16.msra.mxu0 %v1467
    %1833 = vmatprep.subr.bf16.mxu0 0
    %1834 = vmatpush1.bf16.msra.mxu0 %v1470
    %1835 = vmatprep.subr.bf16.mxu0 0
    %1836 = vmatpush1.bf16.msra.mxu0 %v1473
    %1837 = vmatprep.subr.bf16.mxu0 0
    %1838 = vmatpush1.bf16.msra.mxu0 %v1476
    %1839 = vmatprep.subr.bf16.mxu0 0
    %1840 = vmatpush1.bf16.msra.mxu0 %v1479
    %1841 = vmatprep.subr.bf16.mxu0 0
    %1842 = vmatpush1.bf16.msra.mxu0 %v1482
    %1843 = vmatprep.subr.bf16.mxu0 0
    %1844 = vmatpush1.bf16.msra.mxu0 %v1485
    %1845 = vmatprep.subr.bf16.mxu0 0
    %1846 = vmatpush1.bf16.msra.mxu0 %v1488
    %1847 = vmatprep.subr.bf16.mxu0 0
    %1848 = vmatpush1.bf16.msra.mxu0 %v1491
    %1849 = vmatprep.subr.bf16.mxu0 0
    %1850 = vmatpush1.bf16.msra.mxu0 %v1494
    %1851 = vmatprep.subr.bf16.mxu0 0
    %1852 = vmatpush1.bf16.msra.mxu0 %v1497
    %1853 = vmatprep.subr.bf16.mxu0 0
    %1854 = vmatpush1.bf16.msra.mxu0 %v1500
    %1855 = vmatprep.subr.bf16.mxu0 0
    %1856 = vmatpush1.bf16.msra.mxu0 %v1503
    %1857 = vmatprep.mubr.bf16.mxu0 %v1029
    %1858 = vmatmul.mubr.bf16.gmra.mrb[0].mxu0 %v1022
    %v1859 = vpop.f32.mrb[0].mxu0
    %v1860 = vadd.f32 0.0, %v1859
    %v1861 = vpop.f32.mrb[0].mxu0
    %v1862 = vpop.f32.mrb[0].mxu0
    %v1863 = vadd.f32 0.0, %v1862
    %v1864 = vpop.f32.mrb[0].mxu0
    %1865 = vdwg.mxu0
    %1866 = vmatprep.subr.bf16.mxu0 0
    %1867 = vmatpush1.bf16.msra.mxu0 %v1506
    %1868 = vmatprep.subr.bf16.mxu0 0
    %1869 = vmatpush1.bf16.msra.mxu0 %v1509
    %1870 = vmatprep.subr.bf16.mxu0 0
    %1871 = vmatpush1.bf16.msra.mxu0 %v1512
    %1872 = vmatprep.subr.bf16.mxu0 0
    %1873 = vmatpush1.bf16.msra.mxu0 %v1515
    %1874 = vmatprep.subr.bf16.mxu0 0
    %1875 = vmatpush1.bf16.msra.mxu0 %v1518
    %1876 = vmatprep.subr.bf16.mxu0 0
    %1877 = vmatpush1.bf16.msra.mxu0 %v1521
    %1878 = vmatprep.subr.bf16.mxu0 0
    %1879 = vmatpush1.bf16.msra.mxu0 %v1524
    %1880 = vmatprep.subr.bf16.mxu0 0
    %1881 = vmatpush1.bf16.msra.mxu0 %v1527
    %1882 = vmatprep.subr.bf16.mxu0 0
    %1883 = vmatpush1.bf16.msra.mxu0 %v1530
    %1884 = vmatprep.subr.bf16.mxu0 0
    %1885 = vmatpush1.bf16.msra.mxu0 %v1533
    %1886 = vmatprep.subr.bf16.mxu0 0
    %1887 = vmatpush1.bf16.msra.mxu0 %v1536
    %1888 = vmatprep.subr.bf16.mxu0 0
    %1889 = vmatpush1.bf16.msra.mxu0 %v1539
    %1890 = vmatprep.subr.bf16.mxu0 0
    %1891 = vmatpush1.bf16.msra.mxu0 %v1542
    %1892 = vmatprep.subr.bf16.mxu0 0
    %1893 = vmatpush1.bf16.msra.mxu0 %v1545
    %1894 = vmatprep.subr.bf16.mxu0 0
    %1895 = vmatpush1.bf16.msra.mxu0 %v1548
    %1896 = vmatprep.subr.bf16.mxu0 0
    %1897 = vmatpush1.bf16.msra.mxu0 %v1551
    %1898 = vmatprep.mubr.bf16.mxu0 %v1043
    %1899 = vmatmul.mubr.bf16.gmra.mrb[0].mxu0 %v1036
    %v1900 = vpop.f32.mrb[0].mxu0
    %v1901 = vadd.f32 %v1860, %v1900
    %v1902 = vpop.f32.mrb[0].mxu0
    %v1903 = vpop.f32.mrb[0].mxu0
    %v1904 = vadd.f32 %v1863, %v1903
    %v1905 = vpop.f32.mrb[0].mxu0
    %1906 = vdwg.mxu0
    %1907 = vmatprep.subr.bf16.mxu0 0
    %1908 = vmatpush1.bf16.msra.mxu0 %v1554
    %1909 = vmatprep.subr.bf16.mxu0 0
    %1910 = vmatpush1.bf16.msra.mxu0 %v1557
    %1911 = vmatprep.subr.bf16.mxu0 0
    %1912 = vmatpush1.bf16.msra.mxu0 %v1560
    %1913 = vmatprep.subr.bf16.mxu0 0
    %1914 = vmatpush1.bf16.msra.mxu0 %v1563
    %1915 = vmatprep.subr.bf16.mxu0 0
    %1916 = vmatpush1.bf16.msra.mxu0 %v1566
    %1917 = vmatprep.subr.bf16.mxu0 0
    %1918 = vmatpush1.bf16.msra.mxu0 %v1569
    %1919 = vmatprep.subr.bf16.mxu0 0
    %1920 = vmatpush1.bf16.msra.mxu0 %v1572
    %1921 = vmatprep.subr.bf16.mxu0 0
    %1922 = vmatpush1.bf16.msra.mxu0 %v1575
    %1923 = vmatprep.subr.bf16.mxu0 0
    %1924 = vmatpush1.bf16.msra.mxu0 0
    %1925 = vmatprep.subr.bf16.mxu0 0
    %1926 = vmatpush1.bf16.msra.mxu0 0
    %1927 = vmatprep.subr.bf16.mxu0 0
    %1928 = vmatpush1.bf16.msra.mxu0 0
    %1929 = vmatprep.subr.bf16.mxu0 0
    %1930 = vmatpush1.bf16.msra.mxu0 0
    %1931 = vmatprep.subr.bf16.mxu0 0
    %1932 = vmatpush1.bf16.msra.mxu0 0
    %1933 = vmatprep.subr.bf16.mxu0 0
    %1934 = vmatpush1.bf16.msra.mxu0 0
    %1935 = vmatprep.subr.bf16.mxu0 0
    %1936 = vmatpush1.bf16.msra.mxu0 0
    %1937 = vmatprep.subr.bf16.mxu0 0
    %1938 = vmatpush1.bf16.msra.mxu0 0
    %1939 = vmatprep.mubr.bf16.mxu0 0
    %1940 = vmatmul.mubr.bf16.gmra.mrb[0].mxu0 %v1050
    %v1941 = vpop.f32.mrb[0].mxu0
    %v1942 = vadd.f32 %v1901, %v1941
    %v1943 = vpop.f32.mrb[0].mxu0
    %v1944 = vpop.f32.mrb[0].mxu0
    %v1945 = vadd.f32 %v1904, %v1944
    %v1946 = vpop.f32.mrb[0].mxu0
    %1947 = vdwg.mxu0
    %v1951 = vunpack.c.l.b16 %v668
    %v1952 = vunpack.c.h.b16 %v668
    %v1953 = vunpack.c.l.b16 %v669
    %v1954 = vunpack.c.h.b16 %v669
    %v1955 = vunpack.c.l.b16 %v670
    %v1956 = vpack.c.b16 %v1951, %v1001
    %v1957 = vpack.c.b16 %v1952, %v1002
    %v1958 = vpack.c.b16 %v1953, %v1003
    %v1959 = vpack.c.b16 %v1954, %v1004
    %v1960 = vpack.c.b16 %v1955, %v1005
    %v2126 = vunpack.c.l.b16 %v671
    %v2127 = vunpack.c.h.b16 %v671
    %v2128 = vunpack.c.l.b16 %v672
    %v2129 = vunpack.c.l.b16 %v673
    %v2130 = vunpack.c.h.b16 %v673
    %v2131 = vunpack.c.l.b16 %v674
    %v2132 = vunpack.c.l.b16 %v675
    %v2133 = vunpack.c.h.b16 %v675
    %v2134 = vunpack.c.l.b16 %v676
    %v2135 = vunpack.c.l.b16 %v677
    %v2136 = vunpack.c.h.b16 %v677
    %v2137 = vunpack.c.l.b16 %v678
    %v2138 = vunpack.c.l.b16 %v679
    %v2139 = vunpack.c.h.b16 %v679
    %v2140 = vunpack.c.l.b16 %v680
    %v2141 = vunpack.c.l.b16 %v681
    %v2142 = vunpack.c.h.b16 %v681
    %v2143 = vunpack.c.l.b16 %v682
    %v2144 = vunpack.c.l.b16 %v683
    %v2145 = vunpack.c.h.b16 %v683
    %v2146 = vunpack.c.l.b16 %v684
    %v2147 = vunpack.c.l.b16 %v685
    %v2148 = vunpack.c.h.b16 %v685
    %v2149 = vunpack.c.l.b16 %v686
    %v2150 = vunpack.c.l.b16 %v687
    %v2151 = vunpack.c.h.b16 %v687
    %v2152 = vunpack.c.l.b16 %v688
    %v2153 = vunpack.c.l.b16 %v689
    %v2154 = vunpack.c.h.b16 %v689
    %v2155 = vunpack.c.l.b16 %v690
    %v2156 = vunpack.c.l.b16 %v691
    %v2157 = vunpack.c.h.b16 %v691
    %v2158 = vunpack.c.l.b16 %v692
    %v2159 = vunpack.c.l.b16 %v693
    %v2160 = vunpack.c.h.b16 %v693
    %v2161 = vunpack.c.l.b16 %v694
    %v2162 = vunpack.c.l.b16 %v695
    %v2163 = vunpack.c.h.b16 %v695
    %v2164 = vunpack.c.l.b16 %v696
    %v2165 = vunpack.c.l.b16 %v697
    %v2166 = vunpack.c.h.b16 %v697
    %v2167 = vunpack.c.l.b16 %v698
    %v2168 = vunpack.c.l.b16 %v699
    %v2169 = vunpack.c.h.b16 %v699
    %v2170 = vunpack.c.l.b16 %v700
    %v2171 = vunpack.c.l.b16 %v701
    %v2172 = vunpack.c.h.b16 %v701
    %v2173 = vunpack.c.l.b16 %v702
    %v2174 = vunpack.c.l.b16 %v703
    %v2175 = vunpack.c.h.b16 %v703
    %v2176 = vunpack.c.l.b16 %v704
    %v2177 = vunpack.c.l.b16 %v705
    %v2178 = vunpack.c.h.b16 %v705
    %v2179 = vunpack.c.l.b16 %v706
    %v2180 = vunpack.c.l.b16 %v707
    %v2181 = vunpack.c.h.b16 %v707
    %v2182 = vunpack.c.l.b16 %v708
    %v2183 = vunpack.c.l.b16 %v709
    %v2184 = vunpack.c.h.b16 %v709
    %v2185 = vunpack.c.l.b16 %v710
    %v2186 = vunpack.c.l.b16 %v711
    %v2187 = vunpack.c.h.b16 %v711
    %v2188 = vunpack.c.l.b16 %v712
    %v2189 = vunpack.c.l.b16 %v713
    %v2190 = vunpack.c.h.b16 %v713
    %v2191 = vunpack.c.l.b16 %v714
    %v2192 = vunpack.c.l.b16 %v715
    %v2193 = vunpack.c.h.b16 %v715
    %v2194 = vunpack.c.l.b16 %v716
    %v2195 = vunpack.c.l.b16 %v717
    %v2196 = vunpack.c.h.b16 %v717
    %v2197 = vunpack.c.l.b16 %v718
    %v2198 = vunpack.c.l.b16 %v719
    %v2199 = vunpack.c.h.b16 %v719
    %v2200 = vunpack.c.l.b16 %v720
    %v2201 = vunpack.c.l.b16 %v721
    %v2202 = vunpack.c.h.b16 %v721
    %v2203 = vunpack.c.l.b16 %v722
    %v2204 = vunpack.c.l.b16 %v723
    %v2205 = vunpack.c.h.b16 %v723
    %v2206 = vunpack.c.l.b16 %v724
    %v2207 = vunpack.c.l.b16 %v725
    %v2208 = vunpack.c.h.b16 %v725
    %v2209 = vunpack.c.l.b16 %v726
    %v2210 = vunpack.c.l.b16 %v727
    %v2211 = vunpack.c.h.b16 %v727
    %v2212 = vunpack.c.l.b16 %v728
    %v2213 = vunpack.c.l.b16 %v729
    %v2214 = vunpack.c.h.b16 %v729
    %v2215 = vunpack.c.l.b16 %v730
    %v2216 = vunpack.c.l.b16 %v731
    %v2217 = vunpack.c.h.b16 %v731
    %v2218 = vunpack.c.l.b16 %v732
    %v2219 = vunpack.c.l.b16 %v733
    %v2220 = vunpack.c.h.b16 %v733
    %v2221 = vunpack.c.l.b16 %v734
    %v2222 = vunpack.c.l.b16 %v735
    %v2223 = vunpack.c.h.b16 %v735
    %v2224 = vunpack.c.l.b16 %v736
    %v2225 = vunpack.c.l.b16 %v737
    %v2226 = vunpack.c.h.b16 %v737
    %v2227 = vunpack.c.l.b16 %v738
    %v2228 = vunpack.c.l.b16 %v739
    %v2229 = vunpack.c.h.b16 %v739
    %v2230 = vunpack.c.l.b16 %v740
    %v2231 = vunpack.c.l.b16 %v741
    %v2232 = vunpack.c.h.b16 %v741
    %v2233 = vunpack.c.l.b16 %v742
    %v2234 = vunpack.c.l.b16 %v743
    %v2235 = vunpack.c.h.b16 %v743
    %v2236 = vunpack.c.l.b16 %v744
    %v2237 = vunpack.c.l.b16 %v745
    %v2238 = vunpack.c.h.b16 %v745
    %v2239 = vunpack.c.l.b16 %v746
    %v2240 = vunpack.c.l.b16 %v747
    %v2241 = vunpack.c.h.b16 %v747
    %v2242 = vunpack.c.l.b16 %v748
    %v2243 = vunpack.c.l.b16 %v749
    %v2244 = vunpack.c.h.b16 %v749
    %v2245 = vunpack.c.l.b16 %v750
    %v2246 = vunpack.c.l.b16 %v751
    %v2247 = vunpack.c.h.b16 %v751
    %v2248 = vunpack.c.l.b16 %v752
    %v2249 = vunpack.c.l.b16 %v753
    %v2250 = vunpack.c.h.b16 %v753
    %v2251 = vunpack.c.l.b16 %v754
    %v2252 = vunpack.c.l.b16 %v755
    %v2253 = vunpack.c.h.b16 %v755
    %v2254 = vunpack.c.l.b16 %v756
    %v2255 = vunpack.c.l.b16 %v757
    %v2256 = vunpack.c.h.b16 %v757
    %v2257 = vunpack.c.l.b16 %v758
    %v2258 = vunpack.c.l.b16 %v759
    %v2259 = vunpack.c.h.b16 %v759
    %v2260 = vunpack.c.l.b16 %v760
    %v2261 = vunpack.c.l.b16 %v761
    %v2262 = vunpack.c.h.b16 %v761
    %v2263 = vunpack.c.l.b16 %v762
    %v2264 = vunpack.c.l.b16 %v763
    %v2265 = vunpack.c.h.b16 %v763
    %v2266 = vunpack.c.l.b16 %v764
    %v2267 = vunpack.c.l.b16 %v765
    %v2268 = vunpack.c.h.b16 %v765
    %v2269 = vunpack.c.l.b16 %v766
    %v2270 = vunpack.c.l.b16 %v767
    %v2271 = vunpack.c.h.b16 %v767
    %v2272 = vunpack.c.l.b16 %v768
    %v2273 = vunpack.c.l.b16 %v769
    %v2274 = vunpack.c.h.b16 %v769
    %v2275 = vunpack.c.l.b16 %v770
    %v2276 = vunpack.c.l.b16 %v771
    %v2277 = vunpack.c.h.b16 %v771
    %v2278 = vunpack.c.l.b16 %v772
    %v2279 = vunpack.c.l.b16 %v773
    %v2280 = vunpack.c.h.b16 %v773
    %v2281 = vunpack.c.l.b16 %v774
    %v2282 = vunpack.c.l.b16 %v775
    %v2283 = vunpack.c.h.b16 %v775
    %v2284 = vunpack.c.l.b16 %v776
    %v2285 = vunpack.c.l.b16 %v777
    %v2286 = vunpack.c.h.b16 %v777
    %v2287 = vunpack.c.l.b16 %v778
    %v2288 = vunpack.c.l.b16 %v779
    %v2289 = vunpack.c.h.b16 %v779
    %v2290 = vunpack.c.l.b16 %v780
    %v2291 = vunpack.c.l.b16 %v781
    %v2292 = vunpack.c.h.b16 %v781
    %v2293 = vunpack.c.l.b16 %v782
    %v2294 = vunpack.c.l.b16 %v783
    %v2295 = vunpack.c.h.b16 %v783
    %v2296 = vunpack.c.l.b16 %v784
    %v2297 = vunpack.c.l.b16 %v785
    %v2298 = vunpack.c.h.b16 %v785
    %v2299 = vunpack.c.l.b16 %v786
    %v2300 = vunpack.c.l.b16 %v787
    %v2301 = vunpack.c.h.b16 %v787
    %v2302 = vunpack.c.l.b16 %v788
    %v2303 = vunpack.c.l.b16 %v789
    %v2304 = vunpack.c.h.b16 %v789
    %v2305 = vunpack.c.l.b16 %v790
    %v2306 = vunpack.c.l.b16 %v791
    %v2307 = vunpack.c.h.b16 %v791
    %v2308 = vunpack.c.l.b16 %v792
    %v2309 = vunpack.c.l.b16 %v793
    %v2310 = vunpack.c.h.b16 %v793
    %v2311 = vunpack.c.l.b16 %v794
    %v2312 = vunpack.c.l.b16 %v795
    %v2313 = vunpack.c.h.b16 %v795
    %v2314 = vunpack.c.l.b16 %v796
    %v2315 = vunpack.c.l.b16 %v797
    %v2316 = vunpack.c.h.b16 %v797
    %v2317 = vunpack.c.l.b16 %v798
    %v2318 = vunpack.c.l.b16 %v799
    %v2319 = vunpack.c.h.b16 %v799
    %v2320 = vunpack.c.l.b16 %v800
    %v2321 = vunpack.c.l.b16 %v801
    %v2322 = vunpack.c.h.b16 %v801
    %v2323 = vunpack.c.l.b16 %v802
    %v2324 = vunpack.c.l.b16 %v803
    %v2325 = vunpack.c.h.b16 %v803
    %v2326 = vunpack.c.l.b16 %v804
    %v2327 = vunpack.c.l.b16 %v805
    %v2328 = vunpack.c.h.b16 %v805
    %v2329 = vunpack.c.l.b16 %v806
    %v2330 = vunpack.c.l.b16 %v807
    %v2331 = vunpack.c.h.b16 %v807
    %v2332 = vunpack.c.l.b16 %v808
    %v2333 = vunpack.c.l.b16 %v809
    %v2334 = vunpack.c.h.b16 %v809
    %v2335 = vunpack.c.l.b16 %v810
    %v2336 = vunpack.c.l.b16 %v811
    %v2337 = vunpack.c.h.b16 %v811
    %v2338 = vunpack.c.l.b16 %v812
    %v2339 = vunpack.c.l.b16 %v813
    %v2340 = vunpack.c.h.b16 %v813
    %v2341 = vunpack.c.l.b16 %v814
    %v2342 = vunpack.c.l.b16 %v815
    %v2343 = vunpack.c.h.b16 %v815
    %v2344 = vunpack.c.l.b16 %v816
    %v2345 = vunpack.c.l.b16 %v817
    %v2346 = vunpack.c.h.b16 %v817
    %v2347 = vunpack.c.l.b16 %v818
    %v2348 = vunpack.c.l.b16 %v819
    %v2349 = vunpack.c.h.b16 %v819
    %v2350 = vunpack.c.l.b16 %v820
    %v2351 = vunpack.c.l.b16 %v821
    %v2352 = vunpack.c.h.b16 %v821
    %v2353 = vunpack.c.l.b16 %v822
    %v2354 = vunpack.c.l.b16 %v823
    %v2355 = vunpack.c.h.b16 %v823
    %v2356 = vunpack.c.l.b16 %v824
    %v2357 = vunpack.c.l.b16 %v825
    %v2358 = vunpack.c.h.b16 %v825
    %v2359 = vunpack.c.l.b16 %v826
    %v2360 = vunpack.c.l.b16 %v827
    %v2361 = vunpack.c.h.b16 %v827
    %v2362 = vunpack.c.l.b16 %v828
    %v2363 = vunpack.c.l.b16 %v829
    %v2364 = vunpack.c.h.b16 %v829
    %v2365 = vunpack.c.l.b16 %v830
    %v2366 = vpack.c.b16 %v2129, %v2126
    %v2367 = vpack.c.b16 %v2130, %v2127
    %v2368 = vpack.c.b16 %v2131, %v2128
    %v2369 = vpack.c.b16 %v2135, %v2132
    %v2370 = vpack.c.b16 %v2136, %v2133
    %v2371 = vpack.c.b16 %v2137, %v2134
    %v2372 = vpack.c.b16 %v2141, %v2138
    %v2373 = vpack.c.b16 %v2142, %v2139
    %v2374 = vpack.c.b16 %v2143, %v2140
    %v2375 = vpack.c.b16 %v2147, %v2144
    %v2376 = vpack.c.b16 %v2148, %v2145
    %v2377 = vpack.c.b16 %v2149, %v2146
    %v2378 = vpack.c.b16 %v2153, %v2150
    %v2379 = vpack.c.b16 %v2154, %v2151
    %v2380 = vpack.c.b16 %v2155, %v2152
    %v2381 = vpack.c.b16 %v2159, %v2156
    %v2382 = vpack.c.b16 %v2160, %v2157
    %v2383 = vpack.c.b16 %v2161, %v2158
    %v2384 = vpack.c.b16 %v2165, %v2162
    %v2385 = vpack.c.b16 %v2166, %v2163
    %v2386 = vpack.c.b16 %v2167, %v2164
    %v2387 = vpack.c.b16 %v2171, %v2168
    %v2388 = vpack.c.b16 %v2172, %v2169
    %v2389 = vpack.c.b16 %v2173, %v2170
    %v2390 = vpack.c.b16 %v2177, %v2174
    %v2391 = vpack.c.b16 %v2178, %v2175
    %v2392 = vpack.c.b16 %v2179, %v2176
    %v2393 = vpack.c.b16 %v2183, %v2180
    %v2394 = vpack.c.b16 %v2184, %v2181
    %v2395 = vpack.c.b16 %v2185, %v2182
    %v2396 = vpack.c.b16 %v2189, %v2186
    %v2397 = vpack.c.b16 %v2190, %v2187
    %v2398 = vpack.c.b16 %v2191, %v2188
    %v2399 = vpack.c.b16 %v2195, %v2192
    %v2400 = vpack.c.b16 %v2196, %v2193
    %v2401 = vpack.c.b16 %v2197, %v2194
    %v2402 = vpack.c.b16 %v2201, %v2198
    %v2403 = vpack.c.b16 %v2202, %v2199
    %v2404 = vpack.c.b16 %v2203, %v2200
    %v2405 = vpack.c.b16 %v2207, %v2204
    %v2406 = vpack.c.b16 %v2208, %v2205
    %v2407 = vpack.c.b16 %v2209, %v2206
    %v2408 = vpack.c.b16 %v2213, %v2210
    %v2409 = vpack.c.b16 %v2214, %v2211
    %v2410 = vpack.c.b16 %v2215, %v2212
    %v2411 = vpack.c.b16 %v2219, %v2216
    %v2412 = vpack.c.b16 %v2220, %v2217
    %v2413 = vpack.c.b16 %v2221, %v2218
    %v2414 = vpack.c.b16 %v2225, %v2222
    %v2415 = vpack.c.b16 %v2226, %v2223
    %v2416 = vpack.c.b16 %v2227, %v2224
    %v2417 = vpack.c.b16 %v2231, %v2228
    %v2418 = vpack.c.b16 %v2232, %v2229
    %v2419 = vpack.c.b16 %v2233, %v2230
    %v2420 = vpack.c.b16 %v2237, %v2234
    %v2421 = vpack.c.b16 %v2238, %v2235
    %v2422 = vpack.c.b16 %v2239, %v2236
    %v2423 = vpack.c.b16 %v2243, %v2240
    %v2424 = vpack.c.b16 %v2244, %v2241
    %v2425 = vpack.c.b16 %v2245, %v2242
    %v2426 = vpack.c.b16 %v2249, %v2246
    %v2427 = vpack.c.b16 %v2250, %v2247
    %v2428 = vpack.c.b16 %v2251, %v2248
    %v2429 = vpack.c.b16 %v2255, %v2252
    %v2430 = vpack.c.b16 %v2256, %v2253
    %v2431 = vpack.c.b16 %v2257, %v2254
    %v2432 = vpack.c.b16 %v2261, %v2258
    %v2433 = vpack.c.b16 %v2262, %v2259
    %v2434 = vpack.c.b16 %v2263, %v2260
    %v2435 = vpack.c.b16 %v2267, %v2264
    %v2436 = vpack.c.b16 %v2268, %v2265
    %v2437 = vpack.c.b16 %v2269, %v2266
    %v2438 = vpack.c.b16 %v2273, %v2270
    %v2439 = vpack.c.b16 %v2274, %v2271
    %v2440 = vpack.c.b16 %v2275, %v2272
    %v2441 = vpack.c.b16 %v2279, %v2276
    %v2442 = vpack.c.b16 %v2280, %v2277
    %v2443 = vpack.c.b16 %v2281, %v2278
    %v2444 = vpack.c.b16 %v2285, %v2282
    %v2445 = vpack.c.b16 %v2286, %v2283
    %v2446 = vpack.c.b16 %v2287, %v2284
    %v2447 = vpack.c.b16 %v2291, %v2288
    %v2448 = vpack.c.b16 %v2292, %v2289
    %v2449 = vpack.c.b16 %v2293, %v2290
    %v2450 = vpack.c.b16 %v2297, %v2294
    %v2451 = vpack.c.b16 %v2298, %v2295
    %v2452 = vpack.c.b16 %v2299, %v2296
    %v2453 = vpack.c.b16 %v2303, %v2300
    %v2454 = vpack.c.b16 %v2304, %v2301
    %v2455 = vpack.c.b16 %v2305, %v2302
    %v2456 = vpack.c.b16 %v2309, %v2306
    %v2457 = vpack.c.b16 %v2310, %v2307
    %v2458 = vpack.c.b16 %v2311, %v2308
    %v2459 = vpack.c.b16 %v2315, %v2312
    %v2460 = vpack.c.b16 %v2316, %v2313
    %v2461 = vpack.c.b16 %v2317, %v2314
    %v2462 = vpack.c.b16 %v2321, %v2318
    %v2463 = vpack.c.b16 %v2322, %v2319
    %v2464 = vpack.c.b16 %v2323, %v2320
    %v2465 = vpack.c.b16 %v2327, %v2324
    %v2466 = vpack.c.b16 %v2328, %v2325
    %v2467 = vpack.c.b16 %v2329, %v2326
    %v2468 = vpack.c.b16 %v2333, %v2330
    %v2469 = vpack.c.b16 %v2334, %v2331
    %v2470 = vpack.c.b16 %v2335, %v2332
    %v2471 = vpack.c.b16 %v2339, %v2336
    %v2472 = vpack.c.b16 %v2340, %v2337
    %v2473 = vpack.c.b16 %v2341, %v2338
    %v2474 = vpack.c.b16 %v2345, %v2342
    %v2475 = vpack.c.b16 %v2346, %v2343
    %v2476 = vpack.c.b16 %v2347, %v2344
    %v2477 = vpack.c.b16 %v2351, %v2348
    %v2478 = vpack.c.b16 %v2352, %v2349
    %v2479 = vpack.c.b16 %v2353, %v2350
    %v2480 = vpack.c.b16 %v2357, %v2354
    %v2481 = vpack.c.b16 %v2358, %v2355
    %v2482 = vpack.c.b16 %v2359, %v2356
    %v2483 = vpack.c.b16 %v2363, %v2360
    %v2484 = vpack.c.b16 %v2364, %v2361
    %v2485 = vpack.c.b16 %v2365, %v2362
    %2606 = vmatprep.subr.bf16.mxu0 %v2367
    %2607 = vmatpush1.bf16.msra.mxu0 %v2366
    %2608 = vmatprep.subr.bf16.mxu0 %v2370
    %2609 = vmatpush1.bf16.msra.mxu0 %v2369
    %2610 = vmatprep.subr.bf16.mxu0 %v2373
    %2611 = vmatpush1.bf16.msra.mxu0 %v2372
    %2612 = vmatprep.subr.bf16.mxu0 %v2376
    %2613 = vmatpush1.bf16.msra.mxu0 %v2375
    %2614 = vmatprep.subr.bf16.mxu0 %v2379
    %2615 = vmatpush1.bf16.msra.mxu0 %v2378
    %2616 = vmatprep.subr.bf16.mxu0 %v2382
    %2617 = vmatpush1.bf16.msra.mxu0 %v2381
    %2618 = vmatprep.subr.bf16.mxu0 %v2385
    %2619 = vmatpush1.bf16.msra.mxu0 %v2384
    %2620 = vmatprep.subr.bf16.mxu0 %v2388
    %2621 = vmatpush1.bf16.msra.mxu0 %v2387
    %2622 = vmatprep.subr.bf16.mxu0 %v2391
    %2623 = vmatpush1.bf16.msra.mxu0 %v2390
    %2624 = vmatprep.subr.bf16.mxu0 %v2394
    %2625 = vmatpush1.bf16.msra.mxu0 %v2393
    %2626 = vmatprep.subr.bf16.mxu0 %v2397
    %2627 = vmatpush1.bf16.msra.mxu0 %v2396
    %2628 = vmatprep.subr.bf16.mxu0 %v2400
    %2629 = vmatpush1.bf16.msra.mxu0 %v2399
    %2630 = vmatprep.subr.bf16.mxu0 %v2403
    %2631 = vmatpush1.bf16.msra.mxu0 %v2402
    %2632 = vmatprep.subr.bf16.mxu0 %v2406
    %2633 = vmatpush1.bf16.msra.mxu0 %v2405
    %2634 = vmatprep.subr.bf16.mxu0 %v2409
    %2635 = vmatpush1.bf16.msra.mxu0 %v2408
    %2636 = vmatprep.subr.bf16.mxu0 %v2412
    %2637 = vmatpush1.bf16.msra.mxu0 %v2411
    %2638 = vmatprep.mubr.bf16.mxu0 %v1957
    %2639 = vmatmul.mubr.bf16.gmra.mrb[0].mxu0 %v1956
    %v2640 = vpop.f32.mrb[0].mxu0
    %v2641 = vadd.f32 %v1817, %v2640
    %v2642 = vpop.f32.mrb[0].mxu0
    %v2643 = vadd.f32 %v1819, %v2642
    %v2644 = vpop.f32.mrb[0].mxu0
    %v2645 = vadd.f32 %v1821, %v2644
    %v2646 = vpop.f32.mrb[0].mxu0
    %v2647 = vadd.f32 %v1823, %v2646
    %2648 = vdwg.mxu0
    %2649 = vmatprep.subr.bf16.mxu0 %v2415
    %2650 = vmatpush1.bf16.msra.mxu0 %v2414
    %2651 = vmatprep.subr.bf16.mxu0 %v2418
    %2652 = vmatpush1.bf16.msra.mxu0 %v2417
    %2653 = vmatprep.subr.bf16.mxu0 %v2421
    %2654 = vmatpush1.bf16.msra.mxu0 %v2420
    %2655 = vmatprep.subr.bf16.mxu0 %v2424
    %2656 = vmatpush1.bf16.msra.mxu0 %v2423
    %2657 = vmatprep.subr.bf16.mxu0 %v2427
    %2658 = vmatpush1.bf16.msra.mxu0 %v2426
    %2659 = vmatprep.subr.bf16.mxu0 %v2430
    %2660 = vmatpush1.bf16.msra.mxu0 %v2429
    %2661 = vmatprep.subr.bf16.mxu0 %v2433
    %2662 = vmatpush1.bf16.msra.mxu0 %v2432
    %2663 = vmatprep.subr.bf16.mxu0 %v2436
    %2664 = vmatpush1.bf16.msra.mxu0 %v2435
    %2665 = vmatprep.subr.bf16.mxu0 %v2439
    %2666 = vmatpush1.bf16.msra.mxu0 %v2438
    %2667 = vmatprep.subr.bf16.mxu0 %v2442
    %2668 = vmatpush1.bf16.msra.mxu0 %v2441
    %2669 = vmatprep.subr.bf16.mxu0 %v2445
    %2670 = vmatpush1.bf16.msra.mxu0 %v2444
    %2671 = vmatprep.subr.bf16.mxu0 %v2448
    %2672 = vmatpush1.bf16.msra.mxu0 %v2447
    %2673 = vmatprep.subr.bf16.mxu0 %v2451
    %2674 = vmatpush1.bf16.msra.mxu0 %v2450
    %2675 = vmatprep.subr.bf16.mxu0 %v2454
    %2676 = vmatpush1.bf16.msra.mxu0 %v2453
    %2677 = vmatprep.subr.bf16.mxu0 %v2457
    %2678 = vmatpush1.bf16.msra.mxu0 %v2456
    %2679 = vmatprep.subr.bf16.mxu0 %v2460
    %2680 = vmatpush1.bf16.msra.mxu0 %v2459
    %2681 = vmatprep.mubr.bf16.mxu0 %v1959
    %2682 = vmatmul.mubr.bf16.gmra.mrb[0].mxu0 %v1958
    %v2683 = vpop.f32.mrb[0].mxu0
    %v2684 = vadd.f32 %v2641, %v2683
    %v2685 = vpop.f32.mrb[0].mxu0
    %v2686 = vadd.f32 %v2643, %v2685
    %v2687 = vpop.f32.mrb[0].mxu0
    %v2688 = vadd.f32 %v2645, %v2687
    %v2689 = vpop.f32.mrb[0].mxu0
    %v2690 = vadd.f32 %v2647, %v2689
    %2691 = vdwg.mxu0
    %2692 = vmatprep.subr.bf16.mxu0 %v2463
    %2693 = vmatpush1.bf16.msra.mxu0 %v2462
    %2694 = vmatprep.subr.bf16.mxu0 %v2466
    %2695 = vmatpush1.bf16.msra.mxu0 %v2465
    %2696 = vmatprep.subr.bf16.mxu0 %v2469
    %2697 = vmatpush1.bf16.msra.mxu0 %v2468
    %2698 = vmatprep.subr.bf16.mxu0 %v2472
    %2699 = vmatpush1.bf16.msra.mxu0 %v2471
    %2700 = vmatprep.subr.bf16.mxu0 %v2475
    %2701 = vmatpush1.bf16.msra.mxu0 %v2474
    %2702 = vmatprep.subr.bf16.mxu0 %v2478
    %2703 = vmatpush1.bf16.msra.mxu0 %v2477
    %2704 = vmatprep.subr.bf16.mxu0 %v2481
    %2705 = vmatpush1.bf16.msra.mxu0 %v2480
    %2706 = vmatprep.subr.bf16.mxu0 %v2484
    %2707 = vmatpush1.bf16.msra.mxu0 %v2483
    %2708 = vmatprep.subr.bf16.mxu0 0
    %2709 = vmatpush1.bf16.msra.mxu0 0
    %2710 = vmatprep.subr.bf16.mxu0 0
    %2711 = vmatpush1.bf16.msra.mxu0 0
    %2712 = vmatprep.subr.bf16.mxu0 0
    %2713 = vmatpush1.bf16.msra.mxu0 0
    %2714 = vmatprep.subr.bf16.mxu0 0
    %2715 = vmatpush1.bf16.msra.mxu0 0
    %2716 = vmatprep.subr.bf16.mxu0 0
    %2717 = vmatpush1.bf16.msra.mxu0 0
    %2718 = vmatprep.subr.bf16.mxu0 0
    %2719 = vmatpush1.bf16.msra.mxu0 0
    %2720 = vmatprep.subr.bf16.mxu0 0
    %2721 = vmatpush1.bf16.msra.mxu0 0
    %2722 = vmatprep.subr.bf16.mxu0 0
    %2723 = vmatpush1.bf16.msra.mxu0 0
    %2724 = vmatprep.mubr.bf16.mxu0 0
    %2725 = vmatmul.mubr.bf16.gmra.mrb[0].mxu0 %v1960
    %v2726 = vpop.f32.mrb[0].mxu0
    %v2727 = vadd.f32 %v2684, %v2726
    %v2728 = vpop.f32.mrb[0].mxu0
    %v2729 = vadd.f32 %v2686, %v2728
    %v2730 = vpop.f32.mrb[0].mxu0
    %v2731 = vadd.f32 %v2688, %v2730
    %v2732 = vpop.f32.mrb[0].mxu0
    %v2733 = vadd.f32 %v2690, %v2732
    %2734 = vdwg.mxu0
    %2735 = vmatprep.subr.bf16.mxu0 0
    %2736 = vmatpush1.bf16.msra.mxu0 %v2368
    %2737 = vmatprep.subr.bf16.mxu0 0
    %2738 = vmatpush1.bf16.msra.mxu0 %v2371
    %2739 = vmatprep.subr.bf16.mxu0 0
    %2740 = vmatpush1.bf16.msra.mxu0 %v2374
    %2741 = vmatprep.subr.bf16.mxu0 0
    %2742 = vmatpush1.bf16.msra.mxu0 %v2377
    %2743 = vmatprep.subr.bf16.mxu0 0
    %2744 = vmatpush1.bf16.msra.mxu0 %v2380
    %2745 = vmatprep.subr.bf16.mxu0 0
    %2746 = vmatpush1.bf16.msra.mxu0 %v2383
    %2747 = vmatprep.subr.bf16.mxu0 0
    %2748 = vmatpush1.bf16.msra.mxu0 %v2386
    %2749 = vmatprep.subr.bf16.mxu0 0
    %2750 = vmatpush1.bf16.msra.mxu0 %v2389
    %2751 = vmatprep.subr.bf16.mxu0 0
    %2752 = vmatpush1.bf16.msra.mxu0 %v2392
    %2753 = vmatprep.subr.bf16.mxu0 0
    %2754 = vmatpush1.bf16.msra.mxu0 %v2395
    %2755 = vmatprep.subr.bf16.mxu0 0
    %2756 = vmatpush1.bf16.msra.mxu0 %v2398
    %2757 = vmatprep.subr.bf16.mxu0 0
    %2758 = vmatpush1.bf16.msra.mxu0 %v2401
    %2759 = vmatprep.subr.bf16.mxu0 0
    %2760 = vmatpush1.bf16.msra.mxu0 %v2404
    %2761 = vmatprep.subr.bf16.mxu0 0
    %2762 = vmatpush1.bf16.msra.mxu0 %v2407
    %2763 = vmatprep.subr.bf16.mxu0 0
    %2764 = vmatpush1.bf16.msra.mxu0 %v2410
    %2765 = vmatprep.subr.bf16.mxu0 0
    %2766 = vmatpush1.bf16.msra.mxu0 %v2413
    %2767 = vmatprep.mubr.bf16.mxu0 %v1957
    %2768 = vmatmul.mubr.bf16.gmra.mrb[0].mxu0 %v1956
    %v2769 = vpop.f32.mrb[0].mxu0
    %v2770 = vadd.f32 %v1942, %v2769
    %v2771 = vpop.f32.mrb[0].mxu0
    %v2772 = vpop.f32.mrb[0].mxu0
    %v2773 = vadd.f32 %v1945, %v2772
    %v2774 = vpop.f32.mrb[0].mxu0
    %2775 = vdwg.mxu0
    %2776 = vmatprep.subr.bf16.mxu0 0
    %2777 = vmatpush1.bf16.msra.mxu0 %v2416
    %2778 = vmatprep.subr.bf16.mxu0 0
    %2779 = vmatpush1.bf16.msra.mxu0 %v2419
    %2780 = vmatprep.subr.bf16.mxu0 0
    %2781 = vmatpush1.bf16.msra.mxu0 %v2422
    %2782 = vmatprep.subr.bf16.mxu0 0
    %2783 = vmatpush1.bf16.msra.mxu0 %v2425
    %2784 = vmatprep.subr.bf16.mxu0 0
    %2785 = vmatpush1.bf16.msra.mxu0 %v2428
    %2786 = vmatprep.subr.bf16.mxu0 0
    %2787 = vmatpush1.bf16.msra.mxu0 %v2431
    %2788 = vmatprep.subr.bf16.mxu0 0
    %2789 = vmatpush1.bf16.msra.mxu0 %v2434
    %2790 = vmatprep.subr.bf16.mxu0 0
    %2791 = vmatpush1.bf16.msra.mxu0 %v2437
    %2792 = vmatprep.subr.bf16.mxu0 0
    %2793 = vmatpush1.bf16.msra.mxu0 %v2440
    %2794 = vmatprep.subr.bf16.mxu0 0
    %2795 = vmatpush1.bf16.msra.mxu0 %v2443
    %2796 = vmatprep.subr.bf16.mxu0 0
    %2797 = vmatpush1.bf16.msra.mxu0 %v2446
    %2798 = vmatprep.subr.bf16.mxu0 0
    %2799 = vmatpush1.bf16.msra.mxu0 %v2449
    %2800 = vmatprep.subr.bf16.mxu0 0
    %2801 = vmatpush1.bf16.msra.mxu0 %v2452
    %2802 = vmatprep.subr.bf16.mxu0 0
    %2803 = vmatpush1.bf16.msra.mxu0 %v2455
    %2804 = vmatprep.subr.bf16.mxu0 0
    %2805 = vmatpush1.bf16.msra.mxu0 %v2458
    %2806 = vmatprep.subr.bf16.mxu0 0
    %2807 = vmatpush1.bf16.msra.mxu0 %v2461
    %2808 = vmatprep.mubr.bf16.mxu0 %v1959
    %2809 = vmatmul.mubr.bf16.gmra.mrb[0].mxu0 %v1958
    %v2810 = vpop.f32.mrb[0].mxu0
    %v2811 = vadd.f32 %v2770, %v2810
    %v2812 = vpop.f32.mrb[0].mxu0
    %v2813 = vpop.f32.mrb[0].mxu0
    %v2814 = vadd.f32 %v2773, %v2813
    %v2815 = vpop.f32.mrb[0].mxu0
    %2816 = vdwg.mxu0
    %2817 = vmatprep.subr.bf16.mxu0 0
    %2818 = vmatpush1.bf16.msra.mxu0 %v2464
    %2819 = vmatprep.subr.bf16.mxu0 0
    %2820 = vmatpush1.bf16.msra.mxu0 %v2467
    %2821 = vmatprep.subr.bf16.mxu0 0
    %2822 = vmatpush1.bf16.msra.mxu0 %v2470
    %2823 = vmatprep.subr.bf16.mxu0 0
    %2824 = vmatpush1.bf16.msra.mxu0 %v2473
    %2825 = vmatprep.subr.bf16.mxu0 0
    %2826 = vmatpush1.bf16.msra.mxu0 %v2476
    %2827 = vmatprep.subr.bf16.mxu0 0
    %2828 = vmatpush1.bf16.msra.mxu0 %v2479
    %2829 = vmatprep.subr.bf16.mxu0 0
    %2830 = vmatpush1.bf16.msra.mxu0 %v2482
    %2831 = vmatprep.subr.bf16.mxu0 0
    %2832 = vmatpush1.bf16.msra.mxu0 %v2485
    %2833 = vmatprep.subr.bf16.mxu0 0
    %2834 = vmatpush1.bf16.msra.mxu0 0
    %2835 = vmatprep.subr.bf16.mxu0 0
    %2836 = vmatpush1.bf16.msra.mxu0 0
    %2837 = vmatprep.subr.bf16.mxu0 0
    %2838 = vmatpush1.bf16.msra.mxu0 0
    %2839 = vmatprep.subr.bf16.mxu0 0
    %2840 = vmatpush1.bf16.msra.mxu0 0
    %2841 = vmatprep.subr.bf16.mxu0 0
    %2842 = vmatpush1.bf16.msra.mxu0 0
    %2843 = vmatprep.subr.bf16.mxu0 0
    %2844 = vmatpush1.bf16.msra.mxu0 0
    %2845 = vmatprep.subr.bf16.mxu0 0
    %2846 = vmatpush1.bf16.msra.mxu0 0
    %2847 = vmatprep.subr.bf16.mxu0 0
    %2848 = vmatpush1.bf16.msra.mxu0 0
    %2849 = vmatprep.mubr.bf16.mxu0 0
    %2850 = vmatmul.mubr.bf16.gmra.mrb[0].mxu0 %v1960
    %v2851 = vpop.f32.mrb[0].mxu0
    %v2852 = vadd.f32 %v2811, %v2851
    %v2853 = vpop.f32.mrb[0].mxu0
    %v2854 = vpop.f32.mrb[0].mxu0
    %v2855 = vadd.f32 %v2814, %v2854
    %v2856 = vpop.f32.mrb[0].mxu0
    %2857 = vdwg.mxu0
    %v2858 = vld [vmem:[%s4] sm:$0x7]
    %v2860 = vlaneseq
    %v2861 = vshrl.u32 %v2860, 7
    %v2862 = vsub.s32 0, %v2861
    %v2863 = vrot.slane %v2858, %v2862
    %v2864 = vlaneseq
    %v2865 = vshrl.u32 %v2864, 7
    %v2866 = vsub.s32 1, %v2865
    %v2867 = vrot.slane %v2858, %v2866
    %v2868 = vlaneseq
    %v2869 = vshrl.u32 %v2868, 7
    %v2870 = vsub.s32 2, %v2869
    %v2871 = vrot.slane %v2858, %v2870
    %v2875 = vadd.f32 %v2727, %v2863
    %v2876 = vadd.f32 %v2729, %v2867
    %v2877 = vadd.f32 %v2852, %v2871
    %v2878 = vadd.f32 %v2731, %v2863
    %v2879 = vadd.f32 %v2733, %v2867
    %v2880 = vadd.f32 %v2855, %v2871
    %v2881 = vmax.f32 %v2875, 0.0
    %v2882 = vmax.f32 %v2876, 0.0
    %v2883 = vmax.f32 %v2877, 0.0
    %v2884 = vmax.f32 %v2878, 0.0
    %v2885 = vmax.f32 %v2879, 0.0
    %v2886 = vmax.f32 %v2880, 0.0
    %v2887 = vpack.c.bf16 %v2884, %v2881
    %v2888 = vpack.c.bf16 %v2885, %v2882
    %v2889 = vpack.c.bf16 %v2886, %v2883
    %v2893 = vunpack.c.l.b16 %v2887
    %v2894 = vunpack.c.l.b16 %v2888
    %v2895 = vunpack.c.l.b16 %v2889
    %v2896 = vunpack.c.h.b16 %v2887
    %v2897 = vunpack.c.h.b16 %v2888
    %v2898 = vunpack.c.h.b16 %v2889
    %v2899 = vpack.c.b16 %v2894, %v2893
    %v2900 = vpack.c.b16 %v2895, %v2895
    %v2901 = vpack.c.b16 %v2897, %v2896
    %v2902 = vpack.c.b16 %v2898, %v2898
    %2907 = vst [vmem:[#allocation3] sm:$0xff] %v2899
    %vm2908 = vcmask 257024
    %2909 = vst.msk [vmem:[#allocation3 + $0x8] sm:$0xf] %vm2908, %v2900
    %2910 = vst [vmem:[#allocation3 + $0xc] sm:$0x33] %v2901
    %vm2911 = vcmask 254976
    %2912 = vst.msk [vmem:[#allocation3 + $0x14] sm:$0x3] %vm2911, %v2902
    %v2913 = vld [vmem:[#allocation3] sm:$0xff]
    %v2914 = vld [vmem:[#allocation3 + $0x8] sm:$0xf]
    %v2915 = vld [vmem:[#allocation3 + $0xc] sm:$0x33]
    %v2916 = vld [vmem:[#allocation3 + $0x14] sm:$0x3]
    %v2917 = vld [vmem:[%s5] sm:$0xf]
    %v2918 = vld [vmem:[%s5 + $0x4] sm:$0xf]
    %v2919 = vld [vmem:[%s5 + $0x8] sm:$0xf]
    %v2920 = vld [vmem:[%s5 + $0xc] sm:$0xf]
    %v2921 = vld [vmem:[%s5 + $0x10] sm:$0xf]
    %v2922 = vld [vmem:[%s5 + $0x14] sm:$0xf]
    %v2923 = vld [vmem:[%s5 + $0x18] sm:$0xf]
    %v2924 = vld [vmem:[%s5 + $0x1c] sm:$0xf]
    %v2925 = vld [vmem:[%s5 + $0x20] sm:$0xf]
    %v2926 = vld [vmem:[%s5 + $0x24] sm:$0xf]
    %v2927 = vld [vmem:[%s5 + $0x28] sm:$0xf]
    %v2928 = vld [vmem:[%s5 + $0x2c] sm:$0xf]
    %v2929 = vld [vmem:[%s5 + $0x30] sm:$0xf]
    %v2930 = vld [vmem:[%s5 + $0x34] sm:$0xf]
    %v2931 = vld [vmem:[%s5 + $0x38] sm:$0xf]
    %v2932 = vld [vmem:[%s5 + $0x3c] sm:$0xf]
    %v2933 = vld [vmem:[%s5 + $0x40] sm:$0xf]
    %v2934 = vld [vmem:[%s5 + $0x44] sm:$0xf]
    %v2935 = vld [vmem:[%s5 + $0x48] sm:$0xf]
    %v2936 = vld [vmem:[%s5 + $0x4c] sm:$0xf]
    %v2937 = vld [vmem:[%s5 + $0x50] sm:$0xf]
    %v2938 = vld [vmem:[%s5 + $0x54] sm:$0xf]
    %v2939 = vld [vmem:[%s5 + $0x58] sm:$0xf]
    %v2940 = vld [vmem:[%s5 + $0x5c] sm:$0xf]
    %v2941 = vld [vmem:[%s5 + $0x60] sm:$0xf]
    %v2942 = vld [vmem:[%s5 + $0x64] sm:$0xf]
    %v2943 = vld [vmem:[%s5 + $0x68] sm:$0xf]
    %v2944 = vld [vmem:[%s5 + $0x6c] sm:$0xf]
    %v2945 = vld [vmem:[%s5 + $0x70] sm:$0xf]
    %v2946 = vld [vmem:[%s5 + $0x74] sm:$0xf]
    %v2947 = vld [vmem:[%s5 + $0x78] sm:$0xf]
    %v2948 = vld [vmem:[%s5 + $0x7c] sm:$0xf]
    %v2949 = vld [vmem:[%s5 + $0x80] sm:$0xf]
    %v2950 = vld [vmem:[%s5 + $0x84] sm:$0xf]
    %v2951 = vld [vmem:[%s5 + $0x88] sm:$0xf]
    %v2952 = vld [vmem:[%s5 + $0x8c] sm:$0xf]
    %s2953 = scalar_lea.vmem %s5, 144
    %v2954 = vld [vmem:[%s2953] sm:$0xf]
    %v2955 = vld [vmem:[%s2953 + $0x4] sm:$0xf]
    %v2956 = vld [vmem:[%s2953 + $0x8] sm:$0xf]
    %v2957 = vld [vmem:[%s2953 + $0xc] sm:$0xf]
    %v2958 = vld [vmem:[%s2953 + $0x10] sm:$0xf]
    %v2959 = vld [vmem:[%s2953 + $0x14] sm:$0xf]
    %v2960 = vld [vmem:[%s2953 + $0x18] sm:$0xf]
    %v2961 = vld [vmem:[%s2953 + $0x1c] sm:$0xf]
    %v2962 = vld [vmem:[%s2953 + $0x20] sm:$0xf]
    %v2963 = vld [vmem:[%s2953 + $0x24] sm:$0xf]
    %v2964 = vld [vmem:[%s2953 + $0x28] sm:$0xf]
    %v2965 = vld [vmem:[%s2953 + $0x2c] sm:$0xf]
    %v2966 = vld [vmem:[%s2953 + $0x30] sm:$0xf]
    %v2967 = vld [vmem:[%s2953 + $0x34] sm:$0xf]
    %v2968 = vld [vmem:[%s2953 + $0x38] sm:$0xf]
    %v2969 = vld [vmem:[%s2953 + $0x3c] sm:$0xf]
    %v2970 = vld [vmem:[%s2953 + $0x40] sm:$0xf]
    %v2971 = vld [vmem:[%s2953 + $0x44] sm:$0xf]
    %v2972 = vld [vmem:[%s2953 + $0x48] sm:$0xf]
    %v2973 = vld [vmem:[%s2953 + $0x4c] sm:$0xf]
    %v2974 = vld [vmem:[%s2953 + $0x50] sm:$0xf]
    %v2975 = vld [vmem:[%s2953 + $0x54] sm:$0xf]
    %v2976 = vld [vmem:[%s2953 + $0x58] sm:$0xf]
    %v2977 = vld [vmem:[%s2953 + $0x5c] sm:$0xf]
    %v2978 = vld [vmem:[%s2953 + $0x60] sm:$0xf]
    %v2979 = vld [vmem:[%s2953 + $0x64] sm:$0xf]
    %v2980 = vld [vmem:[%s2953 + $0x68] sm:$0xf]
    %v2981 = vld [vmem:[%s2953 + $0x6c] sm:$0xf]
    %v2982 = vld [vmem:[%s2953 + $0x70] sm:$0xf]
    %v2983 = vld [vmem:[%s2953 + $0x74] sm:$0xf]
    %v2984 = vld [vmem:[%s2953 + $0x78] sm:$0xf]
    %v2985 = vld [vmem:[%s2953 + $0x7c] sm:$0xf]
    %v2986 = vld [vmem:[%s2953 + $0x80] sm:$0xf]
    %v2987 = vld [vmem:[%s2953 + $0x84] sm:$0xf]
    %v2988 = vld [vmem:[%s2953 + $0x88] sm:$0xf]
    %v2989 = vld [vmem:[%s2953 + $0x8c] sm:$0xf]
    %v2994 = vunpack.c.l.b16 %v2913
    %v2995 = vunpack.c.h.b16 %v2913
    %v2996 = vunpack.c.l.b16 %v2914
    %v2997 = vunpack.c.l.b16 %v2915
    %v2998 = vunpack.c.h.b16 %v2915
    %v2999 = vunpack.c.l.b16 %v2916
    %v3000 = vpack.c.b16 %v2997, %v2994
    %v3001 = vpack.c.b16 %v2998, %v2995
    %v3002 = vpack.c.b16 %v2999, %v2996
    %v3004 = vshrl.u32 %v3000, 16
    %v3006 = vshll.u32 %v3000, 16
    %v3008 = vrot.slane %v3006, 1
    %v3009 = vor.u32 %v3004, %v3008
    %v3011 = vshrl.u32 %v3001, 16
    %v3013 = vshll.u32 %v3001, 16
    %v3015 = vrot.slane %v3013, 1
    %v3016 = vor.u32 %v3011, %v3015
    %v3018 = vshrl.u32 %v3002, 16
    %v3020 = vshll.u32 %v3002, 16
    %v3022 = vrot.slane %v3020, 1
    %v3023 = vor.u32 %v3018, %v3022
    %v3062 = vunpack.c.l.b16 %v2954
    %v3063 = vunpack.c.l.b16 %v2955
    %v3064 = vunpack.c.l.b16 %v2956
    %v3065 = vunpack.c.l.b16 %v2957
    %v3066 = vunpack.c.l.b16 %v2958
    %v3067 = vunpack.c.l.b16 %v2959
    %v3068 = vunpack.c.l.b16 %v2960
    %v3069 = vunpack.c.l.b16 %v2961
    %v3070 = vunpack.c.l.b16 %v2962
    %v3071 = vunpack.c.l.b16 %v2963
    %v3072 = vunpack.c.l.b16 %v2964
    %v3073 = vunpack.c.l.b16 %v2965
    %v3074 = vunpack.c.l.b16 %v2966
    %v3075 = vunpack.c.l.b16 %v2967
    %v3076 = vunpack.c.l.b16 %v2968
    %v3077 = vunpack.c.l.b16 %v2969
    %v3078 = vunpack.c.l.b16 %v2970
    %v3079 = vunpack.c.l.b16 %v2971
    %v3080 = vunpack.c.l.b16 %v2972
    %v3081 = vunpack.c.l.b16 %v2973
    %v3082 = vunpack.c.l.b16 %v2974
    %v3083 = vunpack.c.l.b16 %v2975
    %v3084 = vunpack.c.l.b16 %v2976
    %v3085 = vunpack.c.l.b16 %v2977
    %v3086 = vunpack.c.l.b16 %v2978
    %v3087 = vunpack.c.l.b16 %v2979
    %v3088 = vunpack.c.l.b16 %v2980
    %v3089 = vunpack.c.l.b16 %v2981
    %v3090 = vunpack.c.l.b16 %v2982
    %v3091 = vunpack.c.l.b16 %v2983
    %v3092 = vunpack.c.l.b16 %v2984
    %v3093 = vunpack.c.l.b16 %v2985
    %v3094 = vunpack.c.l.b16 %v2986
    %v3095 = vunpack.c.l.b16 %v2987
    %v3096 = vunpack.c.l.b16 %v2988
    %v3097 = vunpack.c.l.b16 %v2989
    %v3098 = vpack.c.b16 %v3063, %v3062
    %v3099 = vpack.c.b16 %v3065, %v3064
    %v3100 = vpack.c.b16 %v3067, %v3066
    %v3101 = vpack.c.b16 %v3069, %v3068
    %v3102 = vpack.c.b16 %v3071, %v3070
    %v3103 = vpack.c.b16 %v3073, %v3072
    %v3104 = vpack.c.b16 %v3075, %v3074
    %v3105 = vpack.c.b16 %v3077, %v3076
    %v3106 = vpack.c.b16 %v3079, %v3078
    %v3107 = vpack.c.b16 %v3081, %v3080
    %v3108 = vpack.c.b16 %v3083, %v3082
    %v3109 = vpack.c.b16 %v3085, %v3084
    %v3110 = vpack.c.b16 %v3087, %v3086
    %v3111 = vpack.c.b16 %v3089, %v3088
    %v3112 = vpack.c.b16 %v3091, %v3090
    %v3113 = vpack.c.b16 %v3093, %v3092
    %v3114 = vpack.c.b16 %v3095, %v3094
    %v3115 = vpack.c.b16 %v3097, %v3096
    %vm3134 = vcmask 261120
    %v3136 = vsel %vm3134, %v3023, 0
    %3138 = vmatprep.subr.bf16.mxu0 0
    %3139 = vmatpush1.bf16.msra.mxu0 %v3098
    %3140 = vmatprep.subr.bf16.mxu0 0
    %3141 = vmatpush1.bf16.msra.mxu0 %v3099
    %3142 = vmatprep.subr.bf16.mxu0 0
    %3143 = vmatpush1.bf16.msra.mxu0 %v3100
    %3144 = vmatprep.subr.bf16.mxu0 0
    %3145 = vmatpush1.bf16.msra.mxu0 %v3101
    %3146 = vmatprep.subr.bf16.mxu0 0
    %3147 = vmatpush1.bf16.msra.mxu0 %v3102
    %3148 = vmatprep.subr.bf16.mxu0 0
    %3149 = vmatpush1.bf16.msra.mxu0 %v3103
    %3150 = vmatprep.subr.bf16.mxu0 0
    %3151 = vmatpush1.bf16.msra.mxu0 %v3104
    %3152 = vmatprep.subr.bf16.mxu0 0
    %3153 = vmatpush1.bf16.msra.mxu0 %v3105
    %3154 = vmatprep.subr.bf16.mxu0 0
    %3155 = vmatpush1.bf16.msra.mxu0 %v3106
    %3156 = vmatprep.subr.bf16.mxu0 0
    %3157 = vmatpush1.bf16.msra.mxu0 %v3107
    %3158 = vmatprep.subr.bf16.mxu0 0
    %3159 = vmatpush1.bf16.msra.mxu0 %v3108
    %3160 = vmatprep.subr.bf16.mxu0 0
    %3161 = vmatpush1.bf16.msra.mxu0 %v3109
    %3162 = vmatprep.subr.bf16.mxu0 0
    %3163 = vmatpush1.bf16.msra.mxu0 %v3110
    %3164 = vmatprep.subr.bf16.mxu0 0
    %3165 = vmatpush1.bf16.msra.mxu0 %v3111
    %3166 = vmatprep.subr.bf16.mxu0 0
    %3167 = vmatpush1.bf16.msra.mxu0 %v3112
    %3168 = vmatprep.subr.bf16.mxu0 0
    %3169 = vmatpush1.bf16.msra.mxu0 %v3113
    %3170 = vmatprep.mubr.bf16.mxu0 %v3016
    %3171 = vmatmul.mubr.bf16.gmra.mrb[0].mxu0 %v3009
    %v3172 = vpop.f32.mrb[0].mxu0
    %v3173 = vadd.f32 0.0, %v3172
    %v3174 = vpop.f32.mrb[0].mxu0
    %v3175 = vpop.f32.mrb[0].mxu0
    %v3176 = vadd.f32 0.0, %v3175
    %v3177 = vpop.f32.mrb[0].mxu0
    %3178 = vdwg.mxu0
    %3179 = vmatprep.subr.bf16.mxu0 0
    %3180 = vmatpush1.bf16.msra.mxu0 %v3114
    %3181 = vmatprep.subr.bf16.mxu0 0
    %3182 = vmatpush1.bf16.msra.mxu0 %v3115
    %3183 = vmatprep.subr.bf16.mxu0 0
    %3184 = vmatpush1.bf16.msra.mxu0 0
    %3185 = vmatprep.subr.bf16.mxu0 0
    %3186 = vmatpush1.bf16.msra.mxu0 0
    %3187 = vmatprep.subr.bf16.mxu0 0
    %3188 = vmatpush1.bf16.msra.mxu0 0
    %3189 = vmatprep.subr.bf16.mxu0 0
    %3190 = vmatpush1.bf16.msra.mxu0 0
    %3191 = vmatprep.subr.bf16.mxu0 0
    %3192 = vmatpush1.bf16.msra.mxu0 0
    %3193 = vmatprep.subr.bf16.mxu0 0
    %3194 = vmatpush1.bf16.msra.mxu0 0
    %3195 = vmatprep.subr.bf16.mxu0 0
    %3196 = vmatpush1.bf16.msra.mxu0 0
    %3197 = vmatprep.subr.bf16.mxu0 0
    %3198 = vmatpush1.bf16.msra.mxu0 0
    %3199 = vmatprep.subr.bf16.mxu0 0
    %3200 = vmatpush1.bf16.msra.mxu0 0
    %3201 = vmatprep.subr.bf16.mxu0 0
    %3202 = vmatpush1.bf16.msra.mxu0 0
    %3203 = vmatprep.subr.bf16.mxu0 0
    %3204 = vmatpush1.bf16.msra.mxu0 0
    %3205 = vmatprep.subr.bf16.mxu0 0
    %3206 = vmatpush1.bf16.msra.mxu0 0
    %3207 = vmatprep.subr.bf16.mxu0 0
    %3208 = vmatpush1.bf16.msra.mxu0 0
    %3209 = vmatprep.subr.bf16.mxu0 0
    %3210 = vmatpush1.bf16.msra.mxu0 0
    %3211 = vmatprep.mubr.bf16.mxu0 0
    %3212 = vmatmul.mubr.bf16.gmra.mrb[0].mxu0 %v3136
    %v3213 = vpop.f32.mrb[0].mxu0
    %v3214 = vadd.f32 %v3173, %v3213
    %v3215 = vpop.f32.mrb[0].mxu0
    %v3216 = vpop.f32.mrb[0].mxu0
    %v3217 = vadd.f32 %v3176, %v3216
    %v3218 = vpop.f32.mrb[0].mxu0
    %3219 = vdwg.mxu0
    %v3258 = vunpack.c.l.b16 %v2917
    %v3259 = vunpack.c.l.b16 %v2918
    %v3260 = vunpack.c.l.b16 %v2919
    %v3261 = vunpack.c.l.b16 %v2920
    %v3262 = vunpack.c.l.b16 %v2921
    %v3263 = vunpack.c.l.b16 %v2922
    %v3264 = vunpack.c.l.b16 %v2923
    %v3265 = vunpack.c.l.b16 %v2924
    %v3266 = vunpack.c.l.b16 %v2925
    %v3267 = vunpack.c.l.b16 %v2926
    %v3268 = vunpack.c.l.b16 %v2927
    %v3269 = vunpack.c.l.b16 %v2928
    %v3270 = vunpack.c.l.b16 %v2929
    %v3271 = vunpack.c.l.b16 %v2930
    %v3272 = vunpack.c.l.b16 %v2931
    %v3273 = vunpack.c.l.b16 %v2932
    %v3274 = vunpack.c.l.b16 %v2933
    %v3275 = vunpack.c.l.b16 %v2934
    %v3276 = vunpack.c.l.b16 %v2935
    %v3277 = vunpack.c.l.b16 %v2936
    %v3278 = vunpack.c.l.b16 %v2937
    %v3279 = vunpack.c.l.b16 %v2938
    %v3280 = vunpack.c.l.b16 %v2939
    %v3281 = vunpack.c.l.b16 %v2940
    %v3282 = vunpack.c.l.b16 %v2941
    %v3283 = vunpack.c.l.b16 %v2942
    %v3284 = vunpack.c.l.b16 %v2943
    %v3285 = vunpack.c.l.b16 %v2944
    %v3286 = vunpack.c.l.b16 %v2945
    %v3287 = vunpack.c.l.b16 %v2946
    %v3288 = vunpack.c.l.b16 %v2947
    %v3289 = vunpack.c.l.b16 %v2948
    %v3290 = vunpack.c.l.b16 %v2949
    %v3291 = vunpack.c.l.b16 %v2950
    %v3292 = vunpack.c.l.b16 %v2951
    %v3293 = vunpack.c.l.b16 %v2952
    %v3294 = vpack.c.b16 %v3259, %v3258
    %v3295 = vpack.c.b16 %v3261, %v3260
    %v3296 = vpack.c.b16 %v3263, %v3262
    %v3297 = vpack.c.b16 %v3265, %v3264
    %v3298 = vpack.c.b16 %v3267, %v3266
    %v3299 = vpack.c.b16 %v3269, %v3268
    %v3300 = vpack.c.b16 %v3271, %v3270
    %v3301 = vpack.c.b16 %v3273, %v3272
    %v3302 = vpack.c.b16 %v3275, %v3274
    %v3303 = vpack.c.b16 %v3277, %v3276
    %v3304 = vpack.c.b16 %v3279, %v3278
    %v3305 = vpack.c.b16 %v3281, %v3280
    %v3306 = vpack.c.b16 %v3283, %v3282
    %v3307 = vpack.c.b16 %v3285, %v3284
    %v3308 = vpack.c.b16 %v3287, %v3286
    %v3309 = vpack.c.b16 %v3289, %v3288
    %v3310 = vpack.c.b16 %v3291, %v3290
    %v3311 = vpack.c.b16 %v3293, %v3292
    %v3330 = vsel %vm3134, %v3002, 0
    %3332 = vmatprep.subr.bf16.mxu0 0
    %3333 = vmatpush1.bf16.msra.mxu0 %v3294
    %3334 = vmatprep.subr.bf16.mxu0 0
    %3335 = vmatpush1.bf16.msra.mxu0 %v3295
    %3336 = vmatprep.subr.bf16.mxu0 0
    %3337 = vmatpush1.bf16.msra.mxu0 %v3296
    %3338 = vmatprep.subr.bf16.mxu0 0
    %3339 = vmatpush1.bf16.msra.mxu0 %v3297
    %3340 = vmatprep.subr.bf16.mxu0 0
    %3341 = vmatpush1.bf16.msra.mxu0 %v3298
    %3342 = vmatprep.subr.bf16.mxu0 0
    %3343 = vmatpush1.bf16.msra.mxu0 %v3299
    %3344 = vmatprep.subr.bf16.mxu0 0
    %3345 = vmatpush1.bf16.msra.mxu0 %v3300
    %3346 = vmatprep.subr.bf16.mxu0 0
    %3347 = vmatpush1.bf16.msra.mxu0 %v3301
    %3348 = vmatprep.subr.bf16.mxu0 0
    %3349 = vmatpush1.bf16.msra.mxu0 %v3302
    %3350 = vmatprep.subr.bf16.mxu0 0
    %3351 = vmatpush1.bf16.msra.mxu0 %v3303
    %3352 = vmatprep.subr.bf16.mxu0 0
    %3353 = vmatpush1.bf16.msra.mxu0 %v3304
    %3354 = vmatprep.subr.bf16.mxu0 0
    %3355 = vmatpush1.bf16.msra.mxu0 %v3305
    %3356 = vmatprep.subr.bf16.mxu0 0
    %3357 = vmatpush1.bf16.msra.mxu0 %v3306
    %3358 = vmatprep.subr.bf16.mxu0 0
    %3359 = vmatpush1.bf16.msra.mxu0 %v3307
    %3360 = vmatprep.subr.bf16.mxu0 0
    %3361 = vmatpush1.bf16.msra.mxu0 %v3308
    %3362 = vmatprep.subr.bf16.mxu0 0
    %3363 = vmatpush1.bf16.msra.mxu0 %v3309
    %3364 = vmatprep.mubr.bf16.mxu0 %v3001
    %3365 = vmatmul.mubr.bf16.gmra.mrb[0].mxu0 %v3000
    %v3366 = vpop.f32.mrb[0].mxu0
    %v3367 = vadd.f32 %v3214, %v3366
    %v3368 = vpop.f32.mrb[0].mxu0
    %v3369 = vpop.f32.mrb[0].mxu0
    %v3370 = vadd.f32 %v3217, %v3369
    %v3371 = vpop.f32.mrb[0].mxu0
    %3372 = vdwg.mxu0
    %3373 = vmatprep.subr.bf16.mxu0 0
    %3374 = vmatpush1.bf16.msra.mxu0 %v3310
    %3375 = vmatprep.subr.bf16.mxu0 0
    %3376 = vmatpush1.bf16.msra.mxu0 %v3311
    %3377 = vmatprep.subr.bf16.mxu0 0
    %3378 = vmatpush1.bf16.msra.mxu0 0
    %3379 = vmatprep.subr.bf16.mxu0 0
    %3380 = vmatpush1.bf16.msra.mxu0 0
    %3381 = vmatprep.subr.bf16.mxu0 0
    %3382 = vmatpush1.bf16.msra.mxu0 0
    %3383 = vmatprep.subr.bf16.mxu0 0
    %3384 = vmatpush1.bf16.msra.mxu0 0
    %3385 = vmatprep.subr.bf16.mxu0 0
    %3386 = vmatpush1.bf16.msra.mxu0 0
    %3387 = vmatprep.subr.bf16.mxu0 0
    %3388 = vmatpush1.bf16.msra.mxu0 0
    %3389 = vmatprep.subr.bf16.mxu0 0
    %3390 = vmatpush1.bf16.msra.mxu0 0
    %3391 = vmatprep.subr.bf16.mxu0 0
    %3392 = vmatpush1.bf16.msra.mxu0 0
    %3393 = vmatprep.subr.bf16.mxu0 0
    %3394 = vmatpush1.bf16.msra.mxu0 0
    %3395 = vmatprep.subr.bf16.mxu0 0
    %3396 = vmatpush1.bf16.msra.mxu0 0
    %3397 = vmatprep.subr.bf16.mxu0 0
    %3398 = vmatpush1.bf16.msra.mxu0 0
    %3399 = vmatprep.subr.bf16.mxu0 0
    %3400 = vmatpush1.bf16.msra.mxu0 0
    %3401 = vmatprep.subr.bf16.mxu0 0
    %3402 = vmatpush1.bf16.msra.mxu0 0
    %3403 = vmatprep.subr.bf16.mxu0 0
    %3404 = vmatpush1.bf16.msra.mxu0 0
    %3405 = vmatprep.mubr.bf16.mxu0 0
    %3406 = vmatmul.mubr.bf16.gmra.mrb[0].mxu0 %v3330
    %v3407 = vpop.f32.mrb[0].mxu0
    %v3408 = vadd.f32 %v3367, %v3407
    %v3409 = vpop.f32.mrb[0].mxu0
    %v3410 = vpop.f32.mrb[0].mxu0
    %v3411 = vadd.f32 %v3370, %v3410
    %v3412 = vpop.f32.mrb[0].mxu0
    %3413 = vdwg.mxu0
    %v3414 = vld [vmem:[%s6] sm:$0x1]
    %v3416 = vlaneseq
    %v3417 = vshrl.u32 %v3416, 7
    %v3418 = vsub.s32 0, %v3417
    %v3419 = vrot.slane %v3414, %v3418
    %v3421 = vadd.f32 %v3408, %v3419
    %v3422 = vadd.f32 %v3411, %v3419
    %v3423 = vmax.f32 %v3421, 0.0
    %v3424 = vmax.f32 %v3422, 0.0
    %v3425 = vpack.c.bf16 %v3424, %v3423
    %v3427 = vunpack.c.l.b16 %v3425
    %v3428 = vunpack.c.h.b16 %v3425
    %v3429 = vpack.c.b16 %v3427, %v3427
    %v3430 = vpack.c.b16 %v3428, %v3428
    %3433 = vst [vmem:[#allocation4] sm:$0xf] %v3429
    %vm3434 = vcmask 1041408
    %vm3435 = vsmask.f32 1280
    %vm3436 = vmand %vm3434, %vm3435
    %v3437 = vld [vmem:[#allocation4 + $0x4] sm:$0x3]
    %v3438 = vsel %vm3436, %v3430, %v3437
    %3439 = vst [vmem:[#allocation4 + $0x4] sm:$0x3] %v3438
    %v3440 = vld [vmem:[#allocation4] sm:$0xf]
    %v3441 = vld [vmem:[%s7] sm:$0xff]
    %v3442 = vld [vmem:[%s7 + $0x8] sm:$0xff]
    %v3443 = vld [vmem:[%s7 + $0x10] sm:$0xff]
    %v3444 = vld [vmem:[%s7 + $0x18] sm:$0xff]
    %v3445 = vld [vmem:[%s7 + $0x20] sm:$0xff]
    %v3446 = vld [vmem:[%s7 + $0x28] sm:$0xff]
    %v3447 = vld [vmem:[%s7 + $0x30] sm:$0xff]
    %v3448 = vld [vmem:[%s7 + $0x38] sm:$0xff]
    %v3449 = vld [vmem:[%s7 + $0x40] sm:$0xff]
    %v3450 = vld [vmem:[%s7 + $0x48] sm:$0xff]
    %v3451 = vld [vmem:[%s7 + $0x50] sm:$0xff]
    %v3452 = vld [vmem:[%s7 + $0x58] sm:$0xff]
    %v3453 = vld [vmem:[%s7 + $0x60] sm:$0xff]
    %v3454 = vld [vmem:[%s7 + $0x68] sm:$0xff]
    %v3455 = vld [vmem:[%s7 + $0x70] sm:$0xff]
    %v3456 = vld [vmem:[%s7 + $0x78] sm:$0xff]
    %v3457 = vld [vmem:[#allocation4 + $0x4] sm:$0x1]
    %s3458 = scalar_lea.vmem %s7, 128
    %v3459 = vld [vmem:[%s3458] sm:$0xff]
    %v3460 = vld [vmem:[%s3458 + $0x8] sm:$0xff]
    %v3461 = vld [vmem:[%s3458 + $0x10] sm:$0xff]
    %v3462 = vld [vmem:[%s3458 + $0x18] sm:$0xff]
    %v3463 = vld [vmem:[%s3458 + $0x20] sm:$0xff]
    %v3464 = vld [vmem:[%s3458 + $0x28] sm:$0xff]
    %v3465 = vld [vmem:[%s3458 + $0x30] sm:$0xff]
    %v3466 = vld [vmem:[%s3458 + $0x38] sm:$0xff]
    %v3467 = vld [vmem:[%s3458 + $0x40] sm:$0xff]
    %v3468 = vld [vmem:[%s3458 + $0x48] sm:$0xff]
    %v3469 = vld [vmem:[%s3458 + $0x50] sm:$0xff]
    %v3470 = vld [vmem:[%s3458 + $0x58] sm:$0xff]
    %v3471 = vld [vmem:[%s3458 + $0x60] sm:$0xff]
    %v3472 = vld [vmem:[%s3458 + $0x68] sm:$0xff]
    %v3473 = vld [vmem:[%s3458 + $0x70] sm:$0xff]
    %v3474 = vld [vmem:[%s3458 + $0x78] sm:$0xff]
    %v3477 = vunpack.c.l.b16 %v3440
    %v3478 = vunpack.c.l.b16 %v3457
    %v3479 = vpack.c.b16 %v3478, %v3477
    %v3481 = vshrl.u32 %v3479, 16
    %v3483 = vshll.u32 %v3479, 16
    %v3485 = vrot.slane %v3483, 1
    %v3486 = vor.u32 %v3481, %v3485
    %v3504 = vunpack.c.l.b16 %v3459
    %v3505 = vunpack.c.h.b16 %v3459
    %v3506 = vunpack.c.l.b16 %v3460
    %v3507 = vunpack.c.h.b16 %v3460
    %v3508 = vunpack.c.l.b16 %v3461
    %v3509 = vunpack.c.h.b16 %v3461
    %v3510 = vunpack.c.l.b16 %v3462
    %v3511 = vunpack.c.h.b16 %v3462
    %v3512 = vunpack.c.l.b16 %v3463
    %v3513 = vunpack.c.h.b16 %v3463
    %v3514 = vunpack.c.l.b16 %v3464
    %v3515 = vunpack.c.h.b16 %v3464
    %v3516 = vunpack.c.l.b16 %v3465
    %v3517 = vunpack.c.h.b16 %v3465
    %v3518 = vunpack.c.l.b16 %v3466
    %v3519 = vunpack.c.h.b16 %v3466
    %v3520 = vunpack.c.l.b16 %v3467
    %v3521 = vunpack.c.h.b16 %v3467
    %v3522 = vunpack.c.l.b16 %v3468
    %v3523 = vunpack.c.h.b16 %v3468
    %v3524 = vunpack.c.l.b16 %v3469
    %v3525 = vunpack.c.h.b16 %v3469
    %v3526 = vunpack.c.l.b16 %v3470
    %v3527 = vunpack.c.h.b16 %v3470
    %v3528 = vunpack.c.l.b16 %v3471
    %v3529 = vunpack.c.h.b16 %v3471
    %v3530 = vunpack.c.l.b16 %v3472
    %v3531 = vunpack.c.h.b16 %v3472
    %v3532 = vunpack.c.l.b16 %v3473
    %v3533 = vunpack.c.h.b16 %v3473
    %v3534 = vunpack.c.l.b16 %v3474
    %v3535 = vunpack.c.h.b16 %v3474
    %v3536 = vpack.c.b16 %v3506, %v3504
    %v3537 = vpack.c.b16 %v3507, %v3505
    %v3538 = vpack.c.b16 %v3510, %v3508
    %v3539 = vpack.c.b16 %v3511, %v3509
    %v3540 = vpack.c.b16 %v3514, %v3512
    %v3541 = vpack.c.b16 %v3515, %v3513
    %v3542 = vpack.c.b16 %v3518, %v3516
    %v3543 = vpack.c.b16 %v3519, %v3517
    %v3544 = vpack.c.b16 %v3522, %v3520
    %v3545 = vpack.c.b16 %v3523, %v3521
    %v3546 = vpack.c.b16 %v3526, %v3524
    %v3547 = vpack.c.b16 %v3527, %v3525
    %v3548 = vpack.c.b16 %v3530, %v3528
    %v3549 = vpack.c.b16 %v3531, %v3529
    %v3550 = vpack.c.b16 %v3534, %v3532
    %v3551 = vpack.c.b16 %v3535, %v3533
    %3568 = vmatprep.subr.bf16.mxu0 %v3537
    %3569 = vmatpush1.bf16.msra.mxu0 %v3536
    %3570 = vmatprep.subr.bf16.mxu0 %v3539
    %3571 = vmatpush1.bf16.msra.mxu0 %v3538
    %3572 = vmatprep.subr.bf16.mxu0 %v3541
    %3573 = vmatpush1.bf16.msra.mxu0 %v3540
    %3574 = vmatprep.subr.bf16.mxu0 %v3543
    %3575 = vmatpush1.bf16.msra.mxu0 %v3542
    %3576 = vmatprep.subr.bf16.mxu0 %v3545
    %3577 = vmatpush1.bf16.msra.mxu0 %v3544
    %3578 = vmatprep.subr.bf16.mxu0 %v3547
    %3579 = vmatpush1.bf16.msra.mxu0 %v3546
    %3580 = vmatprep.subr.bf16.mxu0 %v3549
    %3581 = vmatpush1.bf16.msra.mxu0 %v3548
    %3582 = vmatprep.subr.bf16.mxu0 %v3551
    %3583 = vmatpush1.bf16.msra.mxu0 %v3550
    %3584 = vmatprep.subr.bf16.mxu0 0
    %3585 = vmatpush1.bf16.msra.mxu0 0
    %3586 = vmatprep.subr.bf16.mxu0 0
    %3587 = vmatpush1.bf16.msra.mxu0 0
    %3588 = vmatprep.subr.bf16.mxu0 0
    %3589 = vmatpush1.bf16.msra.mxu0 0
    %3590 = vmatprep.subr.bf16.mxu0 0
    %3591 = vmatpush1.bf16.msra.mxu0 0
    %3592 = vmatprep.subr.bf16.mxu0 0
    %3593 = vmatpush1.bf16.msra.mxu0 0
    %3594 = vmatprep.subr.bf16.mxu0 0
    %3595 = vmatpush1.bf16.msra.mxu0 0
    %3596 = vmatprep.subr.bf16.mxu0 0
    %3597 = vmatpush1.bf16.msra.mxu0 0
    %3598 = vmatprep.subr.bf16.mxu0 0
    %3599 = vmatpush1.bf16.msra.mxu0 0
    %3600 = vmatprep.mubr.bf16.mxu0 0
    %3601 = vmatmul.mubr.bf16.gmra.mrb[0].mxu0 %v3486
    %v3602 = vpop.f32.mrb[0].mxu0
    %v3603 = vadd.f32 0.0, %v3602
    %v3604 = vpop.f32.mrb[0].mxu0
    %v3605 = vadd.f32 0.0, %v3604
    %v3606 = vpop.f32.mrb[0].mxu0
    %v3607 = vpop.f32.mrb[0].mxu0
    %3608 = vdwg.mxu0
    %v3625 = vunpack.c.l.b16 %v3441
    %v3626 = vunpack.c.h.b16 %v3441
    %v3627 = vunpack.c.l.b16 %v3442
    %v3628 = vunpack.c.h.b16 %v3442
    %v3629 = vunpack.c.l.b16 %v3443
    %v3630 = vunpack.c.h.b16 %v3443
    %v3631 = vunpack.c.l.b16 %v3444
    %v3632 = vunpack.c.h.b16 %v3444
    %v3633 = vunpack.c.l.b16 %v3445
    %v3634 = vunpack.c.h.b16 %v3445
    %v3635 = vunpack.c.l.b16 %v3446
    %v3636 = vunpack.c.h.b16 %v3446
    %v3637 = vunpack.c.l.b16 %v3447
    %v3638 = vunpack.c.h.b16 %v3447
    %v3639 = vunpack.c.l.b16 %v3448
    %v3640 = vunpack.c.h.b16 %v3448
    %v3641 = vunpack.c.l.b16 %v3449
    %v3642 = vunpack.c.h.b16 %v3449
    %v3643 = vunpack.c.l.b16 %v3450
    %v3644 = vunpack.c.h.b16 %v3450
    %v3645 = vunpack.c.l.b16 %v3451
    %v3646 = vunpack.c.h.b16 %v3451
    %v3647 = vunpack.c.l.b16 %v3452
    %v3648 = vunpack.c.h.b16 %v3452
    %v3649 = vunpack.c.l.b16 %v3453
    %v3650 = vunpack.c.h.b16 %v3453
    %v3651 = vunpack.c.l.b16 %v3454
    %v3652 = vunpack.c.h.b16 %v3454
    %v3653 = vunpack.c.l.b16 %v3455
    %v3654 = vunpack.c.h.b16 %v3455
    %v3655 = vunpack.c.l.b16 %v3456
    %v3656 = vunpack.c.h.b16 %v3456
    %v3657 = vpack.c.b16 %v3627, %v3625
    %v3658 = vpack.c.b16 %v3628, %v3626
    %v3659 = vpack.c.b16 %v3631, %v3629
    %v3660 = vpack.c.b16 %v3632, %v3630
    %v3661 = vpack.c.b16 %v3635, %v3633
    %v3662 = vpack.c.b16 %v3636, %v3634
    %v3663 = vpack.c.b16 %v3639, %v3637
    %v3664 = vpack.c.b16 %v3640, %v3638
    %v3665 = vpack.c.b16 %v3643, %v3641
    %v3666 = vpack.c.b16 %v3644, %v3642
    %v3667 = vpack.c.b16 %v3647, %v3645
    %v3668 = vpack.c.b16 %v3648, %v3646
    %v3669 = vpack.c.b16 %v3651, %v3649
    %v3670 = vpack.c.b16 %v3652, %v3650
    %v3671 = vpack.c.b16 %v3655, %v3653
    %v3672 = vpack.c.b16 %v3656, %v3654
    %3689 = vmatprep.subr.bf16.mxu0 %v3658
    %3690 = vmatpush1.bf16.msra.mxu0 %v3657
    %3691 = vmatprep.subr.bf16.mxu0 %v3660
    %3692 = vmatpush1.bf16.msra.mxu0 %v3659
    %3693 = vmatprep.subr.bf16.mxu0 %v3662
    %3694 = vmatpush1.bf16.msra.mxu0 %v3661
    %3695 = vmatprep.subr.bf16.mxu0 %v3664
    %3696 = vmatpush1.bf16.msra.mxu0 %v3663
    %3697 = vmatprep.subr.bf16.mxu0 %v3666
    %3698 = vmatpush1.bf16.msra.mxu0 %v3665
    %3699 = vmatprep.subr.bf16.mxu0 %v3668
    %3700 = vmatpush1.bf16.msra.mxu0 %v3667
    %3701 = vmatprep.subr.bf16.mxu0 %v3670
    %3702 = vmatpush1.bf16.msra.mxu0 %v3669
    %3703 = vmatprep.subr.bf16.mxu0 %v3672
    %3704 = vmatpush1.bf16.msra.mxu0 %v3671
    %3705 = vmatprep.subr.bf16.mxu0 0
    %3706 = vmatpush1.bf16.msra.mxu0 0
    %3707 = vmatprep.subr.bf16.mxu0 0
    %3708 = vmatpush1.bf16.msra.mxu0 0
    %3709 = vmatprep.subr.bf16.mxu0 0
    %3710 = vmatpush1.bf16.msra.mxu0 0
    %3711 = vmatprep.subr.bf16.mxu0 0
    %3712 = vmatpush1.bf16.msra.mxu0 0
    %3713 = vmatprep.subr.bf16.mxu0 0
    %3714 = vmatpush1.bf16.msra.mxu0 0
    %3715 = vmatprep.subr.bf16.mxu0 0
    %3716 = vmatpush1.bf16.msra.mxu0 0
    %3717 = vmatprep.subr.bf16.mxu0 0
    %3718 = vmatpush1.bf16.msra.mxu0 0
    %3719 = vmatprep.subr.bf16.mxu0 0
    %3720 = vmatpush1.bf16.msra.mxu0 0
    %3721 = vmatprep.mubr.bf16.mxu0 0
    %3722 = vmatmul.mubr.bf16.gmra.mrb[0].mxu0 %v3440
    %v3723 = vpop.f32.mrb[0].mxu0
    %v3724 = vadd.f32 %v3603, %v3723
    %v3725 = vpop.f32.mrb[0].mxu0
    %v3726 = vadd.f32 %v3605, %v3725
    %v3727 = vpop.f32.mrb[0].mxu0
    %v3728 = vpop.f32.mrb[0].mxu0
    %3729 = vdwg.mxu0
    %v3730 = vld [vmem:[#allocation4] sm:$0xe]
    %s3731 = scalar_lea.vmem %s7, 256
    %v3732 = vld [vmem:[%s3731] sm:$0xff]
    %v3733 = vld [vmem:[%s3731 + $0x8] sm:$0xff]
    %v3734 = vld [vmem:[%s3731 + $0x10] sm:$0xff]
    %v3735 = vld [vmem:[%s3731 + $0x18] sm:$0xff]
    %v3736 = vld [vmem:[%s3731 + $0x20] sm:$0xff]
    %v3737 = vld [vmem:[%s3731 + $0x28] sm:$0xff]
    %v3738 = vld [vmem:[%s3731 + $0x30] sm:$0xff]
    %v3739 = vld [vmem:[%s3731 + $0x38] sm:$0xff]
    %v3740 = vld [vmem:[%s3731 + $0x40] sm:$0xff]
    %v3741 = vld [vmem:[%s3731 + $0x48] sm:$0xff]
    %v3742 = vld [vmem:[%s3731 + $0x50] sm:$0xff]
    %v3743 = vld [vmem:[%s3731 + $0x58] sm:$0xff]
    %v3744 = vld [vmem:[%s3731 + $0x60] sm:$0xff]
    %v3745 = vld [vmem:[%s3731 + $0x68] sm:$0xff]
    %v3746 = vld [vmem:[%s3731 + $0x70] sm:$0xff]
    %v3747 = vld [vmem:[%s3731 + $0x78] sm:$0xff]
    %v3749 = vunpack.c.l.b16 %v3730
    %v3750 = vpack.c.b16 %v3478, %v3749
    %v3751 = vrot.slane %v3750, 1
    %v3769 = vunpack.c.l.b16 %v3732
    %v3770 = vunpack.c.h.b16 %v3732
    %v3771 = vunpack.c.l.b16 %v3733
    %v3772 = vunpack.c.h.b16 %v3733
    %v3773 = vunpack.c.l.b16 %v3734
    %v3774 = vunpack.c.h.b16 %v3734
    %v3775 = vunpack.c.l.b16 %v3735
    %v3776 = vunpack.c.h.b16 %v3735
    %v3777 = vunpack.c.l.b16 %v3736
    %v3778 = vunpack.c.h.b16 %v3736
    %v3779 = vunpack.c.l.b16 %v3737
    %v3780 = vunpack.c.h.b16 %v3737
    %v3781 = vunpack.c.l.b16 %v3738
    %v3782 = vunpack.c.h.b16 %v3738
    %v3783 = vunpack.c.l.b16 %v3739
    %v3784 = vunpack.c.h.b16 %v3739
    %v3785 = vunpack.c.l.b16 %v3740
    %v3786 = vunpack.c.h.b16 %v3740
    %v3787 = vunpack.c.l.b16 %v3741
    %v3788 = vunpack.c.h.b16 %v3741
    %v3789 = vunpack.c.l.b16 %v3742
    %v3790 = vunpack.c.h.b16 %v3742
    %v3791 = vunpack.c.l.b16 %v3743
    %v3792 = vunpack.c.h.b16 %v3743
    %v3793 = vunpack.c.l.b16 %v3744
    %v3794 = vunpack.c.h.b16 %v3744
    %v3795 = vunpack.c.l.b16 %v3745
    %v3796 = vunpack.c.h.b16 %v3745
    %v3797 = vunpack.c.l.b16 %v3746
    %v3798 = vunpack.c.h.b16 %v3746
    %v3799 = vunpack.c.l.b16 %v3747
    %v3800 = vunpack.c.h.b16 %v3747
    %v3801 = vpack.c.b16 %v3771, %v3769
    %v3802 = vpack.c.b16 %v3772, %v3770
    %v3803 = vpack.c.b16 %v3775, %v3773
    %v3804 = vpack.c.b16 %v3776, %v3774
    %v3805 = vpack.c.b16 %v3779, %v3777
    %v3806 = vpack.c.b16 %v3780, %v3778
    %v3807 = vpack.c.b16 %v3783, %v3781
    %v3808 = vpack.c.b16 %v3784, %v3782
    %v3809 = vpack.c.b16 %v3787, %v3785
    %v3810 = vpack.c.b16 %v3788, %v3786
    %v3811 = vpack.c.b16 %v3791, %v3789
    %v3812 = vpack.c.b16 %v3792, %v3790
    %v3813 = vpack.c.b16 %v3795, %v3793
    %v3814 = vpack.c.b16 %v3796, %v3794
    %v3815 = vpack.c.b16 %v3799, %v3797
    %v3816 = vpack.c.b16 %v3800, %v3798
    %3833 = vmatprep.subr.bf16.mxu0 %v3802
    %3834 = vmatpush1.bf16.msra.mxu0 %v3801
    %3835 = vmatprep.subr.bf16.mxu0 %v3804
    %3836 = vmatpush1.bf16.msra.mxu0 %v3803
    %3837 = vmatprep.subr.bf16.mxu0 %v3806
    %3838 = vmatpush1.bf16.msra.mxu0 %v3805
    %3839 = vmatprep.subr.bf16.mxu0 %v3808
    %3840 = vmatpush1.bf16.msra.mxu0 %v3807
    %3841 = vmatprep.subr.bf16.mxu0 %v3810
    %3842 = vmatpush1.bf16.msra.mxu0 %v3809
    %3843 = vmatprep.subr.bf16.mxu0 %v3812
    %3844 = vmatpush1.bf16.msra.mxu0 %v3811
    %3845 = vmatprep.subr.bf16.mxu0 %v3814
    %3846 = vmatpush1.bf16.msra.mxu0 %v3813
    %3847 = vmatprep.subr.bf16.mxu0 %v3816
    %3848 = vmatpush1.bf16.msra.mxu0 %v3815
    %3849 = vmatprep.subr.bf16.mxu0 0
    %3850 = vmatpush1.bf16.msra.mxu0 0
    %3851 = vmatprep.subr.bf16.mxu0 0
    %3852 = vmatpush1.bf16.msra.mxu0 0
    %3853 = vmatprep.subr.bf16.mxu0 0
    %3854 = vmatpush1.bf16.msra.mxu0 0
    %3855 = vmatprep.subr.bf16.mxu0 0
    %3856 = vmatpush1.bf16.msra.mxu0 0
    %3857 = vmatprep.subr.bf16.mxu0 0
    %3858 = vmatpush1.bf16.msra.mxu0 0
    %3859 = vmatprep.subr.bf16.mxu0 0
    %3860 = vmatpush1.bf16.msra.mxu0 0
    %3861 = vmatprep.subr.bf16.mxu0 0
    %3862 = vmatpush1.bf16.msra.mxu0 0
    %3863 = vmatprep.subr.bf16.mxu0 0
    %3864 = vmatpush1.bf16.msra.mxu0 0
    %3865 = vmatprep.mubr.bf16.mxu0 0
    %3866 = vmatmul.mubr.bf16.gmra.mrb[0].mxu0 %v3751
    %v3867 = vpop.f32.mrb[0].mxu0
    %v3868 = vadd.f32 0.0, %v3867
    %v3869 = vpop.f32.mrb[0].mxu0
    %v3870 = vadd.f32 0.0, %v3869
    %v3871 = vpop.f32.mrb[0].mxu0
    %v3872 = vpop.f32.mrb[0].mxu0
    %3873 = vdwg.mxu0
    %v3874 = vadd.f32 %v3724, %v3868
    %v3875 = vadd.f32 %v3726, %v3870
    %v3876 = vld [vmem:[#allocation4 + $0x4] sm:$0x3]
    %s3877 = scalar_lea.vmem %s7, 384
    %v3878 = vld [vmem:[%s3877] sm:$0xff]
    %v3879 = vld [vmem:[%s3877 + $0x8] sm:$0xff]
    %v3880 = vld [vmem:[%s3877 + $0x10] sm:$0xff]
    %v3881 = vld [vmem:[%s3877 + $0x18] sm:$0xff]
    %v3882 = vld [vmem:[%s3877 + $0x20] sm:$0xff]
    %v3883 = vld [vmem:[%s3877 + $0x28] sm:$0xff]
    %v3884 = vld [vmem:[%s3877 + $0x30] sm:$0xff]
    %v3885 = vld [vmem:[%s3877 + $0x38] sm:$0xff]
    %v3886 = vld [vmem:[%s3877 + $0x40] sm:$0xff]
    %v3887 = vld [vmem:[%s3877 + $0x48] sm:$0xff]
    %v3888 = vld [vmem:[%s3877 + $0x50] sm:$0xff]
    %v3889 = vld [vmem:[%s3877 + $0x58] sm:$0xff]
    %v3890 = vld [vmem:[%s3877 + $0x60] sm:$0xff]
    %v3891 = vld [vmem:[%s3877 + $0x68] sm:$0xff]
    %v3892 = vld [vmem:[%s3877 + $0x70] sm:$0xff]
    %v3893 = vld [vmem:[%s3877 + $0x78] sm:$0xff]
    %v3895 = vunpack.c.l.b16 %v3876
    %v3896 = vpack.c.b16 %v3895, %v3749
    %v3898 = vshrl.u32 %v3896, 16
    %v3900 = vrot.slane %v3898, 1
    %v3901 = vshll.u32 %v3896, 16
    %v3903 = vrot.slane %v3901, 2
    %v3904 = vor.u32 %v3900, %v3903
    %v3922 = vunpack.c.l.b16 %v3878
    %v3923 = vunpack.c.h.b16 %v3878
    %v3924 = vunpack.c.l.b16 %v3879
    %v3925 = vunpack.c.h.b16 %v3879
    %v3926 = vunpack.c.l.b16 %v3880
    %v3927 = vunpack.c.h.b16 %v3880
    %v3928 = vunpack.c.l.b16 %v3881
    %v3929 = vunpack.c.h.b16 %v3881
    %v3930 = vunpack.c.l.b16 %v3882
    %v3931 = vunpack.c.h.b16 %v3882
    %v3932 = vunpack.c.l.b16 %v3883
    %v3933 = vunpack.c.h.b16 %v3883
    %v3934 = vunpack.c.l.b16 %v3884
    %v3935 = vunpack.c.h.b16 %v3884
    %v3936 = vunpack.c.l.b16 %v3885
    %v3937 = vunpack.c.h.b16 %v3885
    %v3938 = vunpack.c.l.b16 %v3886
    %v3939 = vunpack.c.h.b16 %v3886
    %v3940 = vunpack.c.l.b16 %v3887
    %v3941 = vunpack.c.h.b16 %v3887
    %v3942 = vunpack.c.l.b16 %v3888
    %v3943 = vunpack.c.h.b16 %v3888
    %v3944 = vunpack.c.l.b16 %v3889
    %v3945 = vunpack.c.h.b16 %v3889
    %v3946 = vunpack.c.l.b16 %v3890
    %v3947 = vunpack.c.h.b16 %v3890
    %v3948 = vunpack.c.l.b16 %v3891
    %v3949 = vunpack.c.h.b16 %v3891
    %v3950 = vunpack.c.l.b16 %v3892
    %v3951 = vunpack.c.h.b16 %v3892
    %v3952 = vunpack.c.l.b16 %v3893
    %v3953 = vunpack.c.h.b16 %v3893
    %v3954 = vpack.c.b16 %v3924, %v3922
    %v3955 = vpack.c.b16 %v3925, %v3923
    %v3956 = vpack.c.b16 %v3928, %v3926
    %v3957 = vpack.c.b16 %v3929, %v3927
    %v3958 = vpack.c.b16 %v3932, %v3930
    %v3959 = vpack.c.b16 %v3933, %v3931
    %v3960 = vpack.c.b16 %v3936, %v3934
    %v3961 = vpack.c.b16 %v3937, %v3935
    %v3962 = vpack.c.b16 %v3940, %v3938
    %v3963 = vpack.c.b16 %v3941, %v3939
    %v3964 = vpack.c.b16 %v3944, %v3942
    %v3965 = vpack.c.b16 %v3945, %v3943
    %v3966 = vpack.c.b16 %v3948, %v3946
    %v3967 = vpack.c.b16 %v3949, %v3947
    %v3968 = vpack.c.b16 %v3952, %v3950
    %v3969 = vpack.c.b16 %v3953, %v3951
    %3986 = vmatprep.subr.bf16.mxu0 %v3955
    %3987 = vmatpush1.bf16.msra.mxu0 %v3954
    %3988 = vmatprep.subr.bf16.mxu0 %v3957
    %3989 = vmatpush1.bf16.msra.mxu0 %v3956
    %3990 = vmatprep.subr.bf16.mxu0 %v3959
    %3991 = vmatpush1.bf16.msra.mxu0 %v3958
    %3992 = vmatprep.subr.bf16.mxu0 %v3961
    %3993 = vmatpush1.bf16.msra.mxu0 %v3960
    %3994 = vmatprep.subr.bf16.mxu0 %v3963
    %3995 = vmatpush1.bf16.msra.mxu0 %v3962
    %3996 = vmatprep.subr.bf16.mxu0 %v3965
    %3997 = vmatpush1.bf16.msra.mxu0 %v3964
    %3998 = vmatprep.subr.bf16.mxu0 %v3967
    %3999 = vmatpush1.bf16.msra.mxu0 %v3966
    %4000 = vmatprep.subr.bf16.mxu0 %v3969
    %4001 = vmatpush1.bf16.msra.mxu0 %v3968
    %4002 = vmatprep.subr.bf16.mxu0 0
    %4003 = vmatpush1.bf16.msra.mxu0 0
    %4004 = vmatprep.subr.bf16.mxu0 0
    %4005 = vmatpush1.bf16.msra.mxu0 0
    %4006 = vmatprep.subr.bf16.mxu0 0
    %4007 = vmatpush1.bf16.msra.mxu0 0
    %4008 = vmatprep.subr.bf16.mxu0 0
    %4009 = vmatpush1.bf16.msra.mxu0 0
    %4010 = vmatprep.subr.bf16.mxu0 0
    %4011 = vmatpush1.bf16.msra.mxu0 0
    %4012 = vmatprep.subr.bf16.mxu0 0
    %4013 = vmatpush1.bf16.msra.mxu0 0
    %4014 = vmatprep.subr.bf16.mxu0 0
    %4015 = vmatpush1.bf16.msra.mxu0 0
    %4016 = vmatprep.subr.bf16.mxu0 0
    %4017 = vmatpush1.bf16.msra.mxu0 0
    %4018 = vmatprep.mubr.bf16.mxu0 0
    %4019 = vmatmul.mubr.bf16.gmra.mrb[0].mxu0 %v3904
    %v4020 = vpop.f32.mrb[0].mxu0
    %v4021 = vadd.f32 0.0, %v4020
    %v4022 = vpop.f32.mrb[0].mxu0
    %v4023 = vadd.f32 0.0, %v4022
    %v4024 = vpop.f32.mrb[0].mxu0
    %v4025 = vpop.f32.mrb[0].mxu0
    %4026 = vdwg.mxu0
    %v4027 = vadd.f32 %v3874, %v4021
    %v4028 = vadd.f32 %v3875, %v4023
    %v4029 = vld [vmem:[%s8] sm:$0x3]
    %v4031 = vlaneseq
    %v4032 = vshrl.u32 %v4031, 7
    %v4033 = vsub.s32 0, %v4032
    %v4034 = vrot.slane %v4029, %v4033
    %v4035 = vlaneseq
    %v4036 = vshrl.u32 %v4035, 7
    %v4037 = vsub.s32 1, %v4036
    %v4038 = vrot.slane %v4029, %v4037
    %v4041 = vadd.f32 %v4027, %v4034
    %v4042 = vadd.f32 %v4028, %v4038
    %v4043 = vmax.f32 %v4041, 0.0
    %v4044 = vmax.f32 %v4042, 0.0
    %v4045 = vld [vmem:[%s9] sm:$0xff]
    %v4046 = vld [vmem:[%s9 + $0x8] sm:$0xff]
    %v4047 = vld [vmem:[%s9 + $0x10] sm:$0xff]
    %v4048 = vld [vmem:[%s9 + $0x18] sm:$0xff]
    %v4049 = vld [vmem:[%s9 + $0x20] sm:$0xff]
    %v4050 = vld [vmem:[%s9 + $0x28] sm:$0xff]
    %v4051 = vld [vmem:[%s9 + $0x30] sm:$0xff]
    %v4052 = vld [vmem:[%s9 + $0x38] sm:$0xff]
    %v4053 = vld [vmem:[%s9 + $0x40] sm:$0xff]
    %v4054 = vld [vmem:[%s9 + $0x48] sm:$0xff]
    %v4055 = vld [vmem:[%s9 + $0x50] sm:$0xff]
    %v4056 = vld [vmem:[%s9 + $0x58] sm:$0xff]
    %v4057 = vld [vmem:[%s9 + $0x60] sm:$0xff]
    %v4058 = vld [vmem:[%s9 + $0x68] sm:$0xff]
    %v4059 = vld [vmem:[%s9 + $0x70] sm:$0xff]
    %v4060 = vld [vmem:[%s9 + $0x78] sm:$0xff]
    %v4061 = vld [vmem:[%s9 + $0x80] sm:$0xff]
    %v4062 = vld [vmem:[%s9 + $0x88] sm:$0xff]
    %v4063 = vld [vmem:[%s9 + $0x90] sm:$0xff]
    %v4064 = vld [vmem:[%s9 + $0x98] sm:$0xff]
    %v4065 = vld [vmem:[%s9 + $0xa0] sm:$0xff]
    %v4066 = vld [vmem:[%s9 + $0xa8] sm:$0xff]
    %v4067 = vld [vmem:[%s9 + $0xb0] sm:$0xff]
    %v4068 = vld [vmem:[%s9 + $0xb8] sm:$0xff]
    %v4069 = vld [vmem:[%s9 + $0xc0] sm:$0xff]
    %v4070 = vld [vmem:[%s9 + $0xc8] sm:$0xff]
    %v4071 = vld [vmem:[%s9 + $0xd0] sm:$0xff]
    %v4072 = vld [vmem:[%s9 + $0xd8] sm:$0xff]
    %v4073 = vld [vmem:[%s9 + $0xe0] sm:$0xff]
    %v4074 = vld [vmem:[%s9 + $0xe8] sm:$0xff]
    %v4075 = vld [vmem:[%s9 + $0xf0] sm:$0xff]
    %v4076 = vld [vmem:[%s9 + $0xf8] sm:$0xff]
    %v4077 = vld [vmem:[%s10] sm:$0x1]
    %v4079 = vlaneseq
    %v4080 = vshrl.u32 %v4079, 7
    %v4081 = vsub.s32 0, %v4080
    %v4082 = vrot.slane %v4077, %v4081
    %4084 = vmatprep.subr.mxu0 0.0
    %4085 = vmatpush1.msra.mxu0 %v4045
    %4086 = vmatprep.subr.mxu0 0.0
    %4087 = vmatpush1.msra.mxu0 %v4046
    %4088 = vmatprep.subr.mxu0 0.0
    %4089 = vmatpush1.msra.mxu0 %v4047
    %4090 = vmatprep.subr.mxu0 0.0
    %4091 = vmatpush1.msra.mxu0 %v4048
    %4092 = vmatprep.subr.mxu0 0.0
    %4093 = vmatpush1.msra.mxu0 %v4049
    %4094 = vmatprep.subr.mxu0 0.0
    %4095 = vmatpush1.msra.mxu0 %v4050
    %4096 = vmatprep.subr.mxu0 0.0
    %4097 = vmatpush1.msra.mxu0 %v4051
    %4098 = vmatprep.subr.mxu0 0.0
    %4099 = vmatpush1.msra.mxu0 %v4052
    %4100 = vmatprep.subr.mxu0 0.0
    %4101 = vmatpush1.msra.mxu0 %v4053
    %4102 = vmatprep.subr.mxu0 0.0
    %4103 = vmatpush1.msra.mxu0 %v4054
    %4104 = vmatprep.subr.mxu0 0.0
    %4105 = vmatpush1.msra.mxu0 %v4055
    %4106 = vmatprep.subr.mxu0 0.0
    %4107 = vmatpush1.msra.mxu0 %v4056
    %4108 = vmatprep.subr.mxu0 0.0
    %4109 = vmatpush1.msra.mxu0 %v4057
    %4110 = vmatprep.subr.mxu0 0.0
    %4111 = vmatpush1.msra.mxu0 %v4058
    %4112 = vmatprep.subr.mxu0 0.0
    %4113 = vmatpush1.msra.mxu0 %v4059
    %4114 = vmatprep.subr.mxu0 0.0
    %4115 = vmatpush1.msra.mxu0 %v4060
    %4116 = vmatprep.subr.mxu0 0.0
    %4117 = vmatpush1.msra.mxu0 %v4061
    %4118 = vmatprep.subr.mxu0 0.0
    %4119 = vmatpush1.msra.mxu0 %v4062
    %4120 = vmatprep.subr.mxu0 0.0
    %4121 = vmatpush1.msra.mxu0 %v4063
    %4122 = vmatprep.subr.mxu0 0.0
    %4123 = vmatpush1.msra.mxu0 %v4064
    %4124 = vmatprep.subr.mxu0 0.0
    %4125 = vmatpush1.msra.mxu0 %v4065
    %4126 = vmatprep.subr.mxu0 0.0
    %4127 = vmatpush1.msra.mxu0 %v4066
    %4128 = vmatprep.subr.mxu0 0.0
    %4129 = vmatpush1.msra.mxu0 %v4067
    %4130 = vmatprep.subr.mxu0 0.0
    %4131 = vmatpush1.msra.mxu0 %v4068
    %4132 = vmatprep.subr.mxu0 0.0
    %4133 = vmatpush1.msra.mxu0 %v4069
    %4134 = vmatprep.subr.mxu0 0.0
    %4135 = vmatpush1.msra.mxu0 %v4070
    %4136 = vmatprep.subr.mxu0 0.0
    %4137 = vmatpush1.msra.mxu0 %v4071
    %4138 = vmatprep.subr.mxu0 0.0
    %4139 = vmatpush1.msra.mxu0 %v4072
    %4140 = vmatprep.subr.mxu0 0.0
    %4141 = vmatpush1.msra.mxu0 %v4073
    %4142 = vmatprep.subr.mxu0 0.0
    %4143 = vmatpush1.msra.mxu0 %v4074
    %4144 = vmatprep.subr.mxu0 0.0
    %4145 = vmatpush1.msra.mxu0 %v4075
    %4146 = vmatprep.subr.mxu0 0.0
    %4147 = vmatpush1.msra.mxu0 %v4076
    %4148 = vmatprep.mubr.f32.mxu0 %v4044
    %4149 = vmatmul.mubr.f32.gmra.mrb[0].mxu0 %v4043
    %v4150 = vpop.f32.mrb[0].mxu0
    %v4151 = vadd.f32 %v4082, %v4150
    %v4152 = vpop.f32.mrb[0].mxu0
    %4153 = vdwg.mxu0
    %vm4154 = vcmask 24576
    %4155 = vst.msk [vmem:[#allocation5] sm:$0x1] %vm4154, %v4151
    %vm4156 = vcmask 31751
    %4157 = vst.msk [vmem:[#allocation5 - $0x6] sm:$0x80] %vm4156, %v4151
    // Predicated region
    $region46: #{tpu_custom_call.1} parent=1 // pred_check
      _
    $region47: #{tpu_custom_call.1} parent=1 // pred_check_branch
      %4159 = sbr.rel (0) target = $region49
    $region48: #{tpu_custom_call.1} parent=1 // pred_region
      %s4161 = ssub.s32 32, 32
      %4162 = vsyncadd [#allocation6], %s4161
      %s4164 = sshll.u32 [#allocation5], 4
      %s4165 = int_to_ptr.vmem [resolvable:$true] %s4164
      %4167 = dma.vmem_to_hbm [thread:$0]  %s4165, 32, %s11, [#allocation6]
    $region49: #{tpu_custom_call.1} parent=1 // pred_fallthru
      _
    // Predicated region
    $region50: #{tpu_custom_call.1} parent=1 // pred_check
      _
    $region51: #{tpu_custom_call.1} parent=1 // pred_check_branch
      %4169 = sbr.rel (0) target = $region53
    $region52: #{tpu_custom_call.1} parent=1 // pred_region
      %4170 = dma.done [#allocation6], 32
    $region53: #{tpu_custom_call.1} parent=1 // pred_fallthru
      _
    %4171 = vsyncpa [#allocation6], 1

</llo_original>
